<compile_context>
chip_gen: v7x
topology: tpu7x:2x2x1
jax: 0.10.0
libtpu: 0.0.40
codegen_flags: <defaults>
</compile_context>

<pallas_src>
import functools
import math

import jax
import jax.numpy as jnp
from jax import lax
from jax.experimental import pallas as pl
from jax.experimental.pallas import tpu as pltpu


# ---------------------------------------------------------------------------
# Fused per-batch MHA kernel: projections + attention + output projection.
# Weight refs arrive pre-transposed to (K, N) and in bf16.
# ---------------------------------------------------------------------------
def _fused_mha_kernel(*refs, num_heads, dim_per_head, has_mask):
    if has_mask:
        (xq_ref, xk_ref, xv_ref,
         wq_ref, wk_ref, wv_ref, wo_ref,
         bq_ref, bk_ref, bv_ref, bo_ref,
         mask_ref, o_ref) = refs
    else:
        (xq_ref, xk_ref, xv_ref,
         wq_ref, wk_ref, wv_ref, wo_ref,
         bq_ref, bk_ref, bv_ref, bo_ref,
         o_ref) = refs
        mask_ref = None

    f32 = jnp.float32
    bf16 = jnp.bfloat16
    scale = 1.0 / math.sqrt(dim_per_head)

    def project(x_ref, wt_ref, b_ref):
        # y = x @ W.T + b, with W.T pre-materialized as wt (K, N), bf16 inputs,
        # f32 MXU accumulation, bias added in f32.
        x = x_ref[0].astype(bf16)                              # (S, E)
        y = lax.dot_general(
            x, wt_ref[...],
            dimension_numbers=(((1,), (0,)), ((), ())),        # native (K, N)
            preferred_element_type=f32)
        return y + b_ref[...]                                   # (1, E) bcast

    # --- Q / K / V projections (scale folded once into the full q slab) ----
    q = project(xq_ref, wq_ref, bq_ref) * scale                 # (Sq, E) f32
    k = project(xk_ref, wk_ref, bk_ref)                         # (Sk, E) f32
    v = project(xv_ref, wv_ref, bv_ref)                         # (Sk, E) f32

    q16 = q.astype(bf16)
    k16 = k.astype(bf16)
    v16 = v.astype(bf16)

    if has_mask:
        # masked_fill(mask == 0, -1e9), computed ONCE (not per head).
        m = mask_ref[0].astype(f32)                              # (Sq, Sk)
        bias = jnp.where(m == 0.0, -1000000000.0, 0.0)

    # --- per-head attention (static unroll; H is small) --------------------
    head_outs = []
    for h in range(num_heads):
        lo = h * dim_per_head
        hi = lo + dim_per_head
        s = lax.dot_general(                                     # (Sq, Sk)
            q16[:, lo:hi], k16[:, lo:hi],
            dimension_numbers=(((1,), (1,)), ((), ())),          # q @ k.T
            preferred_element_type=f32)
        if has_mask:
            s = s + bias
        s_max = jnp.max(s, axis=-1, keepdims=True)
        p = jnp.exp(s - s_max)
        denom = jnp.sum(p, axis=-1, keepdims=True)
        p = p * pl.reciprocal(denom, approx=True)                # EUP recip
        head_outs.append(
            jnp.dot(p.astype(bf16), v16[:, lo:hi],               # (Sq, D)
                    preferred_element_type=f32))

    # Merge heads -> (Sq, E); this is exactly the transpose(1,2).view layout.
    attn = jnp.concatenate(head_outs, axis=-1)

    # --- output projection --------------------------------------------------
    out = lax.dot_general(
        attn.astype(bf16), wo_ref[...],
        dimension_numbers=(((1,), (0,)), ((), ())),
        preferred_element_type=f32)
    o_ref[0] = (out + bo_ref[...]).astype(o_ref.dtype)


def multi_head_attention_forward(params, query, key, value, *, num_heads,
                                 mask=None):
    """query: (B, Sq, E), key/value: (B, Sk, E), optional mask: (B, Sq, Sk)."""
    B, Sq, E = query.shape
    Sk = key.shape[1]
    assert E % num_heads == 0
    D = E // num_heads
    has_mask = mask is not None

    bf16 = jnp.bfloat16
    f32 = jnp.float32
    # One-time (jit-fused) weight transpose+cast: MXU-native (K, N), bf16.
    wq_t = params["wq"].T.astype(bf16)
    wk_t = params["wk"].T.astype(bf16)
    wv_t = params["wv"].T.astype(bf16)
    wo_t = params["wo"].T.astype(bf16)
    bq = params["bq"].reshape(1, E).astype(f32)
    bk = params["bk"].reshape(1, E).astype(f32)
    bv = params["bv"].reshape(1, E).astype(f32)
    bo = params["bo"].reshape(1, E).astype(f32)

    kernel = functools.partial(_fused_mha_kernel, num_heads=num_heads,
                               dim_per_head=D, has_mask=has_mask)

    in_specs = [
        pl.BlockSpec((1, Sq, E), lambda b: (b, 0, 0)),   # query
        pl.BlockSpec((1, Sk, E), lambda b: (b, 0, 0)),   # key
        pl.BlockSpec((1, Sk, E), lambda b: (b, 0, 0)),   # value
        pl.BlockSpec((E, E), lambda b: (0, 0)),          # wq.T (VMEM-resident)
        pl.BlockSpec((E, E), lambda b: (0, 0)),          # wk.T
        pl.BlockSpec((E, E), lambda b: (0, 0)),          # wv.T
        pl.BlockSpec((E, E), lambda b: (0, 0)),          # wo.T
        pl.BlockSpec((1, E), lambda b: (0, 0)),          # bq
        pl.BlockSpec((1, E), lambda b: (0, 0)),          # bk
        pl.BlockSpec((1, E), lambda b: (0, 0)),          # bv
        pl.BlockSpec((1, E), lambda b: (0, 0)),          # bo
    ]
    args = [query, key, value, wq_t, wk_t, wv_t, wo_t, bq, bk, bv, bo]
    if has_mask:
        in_specs.append(pl.BlockSpec((1, Sq, Sk), lambda b: (b, 0, 0)))
        args.append((mask != 0).astype(jnp.int8))        # int8: 4x less DMA

    cost = pl.CostEstimate(
        flops=B * (4 * E * E * (Sq + Sk) + 4 * Sq * Sk * E),
        transcendentals=B * num_heads * Sq * Sk,
        bytes_accessed=(4 * B * (Sq * E + 2 * Sk * E)      # f32 activations in
                        + 4 * B * Sq * E                    # f32 output
                        + 2 * 4 * E * E + 4 * 4 * E         # bf16 W, f32 b
                        + (B * Sq * Sk if has_mask else 0)),
    )

    return pl.pallas_call(
        kernel,
        out_shape=jax.ShapeDtypeStruct((B, Sq, E), jnp.float32),
        grid=(B,),
        in_specs=in_specs,
        out_specs=pl.BlockSpec((1, Sq, E), lambda b: (b, 0, 0)),
        compiler_params=pltpu.CompilerParams(
            dimension_semantics=("parallel",),
        ),
        cost_estimate=cost,
    )(*args)


# ---------------------------------------------------------------------------
# Pure-JAX reference (mirrors the PyTorch module).  `matmul_dtype=bf16`
# reproduces the kernel's bf16-input / f32-accumulate matmul numerics.
# ---------------------------------------------------------------------------
def mha_reference(params, query, key, value, num_heads, mask=None,
                  matmul_dtype=jnp.float32):
    md = matmul_dtype
    f32 = jnp.float32

    def lin(x, w, b):
        y = jnp.einsum("bsk,nk->bsn", x.astype(md), w.astype(md),
                       preferred_element_type=f32)
        return y + b.astype(f32)

    B, Sq, E = query.shape
    D = E // num_heads
    scale = 1.0 / math.sqrt(D)

    q = lin(query, params["wq"], params["bq"]) * scale
    k = lin(key, params["wk"], params["bk"])
    v = lin(value, params["wv"], params["bv"])

    def split(x):
        return x.reshape(B, -1, num_heads, D).transpose(0, 2, 1, 3)

    qh, kh, vh = split(q), split(k), split(v)
    s = jnp.einsum("bhqd,bhkd->bhqk", qh.astype(md), kh.astype(md),
                   preferred_element_type=f32)
    if mask is not None:
        s = jnp.where(mask[:, None] == 0, -1000000000.0, s)
    p = jax.nn.softmax(s, axis=-1)
    o = jnp.einsum("bhqk,bhkd->bhqd", p.astype(md), vh.astype(md),
                   preferred_element_type=f32)
    o = o.transpose(0, 2, 1, 3).reshape(B, Sq, E)
    return lin(o, params["wo"], params["bo"])


def init_params(key, embedding_dim):
    ks = jax.random.split(key, 8)
    s = 1.0 / math.sqrt(embedding_dim)

    def w(k):
        return jax.random.normal(k, (embedding_dim, embedding_dim), jnp.float32) * s

    def b(k):
        return jax.random.normal(k, (embedding_dim,), jnp.float32) * s

    return {
        "wq": w(ks[0]), "bq": b(ks[1]),
        "wk": w(ks[2]), "bk": b(ks[3]),
        "wv": w(ks[4]), "bv": b(ks[5]),
        "wo": w(ks[6]), "bo": b(ks[7]),
    }


if __name__ == "__main__":
    root = jax.random.PRNGKey(0)
    kq, kk, kv, kp = jax.random.split(root, 4)

    # Small but TPU-aligned: batch=2, seq=128, embed=128, heads=4 (d_head=32).
    B, S, E, H = 2, 128, 128, 4

    query = jax.random.normal(kq, (B, S, E), jnp.float32)
    key_in = jax.random.normal(kk, (B, S, E), jnp.float32)
    value = jax.random.normal(kv, (B, S, E), jnp.float32)
    params = init_params(kp, E)

    fwd = jax.jit(functools.partial(multi_head_attention_forward, num_heads=H))

    # ---- unmasked path ----
    out = jax.block_until_ready(fwd(params, query, key_in, value))
    assert out.shape == (B, S, E), out.shape
    assert out.dtype == jnp.float32

    ref_bf16 = mha_reference(params, query, key_in, value, H,
                             matmul_dtype=jnp.bfloat16)
    assert jnp.allclose(out, ref_bf16, atol=2e-2, rtol=2e-2), \
        float(jnp.max(jnp.abs(out - ref_bf16)))

    ref_f32 = mha_reference(params, query, key_in, value, H)
    assert jnp.allclose(out, ref_f32, atol=1e-1, rtol=1e-1), \
        float(jnp.max(jnp.abs(out - ref_f32)))

    # ---- masked (causal) path: masked_fill(mask == 0, -1e9) ----
    mask = jnp.broadcast_to(jnp.tril(jnp.ones((S, S), jnp.float32)), (B, S, S))
    out_m = jax.block_until_ready(fwd(params, query, key_in, value, mask=mask))
    ref_m = mha_reference(params, query, key_in, value, H, mask=mask,
                          matmul_dtype=jnp.bfloat16)
    assert jnp.allclose(out_m, ref_m, atol=2e-2, rtol=2e-2), \
        float(jnp.max(jnp.abs(out_m - ref_m)))

    print("KERNEL_OK")
</pallas_src>

<mosaic_0001>
module attributes {stable_mosaic.version = 11 : i64} {
  func.func @_fused_mha_kernel(%arg0: i32, %arg1: memref<1x128x128xf32, #tpu.memory_space<vmem>>, %arg2: memref<1x128x128xf32, #tpu.memory_space<vmem>>, %arg3: memref<1x128x128xf32, #tpu.memory_space<vmem>>, %arg4: memref<128x128xbf16, #tpu.memory_space<vmem>>, %arg5: memref<128x128xbf16, #tpu.memory_space<vmem>>, %arg6: memref<128x128xbf16, #tpu.memory_space<vmem>>, %arg7: memref<128x128xbf16, #tpu.memory_space<vmem>>, %arg8: memref<1x128xf32, #tpu.memory_space<vmem>>, %arg9: memref<1x128xf32, #tpu.memory_space<vmem>>, %arg10: memref<1x128xf32, #tpu.memory_space<vmem>>, %arg11: memref<1x128xf32, #tpu.memory_space<vmem>>, %arg12: memref<1x128x128xf32, #tpu.memory_space<vmem>>) attributes {dimension_semantics = [#tpu.dimension_semantics<parallel>], iteration_bounds = array<i64: 2>, scalar_prefetch = 0 : i64, scratch_operands = 0 : i64, tpu.core_type = #tpu.core_type<tc>, window_params = [{transform_indices = @transform_0, window_bounds = array<i64: 1, 128, 128>}, {transform_indices = @transform_1, window_bounds = array<i64: 1, 128, 128>}, {transform_indices = @transform_2, window_bounds = array<i64: 1, 128, 128>}, {pipeline_mode = #tpu.pipeline_mode<synchronous>, transform_indices = @transform_3, window_bounds = array<i64: 128, 128>}, {pipeline_mode = #tpu.pipeline_mode<synchronous>, transform_indices = @transform_4, window_bounds = array<i64: 128, 128>}, {pipeline_mode = #tpu.pipeline_mode<synchronous>, transform_indices = @transform_5, window_bounds = array<i64: 128, 128>}, {pipeline_mode = #tpu.pipeline_mode<synchronous>, transform_indices = @transform_6, window_bounds = array<i64: 128, 128>}, {pipeline_mode = #tpu.pipeline_mode<synchronous>, transform_indices = @transform_7, window_bounds = array<i64: 1, 128>}, {pipeline_mode = #tpu.pipeline_mode<synchronous>, transform_indices = @transform_8, window_bounds = array<i64: 1, 128>}, {pipeline_mode = #tpu.pipeline_mode<synchronous>, transform_indices = @transform_9, window_bounds = array<i64: 1, 128>}, {pipeline_mode = #tpu.pipeline_mode<synchronous>, transform_indices = @transform_10, window_bounds = array<i64: 1, 128>}, {transform_indices = @transform_11, window_bounds = array<i64: 1, 128, 128>}]} {
    %c0 = arith.constant 0 : index
    %c0_0 = arith.constant 0 : index
    %c0_1 = arith.constant 0 : index
    %0 = vector.load %arg1[%c0, %c0_0, %c0_1] : memref<1x128x128xf32, #tpu.memory_space<vmem>>, vector<1x128x128xf32>
    %1 = vector.shape_cast %0 : vector<1x128x128xf32> to vector<128x128xf32>
    %2 = arith.truncf %1 : vector<128x128xf32> to vector<128x128xbf16>
    %c0_2 = arith.constant 0 : index
    %c0_3 = arith.constant 0 : index
    %3 = vector.load %arg4[%c0_2, %c0_3] : memref<128x128xbf16, #tpu.memory_space<vmem>>, vector<128x128xbf16>
    %cst = arith.constant dense<0.000000e+00> : vector<128x128xf32>
    %4 = tpu.matmul %2, %3, %cst {dimension_numbers = #tpu.dot_dimension_numbers<[1], [0], [0], [1], [0, 0, 1, 1], [], []>} : vector<128x128xbf16>, vector<128x128xbf16>, vector<128x128xf32> -> vector<128x128xf32>
    %c0_4 = arith.constant 0 : index
    %c0_5 = arith.constant 0 : index
    %5 = vector.load %arg8[%c0_4, %c0_5] : memref<1x128xf32, #tpu.memory_space<vmem>>, vector<1x128xf32>
    %6 = vector.broadcast %5 : vector<1x128xf32> to vector<128x128xf32>
    %7 = arith.addf %4, %6 : vector<128x128xf32>
    %cst_6 = arith.constant 0.176776692 : f32
    %8 = vector.broadcast %cst_6 : f32 to vector<128x128xf32>
    %9 = arith.mulf %7, %8 : vector<128x128xf32>
    %c0_7 = arith.constant 0 : index
    %c0_8 = arith.constant 0 : index
    %c0_9 = arith.constant 0 : index
    %10 = vector.load %arg2[%c0_7, %c0_8, %c0_9] : memref<1x128x128xf32, #tpu.memory_space<vmem>>, vector<1x128x128xf32>
    %11 = vector.shape_cast %10 : vector<1x128x128xf32> to vector<128x128xf32>
    %12 = arith.truncf %11 : vector<128x128xf32> to vector<128x128xbf16>
    %c0_10 = arith.constant 0 : index
    %c0_11 = arith.constant 0 : index
    %13 = vector.load %arg5[%c0_10, %c0_11] : memref<128x128xbf16, #tpu.memory_space<vmem>>, vector<128x128xbf16>
    %cst_12 = arith.constant dense<0.000000e+00> : vector<128x128xf32>
    %14 = tpu.matmul %12, %13, %cst_12 {dimension_numbers = #tpu.dot_dimension_numbers<[1], [0], [0], [1], [0, 0, 1, 1], [], []>} : vector<128x128xbf16>, vector<128x128xbf16>, vector<128x128xf32> -> vector<128x128xf32>
    %c0_13 = arith.constant 0 : index
    %c0_14 = arith.constant 0 : index
    %15 = vector.load %arg9[%c0_13, %c0_14] : memref<1x128xf32, #tpu.memory_space<vmem>>, vector<1x128xf32>
    %16 = vector.broadcast %15 : vector<1x128xf32> to vector<128x128xf32>
    %17 = arith.addf %14, %16 : vector<128x128xf32>
    %c0_15 = arith.constant 0 : index
    %c0_16 = arith.constant 0 : index
    %c0_17 = arith.constant 0 : index
    %18 = vector.load %arg3[%c0_15, %c0_16, %c0_17] : memref<1x128x128xf32, #tpu.memory_space<vmem>>, vector<1x128x128xf32>
    %19 = vector.shape_cast %18 : vector<1x128x128xf32> to vector<128x128xf32>
    %20 = arith.truncf %19 : vector<128x128xf32> to vector<128x128xbf16>
    %c0_18 = arith.constant 0 : index
    %c0_19 = arith.constant 0 : index
    %21 = vector.load %arg6[%c0_18, %c0_19] : memref<128x128xbf16, #tpu.memory_space<vmem>>, vector<128x128xbf16>
    %cst_20 = arith.constant dense<0.000000e+00> : vector<128x128xf32>
    %22 = tpu.matmul %20, %21, %cst_20 {dimension_numbers = #tpu.dot_dimension_numbers<[1], [0], [0], [1], [0, 0, 1, 1], [], []>} : vector<128x128xbf16>, vector<128x128xbf16>, vector<128x128xf32> -> vector<128x128xf32>
    %c0_21 = arith.constant 0 : index
    %c0_22 = arith.constant 0 : index
    %23 = vector.load %arg10[%c0_21, %c0_22] : memref<1x128xf32, #tpu.memory_space<vmem>>, vector<1x128xf32>
    %24 = vector.broadcast %23 : vector<1x128xf32> to vector<128x128xf32>
    %25 = arith.addf %22, %24 : vector<128x128xf32>
    %26 = arith.truncf %9 : vector<128x128xf32> to vector<128x128xbf16>
    %27 = arith.truncf %17 : vector<128x128xf32> to vector<128x128xbf16>
    %28 = arith.truncf %25 : vector<128x128xf32> to vector<128x128xbf16>
    %29 = vector.extract_strided_slice %26 {offsets = [0, 0], sizes = [128, 32], strides = [1, 1]} : vector<128x128xbf16> to vector<128x32xbf16>
    %30 = vector.extract_strided_slice %27 {offsets = [0, 0], sizes = [128, 32], strides = [1, 1]} : vector<128x128xbf16> to vector<128x32xbf16>
    %cst_23 = arith.constant dense<0.000000e+00> : vector<128x128xf32>
    %31 = tpu.matmul %29, %30, %cst_23 {dimension_numbers = #tpu.dot_dimension_numbers<[1], [1], [0], [0], [0, 0, 1, 0], [], []>} : vector<128x32xbf16>, vector<128x32xbf16>, vector<128x128xf32> -> vector<128x128xf32>
    %cst_24 = arith.constant dense<0xFF800000> : vector<128xf32>
    %32 = vector.multi_reduction <maximumf>, %31, %cst_24 [1] : vector<128x128xf32> to vector<128xf32>
    %33 = vector.shape_cast %32 : vector<128xf32> to vector<128x1xf32>
    %34 = vector.broadcast %33 : vector<128x1xf32> to vector<128x128xf32>
    %35 = arith.subf %31, %34 : vector<128x128xf32>
    %36 = math.exp %35 : vector<128x128xf32>
    %cst_25 = arith.constant dense<0.000000e+00> : vector<128xf32>
    %37 = vector.multi_reduction <add>, %36, %cst_25 [1] : vector<128x128xf32> to vector<128xf32>
    %38 = vector.shape_cast %37 : vector<128xf32> to vector<128x1xf32>
    %39 = tpu.reciprocal %38 {approx = true} : vector<128x1xf32> -> vector<128x1xf32>
    %40 = vector.broadcast %39 : vector<128x1xf32> to vector<128x128xf32>
    %41 = arith.mulf %36, %40 : vector<128x128xf32>
    %42 = arith.truncf %41 : vector<128x128xf32> to vector<128x128xbf16>
    %43 = vector.extract_strided_slice %28 {offsets = [0, 0], sizes = [128, 32], strides = [1, 1]} : vector<128x128xbf16> to vector<128x32xbf16>
    %cst_26 = arith.constant dense<0.000000e+00> : vector<128x32xf32>
    %44 = tpu.matmul %42, %43, %cst_26 {dimension_numbers = #tpu.dot_dimension_numbers<[1], [0], [0], [1], [0, 0, 1, 1], [], []>} : vector<128x128xbf16>, vector<128x32xbf16>, vector<128x32xf32> -> vector<128x32xf32>
    %45 = vector.extract_strided_slice %26 {offsets = [0, 32], sizes = [128, 32], strides = [1, 1]} : vector<128x128xbf16> to vector<128x32xbf16>
    %46 = vector.extract_strided_slice %27 {offsets = [0, 32], sizes = [128, 32], strides = [1, 1]} : vector<128x128xbf16> to vector<128x32xbf16>
    %cst_27 = arith.constant dense<0.000000e+00> : vector<128x128xf32>
    %47 = tpu.matmul %45, %46, %cst_27 {dimension_numbers = #tpu.dot_dimension_numbers<[1], [1], [0], [0], [0, 0, 1, 0], [], []>} : vector<128x32xbf16>, vector<128x32xbf16>, vector<128x128xf32> -> vector<128x128xf32>
    %cst_28 = arith.constant dense<0xFF800000> : vector<128xf32>
    %48 = vector.multi_reduction <maximumf>, %47, %cst_28 [1] : vector<128x128xf32> to vector<128xf32>
    %49 = vector.shape_cast %48 : vector<128xf32> to vector<128x1xf32>
    %50 = vector.broadcast %49 : vector<128x1xf32> to vector<128x128xf32>
    %51 = arith.subf %47, %50 : vector<128x128xf32>
    %52 = math.exp %51 : vector<128x128xf32>
    %cst_29 = arith.constant dense<0.000000e+00> : vector<128xf32>
    %53 = vector.multi_reduction <add>, %52, %cst_29 [1] : vector<128x128xf32> to vector<128xf32>
    %54 = vector.shape_cast %53 : vector<128xf32> to vector<128x1xf32>
    %55 = tpu.reciprocal %54 {approx = true} : vector<128x1xf32> -> vector<128x1xf32>
    %56 = vector.broadcast %55 : vector<128x1xf32> to vector<128x128xf32>
    %57 = arith.mulf %52, %56 : vector<128x128xf32>
    %58 = arith.truncf %57 : vector<128x128xf32> to vector<128x128xbf16>
    %59 = vector.extract_strided_slice %28 {offsets = [0, 32], sizes = [128, 32], strides = [1, 1]} : vector<128x128xbf16> to vector<128x32xbf16>
    %cst_30 = arith.constant dense<0.000000e+00> : vector<128x32xf32>
    %60 = tpu.matmul %58, %59, %cst_30 {dimension_numbers = #tpu.dot_dimension_numbers<[1], [0], [0], [1], [0, 0, 1, 1], [], []>} : vector<128x128xbf16>, vector<128x32xbf16>, vector<128x32xf32> -> vector<128x32xf32>
    %61 = vector.extract_strided_slice %26 {offsets = [0, 64], sizes = [128, 32], strides = [1, 1]} : vector<128x128xbf16> to vector<128x32xbf16>
    %62 = vector.extract_strided_slice %27 {offsets = [0, 64], sizes = [128, 32], strides = [1, 1]} : vector<128x128xbf16> to vector<128x32xbf16>
    %cst_31 = arith.constant dense<0.000000e+00> : vector<128x128xf32>
    %63 = tpu.matmul %61, %62, %cst_31 {dimension_numbers = #tpu.dot_dimension_numbers<[1], [1], [0], [0], [0, 0, 1, 0], [], []>} : vector<128x32xbf16>, vector<128x32xbf16>, vector<128x128xf32> -> vector<128x128xf32>
    %cst_32 = arith.constant dense<0xFF800000> : vector<128xf32>
    %64 = vector.multi_reduction <maximumf>, %63, %cst_32 [1] : vector<128x128xf32> to vector<128xf32>
    %65 = vector.shape_cast %64 : vector<128xf32> to vector<128x1xf32>
    %66 = vector.broadcast %65 : vector<128x1xf32> to vector<128x128xf32>
    %67 = arith.subf %63, %66 : vector<128x128xf32>
    %68 = math.exp %67 : vector<128x128xf32>
    %cst_33 = arith.constant dense<0.000000e+00> : vector<128xf32>
    %69 = vector.multi_reduction <add>, %68, %cst_33 [1] : vector<128x128xf32> to vector<128xf32>
    %70 = vector.shape_cast %69 : vector<128xf32> to vector<128x1xf32>
    %71 = tpu.reciprocal %70 {approx = true} : vector<128x1xf32> -> vector<128x1xf32>
    %72 = vector.broadcast %71 : vector<128x1xf32> to vector<128x128xf32>
    %73 = arith.mulf %68, %72 : vector<128x128xf32>
    %74 = arith.truncf %73 : vector<128x128xf32> to vector<128x128xbf16>
    %75 = vector.extract_strided_slice %28 {offsets = [0, 64], sizes = [128, 32], strides = [1, 1]} : vector<128x128xbf16> to vector<128x32xbf16>
    %cst_34 = arith.constant dense<0.000000e+00> : vector<128x32xf32>
    %76 = tpu.matmul %74, %75, %cst_34 {dimension_numbers = #tpu.dot_dimension_numbers<[1], [0], [0], [1], [0, 0, 1, 1], [], []>} : vector<128x128xbf16>, vector<128x32xbf16>, vector<128x32xf32> -> vector<128x32xf32>
    %77 = vector.extract_strided_slice %26 {offsets = [0, 96], sizes = [128, 32], strides = [1, 1]} : vector<128x128xbf16> to vector<128x32xbf16>
    %78 = vector.extract_strided_slice %27 {offsets = [0, 96], sizes = [128, 32], strides = [1, 1]} : vector<128x128xbf16> to vector<128x32xbf16>
    %cst_35 = arith.constant dense<0.000000e+00> : vector<128x128xf32>
    %79 = tpu.matmul %77, %78, %cst_35 {dimension_numbers = #tpu.dot_dimension_numbers<[1], [1], [0], [0], [0, 0, 1, 0], [], []>} : vector<128x32xbf16>, vector<128x32xbf16>, vector<128x128xf32> -> vector<128x128xf32>
    %cst_36 = arith.constant dense<0xFF800000> : vector<128xf32>
    %80 = vector.multi_reduction <maximumf>, %79, %cst_36 [1] : vector<128x128xf32> to vector<128xf32>
    %81 = vector.shape_cast %80 : vector<128xf32> to vector<128x1xf32>
    %82 = vector.broadcast %81 : vector<128x1xf32> to vector<128x128xf32>
    %83 = arith.subf %79, %82 : vector<128x128xf32>
    %84 = math.exp %83 : vector<128x128xf32>
    %cst_37 = arith.constant dense<0.000000e+00> : vector<128xf32>
    %85 = vector.multi_reduction <add>, %84, %cst_37 [1] : vector<128x128xf32> to vector<128xf32>
    %86 = vector.shape_cast %85 : vector<128xf32> to vector<128x1xf32>
    %87 = tpu.reciprocal %86 {approx = true} : vector<128x1xf32> -> vector<128x1xf32>
    %88 = vector.broadcast %87 : vector<128x1xf32> to vector<128x128xf32>
    %89 = arith.mulf %84, %88 : vector<128x128xf32>
    %90 = arith.truncf %89 : vector<128x128xf32> to vector<128x128xbf16>
    %91 = vector.extract_strided_slice %28 {offsets = [0, 96], sizes = [128, 32], strides = [1, 1]} : vector<128x128xbf16> to vector<128x32xbf16>
    %cst_38 = arith.constant dense<0.000000e+00> : vector<128x32xf32>
    %92 = tpu.matmul %90, %91, %cst_38 {dimension_numbers = #tpu.dot_dimension_numbers<[1], [0], [0], [1], [0, 0, 1, 1], [], []>} : vector<128x128xbf16>, vector<128x32xbf16>, vector<128x32xf32> -> vector<128x32xf32>
    %93 = tpu.concatenate %44, %60, %76, %92 in 1 : vector<128x32xf32>, vector<128x32xf32>, vector<128x32xf32>, vector<128x32xf32> -> vector<128x128xf32>
    %94 = arith.truncf %93 : vector<128x128xf32> to vector<128x128xbf16>
    %c0_39 = arith.constant 0 : index
    %c0_40 = arith.constant 0 : index
    %95 = vector.load %arg7[%c0_39, %c0_40] : memref<128x128xbf16, #tpu.memory_space<vmem>>, vector<128x128xbf16>
    %cst_41 = arith.constant dense<0.000000e+00> : vector<128x128xf32>
    %96 = tpu.matmul %94, %95, %cst_41 {dimension_numbers = #tpu.dot_dimension_numbers<[1], [0], [0], [1], [0, 0, 1, 1], [], []>} : vector<128x128xbf16>, vector<128x128xbf16>, vector<128x128xf32> -> vector<128x128xf32>
    %c0_42 = arith.constant 0 : index
    %c0_43 = arith.constant 0 : index
    %97 = vector.load %arg11[%c0_42, %c0_43] : memref<1x128xf32, #tpu.memory_space<vmem>>, vector<1x128xf32>
    %98 = vector.broadcast %97 : vector<1x128xf32> to vector<128x128xf32>
    %99 = arith.addf %96, %98 : vector<128x128xf32>
    %c0_44 = arith.constant 0 : index
    %c0_45 = arith.constant 0 : index
    %c0_46 = arith.constant 0 : index
    %100 = vector.load %arg12[%c0_44, %c0_45, %c0_46] : memref<1x128x128xf32, #tpu.memory_space<vmem>>, vector<1x128x128xf32>
    %101 = vector.shape_cast %100 : vector<1x128x128xf32> to vector<128x128xf32>
    %102 = vector.shape_cast %99 : vector<128x128xf32> to vector<1x128x128xf32>
    tpu.vector_store %arg12[%c0_44, %c0_45, %c0_46], %102 {strides = array<i32>} : memref<1x128x128xf32, #tpu.memory_space<vmem>>, vector<1x128x128xf32>,
    return
  }
  func.func @transform_0(%arg0: i32) -> (i32, i32, i32) {
    %c0_i32 = arith.constant 0 : i32
    %c0_i32_0 = arith.constant 0 : i32
    %c0_i32_1 = arith.constant 0 : i32
    return %arg0, %c0_i32, %c0_i32_0 : i32, i32, i32
  }
  func.func @transform_1(%arg0: i32) -> (i32, i32, i32) {
    %c0_i32 = arith.constant 0 : i32
    %c0_i32_0 = arith.constant 0 : i32
    %c0_i32_1 = arith.constant 0 : i32
    return %arg0, %c0_i32, %c0_i32_0 : i32, i32, i32
  }
  func.func @transform_2(%arg0: i32) -> (i32, i32, i32) {
    %c0_i32 = arith.constant 0 : i32
    %c0_i32_0 = arith.constant 0 : i32
    %c0_i32_1 = arith.constant 0 : i32
    return %arg0, %c0_i32, %c0_i32_0 : i32, i32, i32
  }
  func.func @transform_3(%arg0: i32) -> (i32, i32) {
    %c0_i32 = arith.constant 0 : i32
    %c0_i32_0 = arith.constant 0 : i32
    %c0_i32_1 = arith.constant 0 : i32
    return %c0_i32, %c0_i32_0 : i32, i32
  }
  func.func @transform_4(%arg0: i32) -> (i32, i32) {
    %c0_i32 = arith.constant 0 : i32
    %c0_i32_0 = arith.constant 0 : i32
    %c0_i32_1 = arith.constant 0 : i32
    return %c0_i32, %c0_i32_0 : i32, i32
  }
  func.func @transform_5(%arg0: i32) -> (i32, i32) {
    %c0_i32 = arith.constant 0 : i32
    %c0_i32_0 = arith.constant 0 : i32
    %c0_i32_1 = arith.constant 0 : i32
    return %c0_i32, %c0_i32_0 : i32, i32
  }
  func.func @transform_6(%arg0: i32) -> (i32, i32) {
    %c0_i32 = arith.constant 0 : i32
    %c0_i32_0 = arith.constant 0 : i32
    %c0_i32_1 = arith.constant 0 : i32
    return %c0_i32, %c0_i32_0 : i32, i32
  }
  func.func @transform_7(%arg0: i32) -> (i32, i32) {
    %c0_i32 = arith.constant 0 : i32
    %c0_i32_0 = arith.constant 0 : i32
    %c0_i32_1 = arith.constant 0 : i32
    return %c0_i32, %c0_i32_0 : i32, i32
  }
  func.func @transform_8(%arg0: i32) -> (i32, i32) {
    %c0_i32 = arith.constant 0 : i32
    %c0_i32_0 = arith.constant 0 : i32
    %c0_i32_1 = arith.constant 0 : i32
    return %c0_i32, %c0_i32_0 : i32, i32
  }
  func.func @transform_9(%arg0: i32) -> (i32, i32) {
    %c0_i32 = arith.constant 0 : i32
    %c0_i32_0 = arith.constant 0 : i32
    %c0_i32_1 = arith.constant 0 : i32
    return %c0_i32, %c0_i32_0 : i32, i32
  }
  func.func @transform_10(%arg0: i32) -> (i32, i32) {
    %c0_i32 = arith.constant 0 : i32
    %c0_i32_0 = arith.constant 0 : i32
    %c0_i32_1 = arith.constant 0 : i32
    return %c0_i32, %c0_i32_0 : i32, i32
  }
  func.func @transform_11(%arg0: i32) -> (i32, i32, i32) {
    %c0_i32 = arith.constant 0 : i32
    %c0_i32_0 = arith.constant 0 : i32
    %c0_i32_1 = arith.constant 0 : i32
    return %arg0, %c0_i32, %c0_i32_0 : i32, i32, i32
  }
}

</mosaic_0001>

<llo_original>
// kernel: multi_head_attention_forward.1
$region0: #{multi_head_attention_forward.1}
  #allocation0 [shape = 'u32[]', space=smem, size = 0x4, offset = 0x4, fixed_abs, tag = 'smem constant byte address 0x4 - core index']
  #allocation1 [shape = 'u32[144,128]{1,0:T(1,128)}', space=vmem, size = 0x12000, scoped, tag = 'internal scratch']
  %s0 = inlined_call_operand.vmem [shape: f32[2,128,128], index: 0, kind: input, shape index: {}]
  %s1 = inlined_call_operand.vmem [shape: f32[2,128,128], index: 1, kind: input, shape index: {}]
  %s2 = inlined_call_operand.vmem [shape: f32[2,128,128], index: 2, kind: input, shape index: {}]
  %s3 = inlined_call_operand.vmem [shape: bf16[128,128], index: 3, kind: input, shape index: {}]
  %s4 = inlined_call_operand.vmem [shape: bf16[128,128], index: 4, kind: input, shape index: {}]
  %s5 = inlined_call_operand.vmem [shape: bf16[128,128], index: 5, kind: input, shape index: {}]
  %s6 = inlined_call_operand.vmem [shape: bf16[128,128], index: 6, kind: input, shape index: {}]
  %s7 = inlined_call_operand.vmem [shape: f32[1,128], index: 7, kind: input, shape index: {}]
  %s8 = inlined_call_operand.vmem [shape: f32[1,128], index: 8, kind: input, shape index: {}]
  %s9 = inlined_call_operand.vmem [shape: f32[1,128], index: 9, kind: input, shape index: {}]
  %s10 = inlined_call_operand.vmem [shape: f32[1,128], index: 10, kind: input, shape index: {}]
  %s11 = inlined_call_operand.hbm [shape: f32[2,128,128], index: 11, kind: output, shape index: {}]
  %s12 = sld [smem:[#allocation0]]
  $region77: #{multi_head_attention_forward.1} parent=0
    _
  %s14 = ssub.s32 1, %s12
  %s15 = scalar_select 0, %s14, %s12
  $region1: #{multi_head_attention_forward.1} parent=0
    #allocation2 [shape = 'u8[131072]{0}', space=vmem, size = 0x20000, scoped, tag = 'output window, operand 0']
    #allocation3 [shape = 's32[2]{0}', space=sflag, size = 0x8, scoped, tag = 'scoped memory for multi_head_attention_forward.1']
    %16 = vsyncpa [#allocation3], 0
    %s17 = scalar_lea.sflag [#allocation3], 1
    %18 = vsyncpa %s17, 0
    loop: start=0, step=1, limit=4
    $region2: #{multi_head_attention_forward.1} parent=1 // loop_pre_header
      _
    $region3: #{multi_head_attention_forward.1} parent=1 // loop_header
      %s20 = sphi 0, %s24
      %p21 = scmp.ge.s32.totalorder %s20, 4
      %s30 = sphi 0, %s32
      %s33 = sphi 0, %s30
      %s34 = sphi 0, %s33
      %s50 = sphi 0, %s34
      %s56 = sphi 0, %s58
      %s59 = sphi 0, %s56
      %s60 = sphi 0, %s59
      %s76 = sphi 0, %s60
      %s82 = sphi 0, %s84
      %s85 = sphi 0, %s82
      %s86 = sphi 0, %s85
      %s102 = sphi 0, %s86
      %s106 = sphi 0, %s106
      %s108 = sphi 0, %s106
      %s109 = sphi 0, %s108
      %s123 = sphi 0, %s109
      %s127 = sphi 0, %s127
      %s129 = sphi 0, %s127
      %s130 = sphi 0, %s129
      %s144 = sphi 0, %s130
      %s148 = sphi 0, %s148
      %s150 = sphi 0, %s148
      %s151 = sphi 0, %s150
      %s165 = sphi 0, %s151
      %s169 = sphi 0, %s169
      %s171 = sphi 0, %s169
      %s172 = sphi 0, %s171
      %s186 = sphi 0, %s172
      %s190 = sphi 0, %s190
      %s192 = sphi 0, %s190
      %s193 = sphi 0, %s192
      %s207 = sphi 0, %s193
      %s211 = sphi 0, %s211
      %s213 = sphi 0, %s211
      %s214 = sphi 0, %s213
      %s228 = sphi 0, %s214
      %s232 = sphi 0, %s232
      %s234 = sphi 0, %s232
      %s235 = sphi 0, %s234
      %s249 = sphi 0, %s235
      %s253 = sphi 0, %s253
      %s255 = sphi 0, %s253
      %s256 = sphi 0, %s255
      %s270 = sphi 0, %s256
      %s276 = sphi 0, %s278
      %s279 = sphi 0, %s276
      %s280 = sphi 0, %s279
      %s296 = sphi 0, %s280
    $region4: #{multi_head_attention_forward.1} parent=1 // loop_header_branch
      %23 = sbr.rel (%p21) target = $region8
    $region5: #{multi_head_attention_forward.1} parent=1 // loop_body
      %s25 = ssub.s32 %s20, 1
      %s26 = ssub.s32 %s20, 2
      %s27 = sadd.s32 %s20, 1
      %s28 = ssub.s32 %s20, %s27
      %p29 = scmp.eq.s32.totalorder %s28, 0
      %s31 = sadd.s32 %s30, 1
      %s32 = scalar_select %p29, %s30, %s31
      %p35 = pneg %p29
      %p36 = scmp.eq.s32.totalorder %s20, 1
      %p37 = por %p35, %p36
      %p38 = scmp.ne.s32.totalorder %s30, %s33
      %p39 = scmp.eq.s32.totalorder %s20, 0
      %p40 = por %p38, %p39
      %p41 = scmp.ne.s32.totalorder %s30, %s33
      %p42 = scmp.eq.s32.totalorder %s25, 1
      %p43 = por %p41, %p42
      %p44 = scmp.ne.s32.totalorder %s33, %s34
      %p45 = scmp.eq.s32.totalorder %s25, 0
      %p46 = por %p44, %p45
      %p47 = scmp.ne.s32.totalorder %s33, %s34
      %p48 = scmp.eq.s32.totalorder %s26, 1
      %p49 = por %p47, %p48
      %p51 = scmp.ne.s32.totalorder %s34, %s50
      %p52 = scmp.eq.s32.totalorder %s26, 0
      %p53 = por %p51, %p52
      %s54 = ssub.s32 %s20, %s27
      %p55 = scmp.eq.s32.totalorder %s54, 0
      %s57 = sadd.s32 %s56, 1
      %s58 = scalar_select %p55, %s56, %s57
      %p61 = pneg %p55
      %p62 = scmp.eq.s32.totalorder %s20, 1
      %p63 = por %p61, %p62
      %p64 = scmp.ne.s32.totalorder %s56, %s59
      %p65 = scmp.eq.s32.totalorder %s20, 0
      %p66 = por %p64, %p65
      %p67 = scmp.ne.s32.totalorder %s56, %s59
      %p68 = scmp.eq.s32.totalorder %s25, 1
      %p69 = por %p67, %p68
      %p70 = scmp.ne.s32.totalorder %s59, %s60
      %p71 = scmp.eq.s32.totalorder %s25, 0
      %p72 = por %p70, %p71
      %p73 = scmp.ne.s32.totalorder %s59, %s60
      %p74 = scmp.eq.s32.totalorder %s26, 1
      %p75 = por %p73, %p74
      %p77 = scmp.ne.s32.totalorder %s60, %s76
      %p78 = scmp.eq.s32.totalorder %s26, 0
      %p79 = por %p77, %p78
      %s80 = ssub.s32 %s20, %s27
      %p81 = scmp.eq.s32.totalorder %s80, 0
      %s83 = sadd.s32 %s82, 1
      %s84 = scalar_select %p81, %s82, %s83
      %p87 = pneg %p81
      %p88 = scmp.eq.s32.totalorder %s20, 1
      %p89 = por %p87, %p88
      %p90 = scmp.ne.s32.totalorder %s82, %s85
      %p91 = scmp.eq.s32.totalorder %s20, 0
      %p92 = por %p90, %p91
      %p93 = scmp.ne.s32.totalorder %s82, %s85
      %p94 = scmp.eq.s32.totalorder %s25, 1
      %p95 = por %p93, %p94
      %p96 = scmp.ne.s32.totalorder %s85, %s86
      %p97 = scmp.eq.s32.totalorder %s25, 0
      %p98 = por %p96, %p97
      %p99 = scmp.ne.s32.totalorder %s85, %s86
      %p100 = scmp.eq.s32.totalorder %s26, 1
      %p101 = por %p99, %p100
      %p103 = scmp.ne.s32.totalorder %s86, %s102
      %p104 = scmp.eq.s32.totalorder %s26, 0
      %p105 = por %p103, %p104
      %s107 = sadd.s32 %s106, 1
      %p110 = scmp.eq.s32.totalorder %s20, 1
      %p111 = scmp.ne.s32.totalorder %s106, %s108
      %p112 = scmp.eq.s32.totalorder %s20, 0
      %p113 = por %p111, %p112
      %p114 = scmp.ne.s32.totalorder %s106, %s108
      %p115 = scmp.eq.s32.totalorder %s25, 1
      %p116 = por %p114, %p115
      %p117 = scmp.ne.s32.totalorder %s108, %s109
      %p118 = scmp.eq.s32.totalorder %s25, 0
      %p119 = por %p117, %p118
      %p120 = scmp.ne.s32.totalorder %s108, %s109
      %p121 = scmp.eq.s32.totalorder %s26, 1
      %p122 = por %p120, %p121
      %p124 = scmp.ne.s32.totalorder %s109, %s123
      %p125 = scmp.eq.s32.totalorder %s26, 0
      %p126 = por %p124, %p125
      %s128 = sadd.s32 %s127, 1
      %p131 = scmp.eq.s32.totalorder %s20, 1
      %p132 = scmp.ne.s32.totalorder %s127, %s129
      %p133 = scmp.eq.s32.totalorder %s20, 0
      %p134 = por %p132, %p133
      %p135 = scmp.ne.s32.totalorder %s127, %s129
      %p136 = scmp.eq.s32.totalorder %s25, 1
      %p137 = por %p135, %p136
      %p138 = scmp.ne.s32.totalorder %s129, %s130
      %p139 = scmp.eq.s32.totalorder %s25, 0
      %p140 = por %p138, %p139
      %p141 = scmp.ne.s32.totalorder %s129, %s130
      %p142 = scmp.eq.s32.totalorder %s26, 1
      %p143 = por %p141, %p142
      %p145 = scmp.ne.s32.totalorder %s130, %s144
      %p146 = scmp.eq.s32.totalorder %s26, 0
      %p147 = por %p145, %p146
      %s149 = sadd.s32 %s148, 1
      %p152 = scmp.eq.s32.totalorder %s20, 1
      %p153 = scmp.ne.s32.totalorder %s148, %s150
      %p154 = scmp.eq.s32.totalorder %s20, 0
      %p155 = por %p153, %p154
      %p156 = scmp.ne.s32.totalorder %s148, %s150
      %p157 = scmp.eq.s32.totalorder %s25, 1
      %p158 = por %p156, %p157
      %p159 = scmp.ne.s32.totalorder %s150, %s151
      %p160 = scmp.eq.s32.totalorder %s25, 0
      %p161 = por %p159, %p160
      %p162 = scmp.ne.s32.totalorder %s150, %s151
      %p163 = scmp.eq.s32.totalorder %s26, 1
      %p164 = por %p162, %p163
      %p166 = scmp.ne.s32.totalorder %s151, %s165
      %p167 = scmp.eq.s32.totalorder %s26, 0
      %p168 = por %p166, %p167
      %s170 = sadd.s32 %s169, 1
      %p173 = scmp.eq.s32.totalorder %s20, 1
      %p174 = scmp.ne.s32.totalorder %s169, %s171
      %p175 = scmp.eq.s32.totalorder %s20, 0
      %p176 = por %p174, %p175
      %p177 = scmp.ne.s32.totalorder %s169, %s171
      %p178 = scmp.eq.s32.totalorder %s25, 1
      %p179 = por %p177, %p178
      %p180 = scmp.ne.s32.totalorder %s171, %s172
      %p181 = scmp.eq.s32.totalorder %s25, 0
      %p182 = por %p180, %p181
      %p183 = scmp.ne.s32.totalorder %s171, %s172
      %p184 = scmp.eq.s32.totalorder %s26, 1
      %p185 = por %p183, %p184
      %p187 = scmp.ne.s32.totalorder %s172, %s186
      %p188 = scmp.eq.s32.totalorder %s26, 0
      %p189 = por %p187, %p188
      %s191 = sadd.s32 %s190, 1
      %p194 = scmp.eq.s32.totalorder %s20, 1
      %p195 = scmp.ne.s32.totalorder %s190, %s192
      %p196 = scmp.eq.s32.totalorder %s20, 0
      %p197 = por %p195, %p196
      %p198 = scmp.ne.s32.totalorder %s190, %s192
      %p199 = scmp.eq.s32.totalorder %s25, 1
      %p200 = por %p198, %p199
      %p201 = scmp.ne.s32.totalorder %s192, %s193
      %p202 = scmp.eq.s32.totalorder %s25, 0
      %p203 = por %p201, %p202
      %p204 = scmp.ne.s32.totalorder %s192, %s193
      %p205 = scmp.eq.s32.totalorder %s26, 1
      %p206 = por %p204, %p205
      %p208 = scmp.ne.s32.totalorder %s193, %s207
      %p209 = scmp.eq.s32.totalorder %s26, 0
      %p210 = por %p208, %p209
      %s212 = sadd.s32 %s211, 1
      %p215 = scmp.eq.s32.totalorder %s20, 1
      %p216 = scmp.ne.s32.totalorder %s211, %s213
      %p217 = scmp.eq.s32.totalorder %s20, 0
      %p218 = por %p216, %p217
      %p219 = scmp.ne.s32.totalorder %s211, %s213
      %p220 = scmp.eq.s32.totalorder %s25, 1
      %p221 = por %p219, %p220
      %p222 = scmp.ne.s32.totalorder %s213, %s214
      %p223 = scmp.eq.s32.totalorder %s25, 0
      %p224 = por %p222, %p223
      %p225 = scmp.ne.s32.totalorder %s213, %s214
      %p226 = scmp.eq.s32.totalorder %s26, 1
      %p227 = por %p225, %p226
      %p229 = scmp.ne.s32.totalorder %s214, %s228
      %p230 = scmp.eq.s32.totalorder %s26, 0
      %p231 = por %p229, %p230
      %s233 = sadd.s32 %s232, 1
      %p236 = scmp.eq.s32.totalorder %s20, 1
      %p237 = scmp.ne.s32.totalorder %s232, %s234
      %p238 = scmp.eq.s32.totalorder %s20, 0
      %p239 = por %p237, %p238
      %p240 = scmp.ne.s32.totalorder %s232, %s234
      %p241 = scmp.eq.s32.totalorder %s25, 1
      %p242 = por %p240, %p241
      %p243 = scmp.ne.s32.totalorder %s234, %s235
      %p244 = scmp.eq.s32.totalorder %s25, 0
      %p245 = por %p243, %p244
      %p246 = scmp.ne.s32.totalorder %s234, %s235
      %p247 = scmp.eq.s32.totalorder %s26, 1
      %p248 = por %p246, %p247
      %p250 = scmp.ne.s32.totalorder %s235, %s249
      %p251 = scmp.eq.s32.totalorder %s26, 0
      %p252 = por %p250, %p251
      %s254 = sadd.s32 %s253, 1
      %p257 = scmp.eq.s32.totalorder %s20, 1
      %p258 = scmp.ne.s32.totalorder %s253, %s255
      %p259 = scmp.eq.s32.totalorder %s20, 0
      %p260 = por %p258, %p259
      %p261 = scmp.ne.s32.totalorder %s253, %s255
      %p262 = scmp.eq.s32.totalorder %s25, 1
      %p263 = por %p261, %p262
      %p264 = scmp.ne.s32.totalorder %s255, %s256
      %p265 = scmp.eq.s32.totalorder %s25, 0
      %p266 = por %p264, %p265
      %p267 = scmp.ne.s32.totalorder %s255, %s256
      %p268 = scmp.eq.s32.totalorder %s26, 1
      %p269 = por %p267, %p268
      %p271 = scmp.ne.s32.totalorder %s256, %s270
      %p272 = scmp.eq.s32.totalorder %s26, 0
      %p273 = por %p271, %p272
      %s274 = ssub.s32 %s20, %s27
      %p275 = scmp.eq.s32.totalorder %s274, 0
      %s277 = sadd.s32 %s276, 1
      %s278 = scalar_select %p275, %s276, %s277
      %p281 = pneg %p275
      %p282 = scmp.eq.s32.totalorder %s20, 1
      %p283 = por %p281, %p282
      %p284 = scmp.ne.s32.totalorder %s276, %s279
      %p285 = scmp.eq.s32.totalorder %s20, 0
      %p286 = por %p284, %p285
      %p287 = scmp.ne.s32.totalorder %s276, %s279
      %p288 = scmp.eq.s32.totalorder %s25, 1
      %p289 = por %p287, %p288
      %p290 = scmp.ne.s32.totalorder %s279, %s280
      %p291 = scmp.eq.s32.totalorder %s25, 0
      %p292 = por %p290, %p291
      %p293 = scmp.ne.s32.totalorder %s279, %s280
      %p294 = scmp.eq.s32.totalorder %s26, 1
      %p295 = por %p293, %p294
      %p297 = scmp.ne.s32.totalorder %s280, %s296
      %p298 = scmp.eq.s32.totalorder %s26, 0
      %p299 = por %p297, %p298
      %p300 = scmp.le.s32.totalorder 1, %s20
      %p301 = scmp.lt.s32.totalorder %s20, 3
      %p302 = pnand %p300, %p301
      %p303 = pneg %p302
      // Predicated region
      $region9: #{multi_head_attention_forward.1} parent=5 // pred_check
        _
      $region10: #{multi_head_attention_forward.1} parent=5 // pred_check_branch
        %305 = sbr.rel (%p302) target = $region12
      $region11: #{multi_head_attention_forward.1} parent=5 // pred_region
        %s306 = ssub.s32 %s20, 1
        // Predicated region
        $region13: #{multi_head_attention_forward.1} parent=11 // pred_check
          %p307 = pneg %p119
        $region14: #{multi_head_attention_forward.1} parent=11 // pred_check_branch
          %309 = sbr.rel (%p307) target = $region16
        $region15: #{multi_head_attention_forward.1} parent=11 // pred_region
          _
        $region16: #{multi_head_attention_forward.1} parent=11 // pred_fallthru
          _
        // Predicated region
        $region17: #{multi_head_attention_forward.1} parent=11 // pred_check
          %p310 = pneg %p140
        $region18: #{multi_head_attention_forward.1} parent=11 // pred_check_branch
          %312 = sbr.rel (%p310) target = $region20
        $region19: #{multi_head_attention_forward.1} parent=11 // pred_region
          _
        $region20: #{multi_head_attention_forward.1} parent=11 // pred_fallthru
          _
        // Predicated region
        $region21: #{multi_head_attention_forward.1} parent=11 // pred_check
          %p313 = pneg %p161
        $region22: #{multi_head_attention_forward.1} parent=11 // pred_check_branch
          %315 = sbr.rel (%p313) target = $region24
        $region23: #{multi_head_attention_forward.1} parent=11 // pred_region
          _
        $region24: #{multi_head_attention_forward.1} parent=11 // pred_fallthru
          _
        // Predicated region
        $region25: #{multi_head_attention_forward.1} parent=11 // pred_check
          %p316 = pneg %p182
        $region26: #{multi_head_attention_forward.1} parent=11 // pred_check_branch
          %318 = sbr.rel (%p316) target = $region28
        $region27: #{multi_head_attention_forward.1} parent=11 // pred_region
          _
        $region28: #{multi_head_attention_forward.1} parent=11 // pred_fallthru
          _
        // Predicated region
        $region29: #{multi_head_attention_forward.1} parent=11 // pred_check
          %p319 = pneg %p203
        $region30: #{multi_head_attention_forward.1} parent=11 // pred_check_branch
          %321 = sbr.rel (%p319) target = $region32
        $region31: #{multi_head_attention_forward.1} parent=11 // pred_region
          _
        $region32: #{multi_head_attention_forward.1} parent=11 // pred_fallthru
          _
        // Predicated region
        $region33: #{multi_head_attention_forward.1} parent=11 // pred_check
          %p322 = pneg %p224
        $region34: #{multi_head_attention_forward.1} parent=11 // pred_check_branch
          %324 = sbr.rel (%p322) target = $region36
        $region35: #{multi_head_attention_forward.1} parent=11 // pred_region
          _
        $region36: #{multi_head_attention_forward.1} parent=11 // pred_fallthru
          _
        // Predicated region
        $region37: #{multi_head_attention_forward.1} parent=11 // pred_check
          %p325 = pneg %p245
        $region38: #{multi_head_attention_forward.1} parent=11 // pred_check_branch
          %327 = sbr.rel (%p325) target = $region40
        $region39: #{multi_head_attention_forward.1} parent=11 // pred_region
          _
        $region40: #{multi_head_attention_forward.1} parent=11 // pred_fallthru
          _
        // Predicated region
        $region41: #{multi_head_attention_forward.1} parent=11 // pred_check
          %p328 = pneg %p266
        $region42: #{multi_head_attention_forward.1} parent=11 // pred_check_branch
          %330 = sbr.rel (%p328) target = $region44
        $region43: #{multi_head_attention_forward.1} parent=11 // pred_region
          _
        $region44: #{multi_head_attention_forward.1} parent=11 // pred_fallthru
          _
      $region12: #{multi_head_attention_forward.1} parent=5 // pred_fallthru
        _
      %p331 = scmp.lt.s32.totalorder %s20, 2
      // Predicated region
      $region45: #{multi_head_attention_forward.1} parent=5 // pred_check
        %p332 = pneg %p331
      $region46: #{multi_head_attention_forward.1} parent=5 // pred_check_branch
        %334 = sbr.rel (%p332) target = $region48
      $region47: #{multi_head_attention_forward.1} parent=5 // pred_region
        // Predicated region
        $region49: #{multi_head_attention_forward.1} parent=47 // pred_check
          %p335 = pneg %p40
        $region50: #{multi_head_attention_forward.1} parent=47 // pred_check_branch
          %337 = sbr.rel (%p335) target = $region52
        $region51: #{multi_head_attention_forward.1} parent=47 // pred_region
          %p338 = scmp.lt.s32.totalorder %s20, 1
          %s339 = scalar_select %p338, %s20, 1
          %s340 = smul.addr %s339, 16
          %s341 = smul.addr %s340, 8
          %s342 = scalar_lea.vmem %s0, %s341
        $region52: #{multi_head_attention_forward.1} parent=47 // pred_fallthru
          _
        // Predicated region
        $region53: #{multi_head_attention_forward.1} parent=47 // pred_check
          %p343 = pneg %p66
        $region54: #{multi_head_attention_forward.1} parent=47 // pred_check_branch
          %345 = sbr.rel (%p343) target = $region56
        $region55: #{multi_head_attention_forward.1} parent=47 // pred_region
          %p346 = scmp.lt.s32.totalorder %s20, 1
          %s347 = scalar_select %p346, %s20, 1
          %s348 = smul.addr %s347, 16
          %s349 = smul.addr %s348, 8
          %s350 = scalar_lea.vmem %s1, %s349
        $region56: #{multi_head_attention_forward.1} parent=47 // pred_fallthru
          _
        // Predicated region
        $region57: #{multi_head_attention_forward.1} parent=47 // pred_check
          %p351 = pneg %p92
        $region58: #{multi_head_attention_forward.1} parent=47 // pred_check_branch
          %353 = sbr.rel (%p351) target = $region60
        $region59: #{multi_head_attention_forward.1} parent=47 // pred_region
          %p354 = scmp.lt.s32.totalorder %s20, 1
          %s355 = scalar_select %p354, %s20, 1
          %s356 = smul.addr %s355, 16
          %s357 = smul.addr %s356, 8
          %s358 = scalar_lea.vmem %s2, %s357
        $region60: #{multi_head_attention_forward.1} parent=47 // pred_fallthru
          _
      $region48: #{multi_head_attention_forward.1} parent=5 // pred_fallthru
        _
      %p359 = scmp.le.s32.totalorder 1, %s20
      %p360 = scmp.lt.s32.totalorder %s20, 3
      %p361 = pnand %p359, %p360
      %p362 = pneg %p361
      // Predicated region
      $region61: #{multi_head_attention_forward.1} parent=5 // pred_check
        _
      $region62: #{multi_head_attention_forward.1} parent=5 // pred_check_branch
        %364 = sbr.rel (%p361) target = $region64
      $region63: #{multi_head_attention_forward.1} parent=5 // pred_region
        %s365 = ssub.s32 %s20, 1
        %p366 = scmp.lt.s32.totalorder %s25, 1
        %s367 = scalar_select %p366, %s25, 1
        %s368 = smul.addr %s367, 16
        %s369 = smul.addr %s368, 8
        %s370 = scalar_lea.vmem %s0, %s369
        %p371 = pneg %p46
        %p372 = pneg %p43
        %p373 = scmp.lt.s32.totalorder %s25, 1
        %s374 = scalar_select %p373, %s25, 1
        %s375 = smul.addr %s374, 16
        %s376 = smul.addr %s375, 8
        %s377 = scalar_lea.vmem %s1, %s376
        %p378 = pneg %p72
        %p379 = pneg %p69
        %p380 = scmp.lt.s32.totalorder %s25, 1
        %s381 = scalar_select %p380, %s25, 1
        %s382 = smul.addr %s381, 16
        %s383 = smul.addr %s382, 8
        %s384 = scalar_lea.vmem %s2, %s383
        %p385 = pneg %p98
        %p386 = pneg %p95
        %p387 = pneg %p119
        %p388 = pneg %p116
        %p389 = pneg %p140
        %p390 = pneg %p137
        %p391 = pneg %p161
        %p392 = pneg %p158
        %p393 = pneg %p182
        %p394 = pneg %p179
        %p395 = pneg %p203
        %p396 = pneg %p200
        %p397 = pneg %p224
        %p398 = pneg %p221
        %p399 = pneg %p245
        %p400 = pneg %p242
        %p401 = pneg %p266
        %p402 = pneg %p263
        %p403 = pneg %p292
        %p404 = pneg %p289
        %s405 = sand.u32 %s279, 1
        %s406 = scalar_lea.sflag [#allocation3], %s405
        %s407 = sand.u32 %s279, 1
        %s408 = smul.addr %s407, 128
        %s409 = scalar_lea.vmem [#allocation2], %s408
        %p410 = scmp.lt.s32.totalorder %s25, 1
        %s411 = scalar_select %p410, %s25, 1
        %s412 = smul.addr %s411, 16
        %s413 = smul.addr %s412, 8
        %s414 = scalar_lea.vmem %s0, %s413
        %p415 = scmp.lt.s32.totalorder %s25, 1
        %s416 = scalar_select %p415, %s25, 1
        %s417 = smul.addr %s416, 16
        %s418 = smul.addr %s417, 8
        %s419 = scalar_lea.vmem %s1, %s418
        %p420 = scmp.lt.s32.totalorder %s25, 1
        %s421 = scalar_select %p420, %s25, 1
        %s422 = smul.addr %s421, 16
        %s423 = smul.addr %s422, 8
        %s424 = scalar_lea.vmem %s2, %s423
        %v426 = vld [vmem:[%s414] sm:$0xff]
        %v427 = vld [vmem:[%s414 + $0x8] sm:$0xff]
        %v428 = vld [vmem:[%s414 + $0x10] sm:$0xff]
        %v429 = vld [vmem:[%s414 + $0x18] sm:$0xff]
        %v430 = vld [vmem:[%s414 + $0x20] sm:$0xff]
        %v431 = vld [vmem:[%s414 + $0x28] sm:$0xff]
        %v432 = vld [vmem:[%s414 + $0x30] sm:$0xff]
        %v433 = vld [vmem:[%s414 + $0x38] sm:$0xff]
        %v434 = vld [vmem:[%s414 + $0x40] sm:$0xff]
        %v435 = vld [vmem:[%s414 + $0x48] sm:$0xff]
        %v436 = vld [vmem:[%s414 + $0x50] sm:$0xff]
        %v437 = vld [vmem:[%s414 + $0x58] sm:$0xff]
        %v438 = vld [vmem:[%s414 + $0x60] sm:$0xff]
        %v439 = vld [vmem:[%s414 + $0x68] sm:$0xff]
        %v440 = vld [vmem:[%s414 + $0x70] sm:$0xff]
        %v441 = vld [vmem:[%s414 + $0x78] sm:$0xff]
        %v442 = vpack.c.bf16 %v427, %v426
        %v443 = vpack.c.bf16 %v429, %v428
        %v444 = vpack.c.bf16 %v431, %v430
        %v445 = vpack.c.bf16 %v433, %v432
        %v446 = vpack.c.bf16 %v435, %v434
        %v447 = vpack.c.bf16 %v437, %v436
        %v448 = vpack.c.bf16 %v439, %v438
        %v449 = vpack.c.bf16 %v441, %v440
        %v450 = vld [vmem:[%s3] sm:$0xf]
        %v451 = vld [vmem:[%s3 + $0x4] sm:$0xf]
        %v452 = vld [vmem:[%s3 + $0x8] sm:$0xf]
        %v453 = vld [vmem:[%s3 + $0xc] sm:$0xf]
        %v454 = vld [vmem:[%s3 + $0x10] sm:$0xf]
        %v455 = vld [vmem:[%s3 + $0x14] sm:$0xf]
        %v456 = vld [vmem:[%s3 + $0x18] sm:$0xf]
        %v457 = vld [vmem:[%s3 + $0x1c] sm:$0xf]
        %v458 = vld [vmem:[%s3 + $0x20] sm:$0xf]
        %v459 = vld [vmem:[%s3 + $0x24] sm:$0xf]
        %v460 = vld [vmem:[%s3 + $0x28] sm:$0xf]
        %v461 = vld [vmem:[%s3 + $0x2c] sm:$0xf]
        %v462 = vld [vmem:[%s3 + $0x30] sm:$0xf]
        %v463 = vld [vmem:[%s3 + $0x34] sm:$0xf]
        %v464 = vld [vmem:[%s3 + $0x38] sm:$0xf]
        %v465 = vld [vmem:[%s3 + $0x3c] sm:$0xf]
        %v466 = vld [vmem:[%s7] sm:$0x1]
        %v468 = vlaneseq
        %v469 = vshrl.u32 %v468, 7
        %v470 = vsub.s32 0, %v469
        %v471 = vrot.slane %v466, %v470
        %v489 = vunpack.c.l.b16 %v450
        %v490 = vunpack.c.l.b16 %v451
        %v491 = vunpack.c.l.b16 %v452
        %v492 = vunpack.c.l.b16 %v453
        %v493 = vunpack.c.l.b16 %v454
        %v494 = vunpack.c.l.b16 %v455
        %v495 = vunpack.c.l.b16 %v456
        %v496 = vunpack.c.l.b16 %v457
        %v497 = vunpack.c.l.b16 %v458
        %v498 = vunpack.c.l.b16 %v459
        %v499 = vunpack.c.l.b16 %v460
        %v500 = vunpack.c.l.b16 %v461
        %v501 = vunpack.c.l.b16 %v462
        %v502 = vunpack.c.l.b16 %v463
        %v503 = vunpack.c.l.b16 %v464
        %v504 = vunpack.c.l.b16 %v465
        %v505 = vpack.c.b16 %v490, %v489
        %v506 = vpack.c.b16 %v492, %v491
        %v507 = vpack.c.b16 %v494, %v493
        %v508 = vpack.c.b16 %v496, %v495
        %v509 = vpack.c.b16 %v498, %v497
        %v510 = vpack.c.b16 %v500, %v499
        %v511 = vpack.c.b16 %v502, %v501
        %v512 = vpack.c.b16 %v504, %v503
        %521 = vmatprep.subr.bf16.mxu0 0
        %522 = vmatpush1.bf16.msra.mxu0 %v505
        %523 = vmatprep.subr.bf16.mxu0 0
        %524 = vmatpush1.bf16.msra.mxu0 %v506
        %525 = vmatprep.subr.bf16.mxu0 0
        %526 = vmatpush1.bf16.msra.mxu0 %v507
        %527 = vmatprep.subr.bf16.mxu0 0
        %528 = vmatpush1.bf16.msra.mxu0 %v508
        %529 = vmatprep.subr.bf16.mxu0 0
        %530 = vmatpush1.bf16.msra.mxu0 %v509
        %531 = vmatprep.subr.bf16.mxu0 0
        %532 = vmatpush1.bf16.msra.mxu0 %v510
        %533 = vmatprep.subr.bf16.mxu0 0
        %534 = vmatpush1.bf16.msra.mxu0 %v511
        %535 = vmatprep.subr.bf16.mxu0 0
        %536 = vmatpush1.bf16.msra.mxu0 %v512
        %537 = vmatprep.subr.bf16.mxu0 0
        %538 = vmatpush1.bf16.msra.mxu0 0
        %539 = vmatprep.subr.bf16.mxu0 0
        %540 = vmatpush1.bf16.msra.mxu0 0
        %541 = vmatprep.subr.bf16.mxu0 0
        %542 = vmatpush1.bf16.msra.mxu0 0
        %543 = vmatprep.subr.bf16.mxu0 0
        %544 = vmatpush1.bf16.msra.mxu0 0
        %545 = vmatprep.subr.bf16.mxu0 0
        %546 = vmatpush1.bf16.msra.mxu0 0
        %547 = vmatprep.subr.bf16.mxu0 0
        %548 = vmatpush1.bf16.msra.mxu0 0
        %549 = vmatprep.subr.bf16.mxu0 0
        %550 = vmatpush1.bf16.msra.mxu0 0
        %551 = vmatprep.subr.bf16.mxu0 0
        %552 = vmatpush1.bf16.msra.mxu0 0
        %553 = vmatprep.mubr.bf16.mxu0 0
        %554 = vmatmul.mubr.bf16.gmra.mrb[0].mxu0 %v442
        %v555 = vpop.f32.mrb[0].mxu0
        %v556 = vadd.f32 %v471, %v555
        %v557 = vpop.f32.mrb[0].mxu0
        %v558 = vpop.f32.mrb[0].mxu0
        %v559 = vadd.f32 %v471, %v558
        %v560 = vpop.f32.mrb[0].mxu0
        %561 = vmatprep.mubr.bf16.mxu0 0
        %562 = vmatmul.mubr.bf16.gmra.mrb[0].mxu0 %v443
        %v563 = vpop.f32.mrb[0].mxu0
        %v564 = vadd.f32 %v471, %v563
        %v565 = vpop.f32.mrb[0].mxu0
        %v566 = vpop.f32.mrb[0].mxu0
        %v567 = vadd.f32 %v471, %v566
        %v568 = vpop.f32.mrb[0].mxu0
        %569 = vmatprep.mubr.bf16.mxu0 0
        %570 = vmatmul.mubr.bf16.gmra.mrb[0].mxu0 %v444
        %v571 = vpop.f32.mrb[0].mxu0
        %v572 = vadd.f32 %v471, %v571
        %v573 = vpop.f32.mrb[0].mxu0
        %v574 = vpop.f32.mrb[0].mxu0
        %v575 = vadd.f32 %v471, %v574
        %v576 = vpop.f32.mrb[0].mxu0
        %577 = vmatprep.mubr.bf16.mxu0 0
        %578 = vmatmul.mubr.bf16.gmra.mrb[0].mxu0 %v445
        %v579 = vpop.f32.mrb[0].mxu0
        %v580 = vadd.f32 %v471, %v579
        %v581 = vpop.f32.mrb[0].mxu0
        %v582 = vpop.f32.mrb[0].mxu0
        %v583 = vadd.f32 %v471, %v582
        %v584 = vpop.f32.mrb[0].mxu0
        %585 = vmatprep.mubr.bf16.mxu0 0
        %586 = vmatmul.mubr.bf16.gmra.mrb[0].mxu0 %v446
        %v587 = vpop.f32.mrb[0].mxu0
        %v588 = vadd.f32 %v471, %v587
        %v589 = vpop.f32.mrb[0].mxu0
        %v590 = vpop.f32.mrb[0].mxu0
        %v591 = vadd.f32 %v471, %v590
        %v592 = vpop.f32.mrb[0].mxu0
        %593 = vmatprep.mubr.bf16.mxu0 0
        %594 = vmatmul.mubr.bf16.gmra.mrb[0].mxu0 %v447
        %v595 = vpop.f32.mrb[0].mxu0
        %v596 = vadd.f32 %v471, %v595
        %v597 = vpop.f32.mrb[0].mxu0
        %v598 = vpop.f32.mrb[0].mxu0
        %v599 = vadd.f32 %v471, %v598
        %v600 = vpop.f32.mrb[0].mxu0
        %601 = vmatprep.mubr.bf16.mxu0 0
        %602 = vmatmul.mubr.bf16.gmra.mrb[0].mxu0 %v448
        %v603 = vpop.f32.mrb[0].mxu0
        %v604 = vadd.f32 %v471, %v603
        %v605 = vpop.f32.mrb[0].mxu0
        %v606 = vpop.f32.mrb[0].mxu0
        %v607 = vadd.f32 %v471, %v606
        %v608 = vpop.f32.mrb[0].mxu0
        %609 = vmatprep.mubr.bf16.mxu0 0
        %610 = vmatmul.mubr.bf16.gmra.mrb[0].mxu0 %v449
        %v611 = vpop.f32.mrb[0].mxu0
        %v612 = vadd.f32 %v471, %v611
        %v613 = vpop.f32.mrb[0].mxu0
        %v614 = vpop.f32.mrb[0].mxu0
        %v615 = vadd.f32 %v471, %v614
        %v616 = vpop.f32.mrb[0].mxu0
        %617 = vdwg.mxu0
        %v618 = vmul.f32 %v556, 0.17677669
        %v619 = vmul.f32 %v559, 0.17677669
        %v620 = vmul.f32 %v564, 0.17677669
        %v621 = vmul.f32 %v567, 0.17677669
        %v622 = vmul.f32 %v572, 0.17677669
        %v623 = vmul.f32 %v575, 0.17677669
        %v624 = vmul.f32 %v580, 0.17677669
        %v625 = vmul.f32 %v583, 0.17677669
        %v626 = vmul.f32 %v588, 0.17677669
        %v627 = vmul.f32 %v591, 0.17677669
        %v628 = vmul.f32 %v596, 0.17677669
        %v629 = vmul.f32 %v599, 0.17677669
        %v630 = vmul.f32 %v604, 0.17677669
        %v631 = vmul.f32 %v607, 0.17677669
        %v632 = vmul.f32 %v612, 0.17677669
        %v633 = vmul.f32 %v615, 0.17677669
        %v634 = vld [vmem:[%s419] sm:$0xff]
        %v635 = vld [vmem:[%s419 + $0x8] sm:$0xff]
        %v636 = vld [vmem:[%s419 + $0x10] sm:$0xff]
        %v637 = vld [vmem:[%s419 + $0x18] sm:$0xff]
        %v638 = vld [vmem:[%s419 + $0x20] sm:$0xff]
        %v639 = vld [vmem:[%s419 + $0x28] sm:$0xff]
        %v640 = vld [vmem:[%s419 + $0x30] sm:$0xff]
        %v641 = vld [vmem:[%s419 + $0x38] sm:$0xff]
        %v642 = vld [vmem:[%s419 + $0x40] sm:$0xff]
        %v643 = vld [vmem:[%s419 + $0x48] sm:$0xff]
        %v644 = vld [vmem:[%s419 + $0x50] sm:$0xff]
        %v645 = vld [vmem:[%s419 + $0x58] sm:$0xff]
        %v646 = vld [vmem:[%s419 + $0x60] sm:$0xff]
        %v647 = vld [vmem:[%s419 + $0x68] sm:$0xff]
        %v648 = vld [vmem:[%s419 + $0x70] sm:$0xff]
        %v649 = vld [vmem:[%s419 + $0x78] sm:$0xff]
        %v650 = vpack.c.bf16 %v635, %v634
        %v651 = vpack.c.bf16 %v637, %v636
        %v652 = vpack.c.bf16 %v639, %v638
        %v653 = vpack.c.bf16 %v641, %v640
        %v654 = vpack.c.bf16 %v643, %v642
        %v655 = vpack.c.bf16 %v645, %v644
        %v656 = vpack.c.bf16 %v647, %v646
        %v657 = vpack.c.bf16 %v649, %v648
        %v658 = vld [vmem:[%s4] sm:$0xf]
        %v659 = vld [vmem:[%s4 + $0x4] sm:$0xf]
        %v660 = vld [vmem:[%s4 + $0x8] sm:$0xf]
        %v661 = vld [vmem:[%s4 + $0xc] sm:$0xf]
        %v662 = vld [vmem:[%s4 + $0x10] sm:$0xf]
        %v663 = vld [vmem:[%s4 + $0x14] sm:$0xf]
        %v664 = vld [vmem:[%s4 + $0x18] sm:$0xf]
        %v665 = vld [vmem:[%s4 + $0x1c] sm:$0xf]
        %v666 = vld [vmem:[%s4 + $0x20] sm:$0xf]
        %v667 = vld [vmem:[%s4 + $0x24] sm:$0xf]
        %v668 = vld [vmem:[%s4 + $0x28] sm:$0xf]
        %v669 = vld [vmem:[%s4 + $0x2c] sm:$0xf]
        %v670 = vld [vmem:[%s4 + $0x30] sm:$0xf]
        %v671 = vld [vmem:[%s4 + $0x34] sm:$0xf]
        %v672 = vld [vmem:[%s4 + $0x38] sm:$0xf]
        %v673 = vld [vmem:[%s4 + $0x3c] sm:$0xf]
        %v674 = vld [vmem:[%s8] sm:$0x1]
        %v676 = vlaneseq
        %v677 = vshrl.u32 %v676, 7
        %v678 = vsub.s32 0, %v677
        %v679 = vrot.slane %v674, %v678
        %v697 = vunpack.c.l.b16 %v658
        %v698 = vunpack.c.l.b16 %v659
        %v699 = vunpack.c.l.b16 %v660
        %v700 = vunpack.c.l.b16 %v661
        %v701 = vunpack.c.l.b16 %v662
        %v702 = vunpack.c.l.b16 %v663
        %v703 = vunpack.c.l.b16 %v664
        %v704 = vunpack.c.l.b16 %v665
        %v705 = vunpack.c.l.b16 %v666
        %v706 = vunpack.c.l.b16 %v667
        %v707 = vunpack.c.l.b16 %v668
        %v708 = vunpack.c.l.b16 %v669
        %v709 = vunpack.c.l.b16 %v670
        %v710 = vunpack.c.l.b16 %v671
        %v711 = vunpack.c.l.b16 %v672
        %v712 = vunpack.c.l.b16 %v673
        %v713 = vpack.c.b16 %v698, %v697
        %v714 = vpack.c.b16 %v700, %v699
        %v715 = vpack.c.b16 %v702, %v701
        %v716 = vpack.c.b16 %v704, %v703
        %v717 = vpack.c.b16 %v706, %v705
        %v718 = vpack.c.b16 %v708, %v707
        %v719 = vpack.c.b16 %v710, %v709
        %v720 = vpack.c.b16 %v712, %v711
        %729 = vmatprep.subr.bf16.mxu0 0
        %730 = vmatpush1.bf16.msra.mxu0 %v713
        %731 = vmatprep.subr.bf16.mxu0 0
        %732 = vmatpush1.bf16.msra.mxu0 %v714
        %733 = vmatprep.subr.bf16.mxu0 0
        %734 = vmatpush1.bf16.msra.mxu0 %v715
        %735 = vmatprep.subr.bf16.mxu0 0
        %736 = vmatpush1.bf16.msra.mxu0 %v716
        %737 = vmatprep.subr.bf16.mxu0 0
        %738 = vmatpush1.bf16.msra.mxu0 %v717
        %739 = vmatprep.subr.bf16.mxu0 0
        %740 = vmatpush1.bf16.msra.mxu0 %v718
        %741 = vmatprep.subr.bf16.mxu0 0
        %742 = vmatpush1.bf16.msra.mxu0 %v719
        %743 = vmatprep.subr.bf16.mxu0 0
        %744 = vmatpush1.bf16.msra.mxu0 %v720
        %745 = vmatprep.subr.bf16.mxu0 0
        %746 = vmatpush1.bf16.msra.mxu0 0
        %747 = vmatprep.subr.bf16.mxu0 0
        %748 = vmatpush1.bf16.msra.mxu0 0
        %749 = vmatprep.subr.bf16.mxu0 0
        %750 = vmatpush1.bf16.msra.mxu0 0
        %751 = vmatprep.subr.bf16.mxu0 0
        %752 = vmatpush1.bf16.msra.mxu0 0
        %753 = vmatprep.subr.bf16.mxu0 0
        %754 = vmatpush1.bf16.msra.mxu0 0
        %755 = vmatprep.subr.bf16.mxu0 0
        %756 = vmatpush1.bf16.msra.mxu0 0
        %757 = vmatprep.subr.bf16.mxu0 0
        %758 = vmatpush1.bf16.msra.mxu0 0
        %759 = vmatprep.subr.bf16.mxu0 0
        %760 = vmatpush1.bf16.msra.mxu0 0
        %761 = vmatprep.mubr.bf16.mxu0 0
        %762 = vmatmul.mubr.bf16.gmra.mrb[0].mxu0 %v650
        %v763 = vpop.f32.mrb[0].mxu0
        %v764 = vadd.f32 %v679, %v763
        %v765 = vpop.f32.mrb[0].mxu0
        %v766 = vpop.f32.mrb[0].mxu0
        %v767 = vadd.f32 %v679, %v766
        %v768 = vpop.f32.mrb[0].mxu0
        %769 = vmatprep.mubr.bf16.mxu0 0
        %770 = vmatmul.mubr.bf16.gmra.mrb[0].mxu0 %v651
        %v771 = vpop.f32.mrb[0].mxu0
        %v772 = vadd.f32 %v679, %v771
        %v773 = vpop.f32.mrb[0].mxu0
        %v774 = vpop.f32.mrb[0].mxu0
        %v775 = vadd.f32 %v679, %v774
        %v776 = vpop.f32.mrb[0].mxu0
        %777 = vmatprep.mubr.bf16.mxu0 0
        %778 = vmatmul.mubr.bf16.gmra.mrb[0].mxu0 %v652
        %v779 = vpop.f32.mrb[0].mxu0
        %v780 = vadd.f32 %v679, %v779
        %v781 = vpop.f32.mrb[0].mxu0
        %v782 = vpop.f32.mrb[0].mxu0
        %v783 = vadd.f32 %v679, %v782
        %v784 = vpop.f32.mrb[0].mxu0
        %785 = vmatprep.mubr.bf16.mxu0 0
        %786 = vmatmul.mubr.bf16.gmra.mrb[0].mxu0 %v653
        %v787 = vpop.f32.mrb[0].mxu0
        %v788 = vadd.f32 %v679, %v787
        %v789 = vpop.f32.mrb[0].mxu0
        %v790 = vpop.f32.mrb[0].mxu0
        %v791 = vadd.f32 %v679, %v790
        %v792 = vpop.f32.mrb[0].mxu0
        %793 = vmatprep.mubr.bf16.mxu0 0
        %794 = vmatmul.mubr.bf16.gmra.mrb[0].mxu0 %v654
        %v795 = vpop.f32.mrb[0].mxu0
        %v796 = vadd.f32 %v679, %v795
        %v797 = vpop.f32.mrb[0].mxu0
        %v798 = vpop.f32.mrb[0].mxu0
        %v799 = vadd.f32 %v679, %v798
        %v800 = vpop.f32.mrb[0].mxu0
        %801 = vmatprep.mubr.bf16.mxu0 0
        %802 = vmatmul.mubr.bf16.gmra.mrb[0].mxu0 %v655
        %v803 = vpop.f32.mrb[0].mxu0
        %v804 = vadd.f32 %v679, %v803
        %v805 = vpop.f32.mrb[0].mxu0
        %v806 = vpop.f32.mrb[0].mxu0
        %v807 = vadd.f32 %v679, %v806
        %v808 = vpop.f32.mrb[0].mxu0
        %809 = vmatprep.mubr.bf16.mxu0 0
        %810 = vmatmul.mubr.bf16.gmra.mrb[0].mxu0 %v656
        %v811 = vpop.f32.mrb[0].mxu0
        %v812 = vadd.f32 %v679, %v811
        %v813 = vpop.f32.mrb[0].mxu0
        %v814 = vpop.f32.mrb[0].mxu0
        %v815 = vadd.f32 %v679, %v814
        %v816 = vpop.f32.mrb[0].mxu0
        %817 = vmatprep.mubr.bf16.mxu0 0
        %818 = vmatmul.mubr.bf16.gmra.mrb[0].mxu0 %v657
        %v819 = vpop.f32.mrb[0].mxu0
        %v820 = vadd.f32 %v679, %v819
        %v821 = vpop.f32.mrb[0].mxu0
        %v822 = vpop.f32.mrb[0].mxu0
        %v823 = vadd.f32 %v679, %v822
        %v824 = vpop.f32.mrb[0].mxu0
        %825 = vdwg.mxu0
        %v826 = vld [vmem:[%s424] sm:$0xff]
        %v827 = vld [vmem:[%s424 + $0x8] sm:$0xff]
        %v828 = vld [vmem:[%s424 + $0x10] sm:$0xff]
        %v829 = vld [vmem:[%s424 + $0x18] sm:$0xff]
        %v830 = vld [vmem:[%s424 + $0x20] sm:$0xff]
        %v831 = vld [vmem:[%s424 + $0x28] sm:$0xff]
        %v832 = vld [vmem:[%s424 + $0x30] sm:$0xff]
        %v833 = vld [vmem:[%s424 + $0x38] sm:$0xff]
        %v834 = vld [vmem:[%s424 + $0x40] sm:$0xff]
        %v835 = vld [vmem:[%s424 + $0x48] sm:$0xff]
        %v836 = vld [vmem:[%s424 + $0x50] sm:$0xff]
        %v837 = vld [vmem:[%s424 + $0x58] sm:$0xff]
        %v838 = vld [vmem:[%s424 + $0x60] sm:$0xff]
        %v839 = vld [vmem:[%s424 + $0x68] sm:$0xff]
        %v840 = vld [vmem:[%s424 + $0x70] sm:$0xff]
        %v841 = vld [vmem:[%s424 + $0x78] sm:$0xff]
        %v842 = vpack.c.bf16 %v827, %v826
        %v843 = vpack.c.bf16 %v829, %v828
        %v844 = vpack.c.bf16 %v831, %v830
        %v845 = vpack.c.bf16 %v833, %v832
        %v846 = vpack.c.bf16 %v835, %v834
        %v847 = vpack.c.bf16 %v837, %v836
        %v848 = vpack.c.bf16 %v839, %v838
        %v849 = vpack.c.bf16 %v841, %v840
        %v850 = vld [vmem:[%s5] sm:$0xf]
        %v851 = vld [vmem:[%s5 + $0x4] sm:$0xf]
        %v852 = vld [vmem:[%s5 + $0x8] sm:$0xf]
        %v853 = vld [vmem:[%s5 + $0xc] sm:$0xf]
        %v854 = vld [vmem:[%s5 + $0x10] sm:$0xf]
        %v855 = vld [vmem:[%s5 + $0x14] sm:$0xf]
        %v856 = vld [vmem:[%s5 + $0x18] sm:$0xf]
        %v857 = vld [vmem:[%s5 + $0x1c] sm:$0xf]
        %v858 = vld [vmem:[%s5 + $0x20] sm:$0xf]
        %v859 = vld [vmem:[%s5 + $0x24] sm:$0xf]
        %v860 = vld [vmem:[%s5 + $0x28] sm:$0xf]
        %v861 = vld [vmem:[%s5 + $0x2c] sm:$0xf]
        %v862 = vld [vmem:[%s5 + $0x30] sm:$0xf]
        %v863 = vld [vmem:[%s5 + $0x34] sm:$0xf]
        %v864 = vld [vmem:[%s5 + $0x38] sm:$0xf]
        %v865 = vld [vmem:[%s5 + $0x3c] sm:$0xf]
        %v866 = vld [vmem:[%s9] sm:$0x1]
        %v868 = vlaneseq
        %v869 = vshrl.u32 %v868, 7
        %v870 = vsub.s32 0, %v869
        %v871 = vrot.slane %v866, %v870
        %v889 = vunpack.c.l.b16 %v850
        %v890 = vunpack.c.l.b16 %v851
        %v891 = vunpack.c.l.b16 %v852
        %v892 = vunpack.c.l.b16 %v853
        %v893 = vunpack.c.l.b16 %v854
        %v894 = vunpack.c.l.b16 %v855
        %v895 = vunpack.c.l.b16 %v856
        %v896 = vunpack.c.l.b16 %v857
        %v897 = vunpack.c.l.b16 %v858
        %v898 = vunpack.c.l.b16 %v859
        %v899 = vunpack.c.l.b16 %v860
        %v900 = vunpack.c.l.b16 %v861
        %v901 = vunpack.c.l.b16 %v862
        %v902 = vunpack.c.l.b16 %v863
        %v903 = vunpack.c.l.b16 %v864
        %v904 = vunpack.c.l.b16 %v865
        %v905 = vpack.c.b16 %v890, %v889
        %v906 = vpack.c.b16 %v892, %v891
        %v907 = vpack.c.b16 %v894, %v893
        %v908 = vpack.c.b16 %v896, %v895
        %v909 = vpack.c.b16 %v898, %v897
        %v910 = vpack.c.b16 %v900, %v899
        %v911 = vpack.c.b16 %v902, %v901
        %v912 = vpack.c.b16 %v904, %v903
        %921 = vmatprep.subr.bf16.mxu0 0
        %922 = vmatpush1.bf16.msra.mxu0 %v905
        %923 = vmatprep.subr.bf16.mxu0 0
        %924 = vmatpush1.bf16.msra.mxu0 %v906
        %925 = vmatprep.subr.bf16.mxu0 0
        %926 = vmatpush1.bf16.msra.mxu0 %v907
        %927 = vmatprep.subr.bf16.mxu0 0
        %928 = vmatpush1.bf16.msra.mxu0 %v908
        %929 = vmatprep.subr.bf16.mxu0 0
        %930 = vmatpush1.bf16.msra.mxu0 %v909
        %931 = vmatprep.subr.bf16.mxu0 0
        %932 = vmatpush1.bf16.msra.mxu0 %v910
        %933 = vmatprep.subr.bf16.mxu0 0
        %934 = vmatpush1.bf16.msra.mxu0 %v911
        %935 = vmatprep.subr.bf16.mxu0 0
        %936 = vmatpush1.bf16.msra.mxu0 %v912
        %937 = vmatprep.subr.bf16.mxu0 0
        %938 = vmatpush1.bf16.msra.mxu0 0
        %939 = vmatprep.subr.bf16.mxu0 0
        %940 = vmatpush1.bf16.msra.mxu0 0
        %941 = vmatprep.subr.bf16.mxu0 0
        %942 = vmatpush1.bf16.msra.mxu0 0
        %943 = vmatprep.subr.bf16.mxu0 0
        %944 = vmatpush1.bf16.msra.mxu0 0
        %945 = vmatprep.subr.bf16.mxu0 0
        %946 = vmatpush1.bf16.msra.mxu0 0
        %947 = vmatprep.subr.bf16.mxu0 0
        %948 = vmatpush1.bf16.msra.mxu0 0
        %949 = vmatprep.subr.bf16.mxu0 0
        %950 = vmatpush1.bf16.msra.mxu0 0
        %951 = vmatprep.subr.bf16.mxu0 0
        %952 = vmatpush1.bf16.msra.mxu0 0
        %953 = vmatprep.mubr.bf16.mxu0 0
        %954 = vmatmul.mubr.bf16.gmra.mrb[0].mxu0 %v842
        %v955 = vpop.f32.mrb[0].mxu0
        %v956 = vadd.f32 %v871, %v955
        %v957 = vpop.f32.mrb[0].mxu0
        %v958 = vpop.f32.mrb[0].mxu0
        %v959 = vadd.f32 %v871, %v958
        %v960 = vpop.f32.mrb[0].mxu0
        %961 = vmatprep.mubr.bf16.mxu0 0
        %962 = vmatmul.mubr.bf16.gmra.mrb[0].mxu0 %v843
        %v963 = vpop.f32.mrb[0].mxu0
        %v964 = vadd.f32 %v871, %v963
        %v965 = vpop.f32.mrb[0].mxu0
        %v966 = vpop.f32.mrb[0].mxu0
        %v967 = vadd.f32 %v871, %v966
        %v968 = vpop.f32.mrb[0].mxu0
        %969 = vmatprep.mubr.bf16.mxu0 0
        %970 = vmatmul.mubr.bf16.gmra.mrb[0].mxu0 %v844
        %v971 = vpop.f32.mrb[0].mxu0
        %v972 = vadd.f32 %v871, %v971
        %v973 = vpop.f32.mrb[0].mxu0
        %v974 = vpop.f32.mrb[0].mxu0
        %v975 = vadd.f32 %v871, %v974
        %v976 = vpop.f32.mrb[0].mxu0
        %977 = vmatprep.mubr.bf16.mxu0 0
        %978 = vmatmul.mubr.bf16.gmra.mrb[0].mxu0 %v845
        %v979 = vpop.f32.mrb[0].mxu0
        %v980 = vadd.f32 %v871, %v979
        %v981 = vpop.f32.mrb[0].mxu0
        %v982 = vpop.f32.mrb[0].mxu0
        %v983 = vadd.f32 %v871, %v982
        %v984 = vpop.f32.mrb[0].mxu0
        %985 = vmatprep.mubr.bf16.mxu0 0
        %986 = vmatmul.mubr.bf16.gmra.mrb[0].mxu0 %v846
        %v987 = vpop.f32.mrb[0].mxu0
        %v988 = vadd.f32 %v871, %v987
        %v989 = vpop.f32.mrb[0].mxu0
        %v990 = vpop.f32.mrb[0].mxu0
        %v991 = vadd.f32 %v871, %v990
        %v992 = vpop.f32.mrb[0].mxu0
        %993 = vmatprep.mubr.bf16.mxu0 0
        %994 = vmatmul.mubr.bf16.gmra.mrb[0].mxu0 %v847
        %v995 = vpop.f32.mrb[0].mxu0
        %v996 = vadd.f32 %v871, %v995
        %v997 = vpop.f32.mrb[0].mxu0
        %v998 = vpop.f32.mrb[0].mxu0
        %v999 = vadd.f32 %v871, %v998
        %v1000 = vpop.f32.mrb[0].mxu0
        %1001 = vmatprep.mubr.bf16.mxu0 0
        %1002 = vmatmul.mubr.bf16.gmra.mrb[0].mxu0 %v848
        %v1003 = vpop.f32.mrb[0].mxu0
        %v1004 = vadd.f32 %v871, %v1003
        %v1005 = vpop.f32.mrb[0].mxu0
        %v1006 = vpop.f32.mrb[0].mxu0
        %v1007 = vadd.f32 %v871, %v1006
        %v1008 = vpop.f32.mrb[0].mxu0
        %1009 = vmatprep.mubr.bf16.mxu0 0
        %1010 = vmatmul.mubr.bf16.gmra.mrb[0].mxu0 %v849
        %v1011 = vpop.f32.mrb[0].mxu0
        %v1012 = vadd.f32 %v871, %v1011
        %v1013 = vpop.f32.mrb[0].mxu0
        %v1014 = vpop.f32.mrb[0].mxu0
        %v1015 = vadd.f32 %v871, %v1014
        %v1016 = vpop.f32.mrb[0].mxu0
        %1017 = vdwg.mxu0
        %v1018 = vpack.c.bf16 %v619, %v618
        %v1019 = vpack.c.bf16 %v621, %v620
        %v1020 = vpack.c.bf16 %v623, %v622
        %v1021 = vpack.c.bf16 %v625, %v624
        %v1022 = vpack.c.bf16 %v627, %v626
        %v1023 = vpack.c.bf16 %v629, %v628
        %v1024 = vpack.c.bf16 %v631, %v630
        %v1025 = vpack.c.bf16 %v633, %v632
        %v1026 = vpack.c.bf16 %v767, %v764
        %v1027 = vpack.c.bf16 %v775, %v772
        %v1028 = vpack.c.bf16 %v783, %v780
        %v1029 = vpack.c.bf16 %v791, %v788
        %v1030 = vpack.c.bf16 %v799, %v796
        %v1031 = vpack.c.bf16 %v807, %v804
        %v1032 = vpack.c.bf16 %v815, %v812
        %v1033 = vpack.c.bf16 %v823, %v820
        %v1034 = vpack.c.bf16 %v959, %v956
        %v1035 = vpack.c.bf16 %v967, %v964
        %v1036 = vpack.c.bf16 %v975, %v972
        %v1037 = vpack.c.bf16 %v983, %v980
        %v1038 = vpack.c.bf16 %v991, %v988
        %v1039 = vpack.c.bf16 %v999, %v996
        %v1040 = vpack.c.bf16 %v1007, %v1004
        %v1041 = vpack.c.bf16 %v1015, %v1012
        %vm1042 = vcmask 261120
        %v1044 = vsel %vm1042, %v1018, 0
        %v1047 = vsel %vm1042, %v1019, 0
        %v1050 = vsel %vm1042, %v1020, 0
        %v1053 = vsel %vm1042, %v1021, 0
        %v1056 = vsel %vm1042, %v1022, 0
        %v1059 = vsel %vm1042, %v1023, 0
        %v1062 = vsel %vm1042, %v1024, 0
        %v1065 = vsel %vm1042, %v1025, 0
        %v1068 = vsel %vm1042, %v1026, 0
        %v1071 = vsel %vm1042, %v1027, 0
        %v1074 = vsel %vm1042, %v1028, 0
        %v1077 = vsel %vm1042, %v1029, 0
        %v1080 = vsel %vm1042, %v1030, 0
        %v1083 = vsel %vm1042, %v1031, 0
        %v1086 = vsel %vm1042, %v1032, 0
        %v1089 = vsel %vm1042, %v1033, 0
        %1091 = vmatprep.subr.bf16.mxu0 0
        %1092 = vmatpush1.bf16.xpose.msra.mxu0 %v1068
        %1093 = vmatprep.subr.bf16.mxu0 0
        %1094 = vmatpush1.bf16.xpose.msra.mxu0 %v1071
        %1095 = vmatprep.subr.bf16.mxu0 0
        %1096 = vmatpush1.bf16.xpose.msra.mxu0 %v1074
        %1097 = vmatprep.subr.bf16.mxu0 0
        %1098 = vmatpush1.bf16.xpose.msra.mxu0 %v1077
        %1099 = vmatprep.subr.bf16.mxu0 0
        %1100 = vmatpush1.bf16.xpose.msra.mxu0 %v1080
        %1101 = vmatprep.subr.bf16.mxu0 0
        %1102 = vmatpush1.bf16.xpose.msra.mxu0 %v1083
        %1103 = vmatprep.subr.bf16.mxu0 0
        %1104 = vmatpush1.bf16.xpose.msra.mxu0 %v1086
        %1105 = vmatprep.subr.bf16.mxu0 0
        %1106 = vmatpush1.bf16.xpose.msra.mxu0 %v1089
        %1107 = vmatprep.subr.bf16.mxu0 0
        %1108 = vmatpush1.bf16.xpose.msra.mxu0 0
        %1109 = vmatprep.subr.bf16.mxu0 0
        %1110 = vmatpush1.bf16.xpose.msra.mxu0 0
        %1111 = vmatprep.subr.bf16.mxu0 0
        %1112 = vmatpush1.bf16.xpose.msra.mxu0 0
        %1113 = vmatprep.subr.bf16.mxu0 0
        %1114 = vmatpush1.bf16.xpose.msra.mxu0 0
        %1115 = vmatprep.subr.bf16.mxu0 0
        %1116 = vmatpush1.bf16.xpose.msra.mxu0 0
        %1117 = vmatprep.subr.bf16.mxu0 0
        %1118 = vmatpush1.bf16.xpose.msra.mxu0 0
        %1119 = vmatprep.subr.bf16.mxu0 0
        %1120 = vmatpush1.bf16.xpose.msra.mxu0 0
        %1121 = vmatprep.subr.bf16.mxu0 0
        %1122 = vmatpush1.bf16.xpose.msra.mxu0 0
        %1123 = vmatprep.mubr.bf16.mxu0 0
        %1124 = vmatmul.mubr.bf16.gmra.mrb[0].mxu0 %v1044
        %v1125 = vpop.f32.mrb[0].mxu0
        %v1126 = vadd.f32 0.0, %v1125
        %v1127 = vpop.f32.mrb[0].mxu0
        %v1128 = vpop.f32.mrb[0].mxu0
        %v1129 = vadd.f32 0.0, %v1128
        %v1130 = vpop.f32.mrb[0].mxu0
        %1131 = vmatprep.mubr.bf16.mxu0 0
        %1132 = vmatmul.mubr.bf16.gmra.mrb[0].mxu0 %v1047
        %v1133 = vpop.f32.mrb[0].mxu0
        %v1134 = vadd.f32 0.0, %v1133
        %v1135 = vpop.f32.mrb[0].mxu0
        %v1136 = vpop.f32.mrb[0].mxu0
        %v1137 = vadd.f32 0.0, %v1136
        %v1138 = vpop.f32.mrb[0].mxu0
        %1139 = vmatprep.mubr.bf16.mxu0 0
        %1140 = vmatmul.mubr.bf16.gmra.mrb[0].mxu0 %v1050
        %v1141 = vpop.f32.mrb[0].mxu0
        %v1142 = vadd.f32 0.0, %v1141
        %v1143 = vpop.f32.mrb[0].mxu0
        %v1144 = vpop.f32.mrb[0].mxu0
        %v1145 = vadd.f32 0.0, %v1144
        %v1146 = vpop.f32.mrb[0].mxu0
        %1147 = vmatprep.mubr.bf16.mxu0 0
        %1148 = vmatmul.mubr.bf16.gmra.mrb[0].mxu0 %v1053
        %v1149 = vpop.f32.mrb[0].mxu0
        %v1150 = vadd.f32 0.0, %v1149
        %v1151 = vpop.f32.mrb[0].mxu0
        %v1152 = vpop.f32.mrb[0].mxu0
        %v1153 = vadd.f32 0.0, %v1152
        %v1154 = vpop.f32.mrb[0].mxu0
        %1155 = vmatprep.mubr.bf16.mxu0 0
        %1156 = vmatmul.mubr.bf16.gmra.mrb[0].mxu0 %v1056
        %v1157 = vpop.f32.mrb[0].mxu0
        %v1158 = vadd.f32 0.0, %v1157
        %v1159 = vpop.f32.mrb[0].mxu0
        %v1160 = vpop.f32.mrb[0].mxu0
        %v1161 = vadd.f32 0.0, %v1160
        %v1162 = vpop.f32.mrb[0].mxu0
        %1163 = vmatprep.mubr.bf16.mxu0 0
        %1164 = vmatmul.mubr.bf16.gmra.mrb[0].mxu0 %v1059
        %v1165 = vpop.f32.mrb[0].mxu0
        %v1166 = vadd.f32 0.0, %v1165
        %v1167 = vpop.f32.mrb[0].mxu0
        %v1168 = vpop.f32.mrb[0].mxu0
        %v1169 = vadd.f32 0.0, %v1168
        %v1170 = vpop.f32.mrb[0].mxu0
        %1171 = vmatprep.mubr.bf16.mxu0 0
        %1172 = vmatmul.mubr.bf16.gmra.mrb[0].mxu0 %v1062
        %v1173 = vpop.f32.mrb[0].mxu0
        %v1174 = vadd.f32 0.0, %v1173
        %v1175 = vpop.f32.mrb[0].mxu0
        %v1176 = vpop.f32.mrb[0].mxu0
        %v1177 = vadd.f32 0.0, %v1176
        %v1178 = vpop.f32.mrb[0].mxu0
        %1179 = vmatprep.mubr.bf16.mxu0 0
        %1180 = vmatmul.mubr.bf16.gmra.mrb[0].mxu0 %v1065
        %v1181 = vpop.f32.mrb[0].mxu0
        %v1182 = vadd.f32 0.0, %v1181
        %v1183 = vpop.f32.mrb[0].mxu0
        %v1184 = vpop.f32.mrb[0].mxu0
        %v1185 = vadd.f32 0.0, %v1184
        %v1186 = vpop.f32.mrb[0].mxu0
        %1187 = vdwg.mxu0
        %1188 = vmax.xlane.f32.xlu0 %v1126
        %v1189 = vpop.xlane.xlu0 %1188
        %1190 = vmax.xlane.f32.xlu0 %v1129
        %v1191 = vpop.xlane.xlu0 %1190
        %1192 = vmax.xlane.f32.xlu0 %v1134
        %v1193 = vpop.xlane.xlu0 %1192
        %1194 = vmax.xlane.f32.xlu0 %v1137
        %v1195 = vpop.xlane.xlu0 %1194
        %1196 = vmax.xlane.f32.xlu0 %v1142
        %v1197 = vpop.xlane.xlu0 %1196
        %1198 = vmax.xlane.f32.xlu0 %v1145
        %v1199 = vpop.xlane.xlu0 %1198
        %1200 = vmax.xlane.f32.xlu0 %v1150
        %v1201 = vpop.xlane.xlu0 %1200
        %1202 = vmax.xlane.f32.xlu0 %v1153
        %v1203 = vpop.xlane.xlu0 %1202
        %1204 = vmax.xlane.f32.xlu0 %v1158
        %v1205 = vpop.xlane.xlu0 %1204
        %1206 = vmax.xlane.f32.xlu0 %v1161
        %v1207 = vpop.xlane.xlu0 %1206
        %1208 = vmax.xlane.f32.xlu0 %v1166
        %v1209 = vpop.xlane.xlu0 %1208
        %1210 = vmax.xlane.f32.xlu0 %v1169
        %v1211 = vpop.xlane.xlu0 %1210
        %1212 = vmax.xlane.f32.xlu0 %v1174
        %v1213 = vpop.xlane.xlu0 %1212
        %1214 = vmax.xlane.f32.xlu0 %v1177
        %v1215 = vpop.xlane.xlu0 %1214
        %1216 = vmax.xlane.f32.xlu0 %v1182
        %v1217 = vpop.xlane.xlu0 %1216
        %1218 = vmax.xlane.f32.xlu0 %v1185
        %v1219 = vpop.xlane.xlu0 %1218
        %v1220 = vsub.f32 %v1126, %v1189
        %v1221 = vsub.f32 %v1129, %v1191
        %v1222 = vsub.f32 %v1134, %v1193
        %v1223 = vsub.f32 %v1137, %v1195
        %v1224 = vsub.f32 %v1142, %v1197
        %v1225 = vsub.f32 %v1145, %v1199
        %v1226 = vsub.f32 %v1150, %v1201
        %v1227 = vsub.f32 %v1153, %v1203
        %v1228 = vsub.f32 %v1158, %v1205
        %v1229 = vsub.f32 %v1161, %v1207
        %v1230 = vsub.f32 %v1166, %v1209
        %v1231 = vsub.f32 %v1169, %v1211
        %v1232 = vsub.f32 %v1174, %v1213
        %v1233 = vsub.f32 %v1177, %v1215
        %v1234 = vsub.f32 %v1182, %v1217
        %v1235 = vsub.f32 %v1185, %v1219
        %v1236 = vmul.f32 %v1220, 1.442695
        %v1237 = vpow.pop %v1236
        %v1238 = vmul.f32 %v1221, 1.442695
        %v1239 = vpow.pop %v1238
        %v1240 = vmul.f32 %v1222, 1.442695
        %v1241 = vpow.pop %v1240
        %v1242 = vmul.f32 %v1223, 1.442695
        %v1243 = vpow.pop %v1242
        %v1244 = vmul.f32 %v1224, 1.442695
        %v1245 = vpow.pop %v1244
        %v1246 = vmul.f32 %v1225, 1.442695
        %v1247 = vpow.pop %v1246
        %v1248 = vmul.f32 %v1226, 1.442695
        %v1249 = vpow.pop %v1248
        %v1250 = vmul.f32 %v1227, 1.442695
        %v1251 = vpow.pop %v1250
        %v1252 = vmul.f32 %v1228, 1.442695
        %v1253 = vpow.pop %v1252
        %v1254 = vmul.f32 %v1229, 1.442695
        %v1255 = vpow.pop %v1254
        %v1256 = vmul.f32 %v1230, 1.442695
        %v1257 = vpow.pop %v1256
        %v1258 = vmul.f32 %v1231, 1.442695
        %v1259 = vpow.pop %v1258
        %v1260 = vmul.f32 %v1232, 1.442695
        %v1261 = vpow.pop %v1260
        %v1262 = vmul.f32 %v1233, 1.442695
        %v1263 = vpow.pop %v1262
        %v1264 = vmul.f32 %v1234, 1.442695
        %v1265 = vpow.pop %v1264
        %v1266 = vmul.f32 %v1235, 1.442695
        %v1267 = vpow.pop %v1266
        %1268 = vadd.xlane.f32.xlu0 %v1237
        %v1269 = vpop.xlane.xlu0 %1268
        %1270 = vadd.xlane.f32.xlu0 %v1239
        %v1271 = vpop.xlane.xlu0 %1270
        %1272 = vadd.xlane.f32.xlu0 %v1241
        %v1273 = vpop.xlane.xlu0 %1272
        %1274 = vadd.xlane.f32.xlu0 %v1243
        %v1275 = vpop.xlane.xlu0 %1274
        %1276 = vadd.xlane.f32.xlu0 %v1245
        %v1277 = vpop.xlane.xlu0 %1276
        %1278 = vadd.xlane.f32.xlu0 %v1247
        %v1279 = vpop.xlane.xlu0 %1278
        %1280 = vadd.xlane.f32.xlu0 %v1249
        %v1281 = vpop.xlane.xlu0 %1280
        %1282 = vadd.xlane.f32.xlu0 %v1251
        %v1283 = vpop.xlane.xlu0 %1282
        %1284 = vadd.xlane.f32.xlu0 %v1253
        %v1285 = vpop.xlane.xlu0 %1284
        %1286 = vadd.xlane.f32.xlu0 %v1255
        %v1287 = vpop.xlane.xlu0 %1286
        %1288 = vadd.xlane.f32.xlu0 %v1257
        %v1289 = vpop.xlane.xlu0 %1288
        %1290 = vadd.xlane.f32.xlu0 %v1259
        %v1291 = vpop.xlane.xlu0 %1290
        %1292 = vadd.xlane.f32.xlu0 %v1261
        %v1293 = vpop.xlane.xlu0 %1292
        %1294 = vadd.xlane.f32.xlu0 %v1263
        %v1295 = vpop.xlane.xlu0 %1294
        %1296 = vadd.xlane.f32.xlu0 %v1265
        %v1297 = vpop.xlane.xlu0 %1296
        %1298 = vadd.xlane.f32.xlu0 %v1267
        %v1299 = vpop.xlane.xlu0 %1298
        %v1300 = vrcp.pop %v1269
        %v1301 = vrcp.pop %v1271
        %v1302 = vrcp.pop %v1273
        %v1303 = vrcp.pop %v1275
        %v1304 = vrcp.pop %v1277
        %v1305 = vrcp.pop %v1279
        %v1306 = vrcp.pop %v1281
        %v1307 = vrcp.pop %v1283
        %v1308 = vrcp.pop %v1285
        %v1309 = vrcp.pop %v1287
        %v1310 = vrcp.pop %v1289
        %v1311 = vrcp.pop %v1291
        %v1312 = vrcp.pop %v1293
        %v1313 = vrcp.pop %v1295
        %v1314 = vrcp.pop %v1297
        %v1315 = vrcp.pop %v1299
        %v1316 = vmul.f32 %v1237, %v1300
        %v1317 = vmul.f32 %v1239, %v1301
        %v1318 = vmul.f32 %v1241, %v1302
        %v1319 = vmul.f32 %v1243, %v1303
        %v1320 = vmul.f32 %v1245, %v1304
        %v1321 = vmul.f32 %v1247, %v1305
        %v1322 = vmul.f32 %v1249, %v1306
        %v1323 = vmul.f32 %v1251, %v1307
        %v1324 = vmul.f32 %v1253, %v1308
        %v1325 = vmul.f32 %v1255, %v1309
        %v1326 = vmul.f32 %v1257, %v1310
        %v1327 = vmul.f32 %v1259, %v1311
        %v1328 = vmul.f32 %v1261, %v1312
        %v1329 = vmul.f32 %v1263, %v1313
        %v1330 = vmul.f32 %v1265, %v1314
        %v1331 = vmul.f32 %v1267, %v1315
        %v1332 = vpack.c.bf16 %v1317, %v1316
        %v1333 = vpack.c.bf16 %v1319, %v1318
        %v1334 = vpack.c.bf16 %v1321, %v1320
        %v1335 = vpack.c.bf16 %v1323, %v1322
        %v1336 = vpack.c.bf16 %v1325, %v1324
        %v1337 = vpack.c.bf16 %v1327, %v1326
        %v1338 = vpack.c.bf16 %v1329, %v1328
        %v1339 = vpack.c.bf16 %v1331, %v1330
        %1340 = vmatprep.subr.bf16.mxu0 0
        %1341 = vmatpush1.bf16.msra.mxu0 %v1034
        %1342 = vmatprep.subr.bf16.mxu0 0
        %1343 = vmatpush1.bf16.msra.mxu0 %v1035
        %1344 = vmatprep.subr.bf16.mxu0 0
        %1345 = vmatpush1.bf16.msra.mxu0 %v1036
        %1346 = vmatprep.subr.bf16.mxu0 0
        %1347 = vmatpush1.bf16.msra.mxu0 %v1037
        %1348 = vmatprep.subr.bf16.mxu0 0
        %1349 = vmatpush1.bf16.msra.mxu0 %v1038
        %1350 = vmatprep.subr.bf16.mxu0 0
        %1351 = vmatpush1.bf16.msra.mxu0 %v1039
        %1352 = vmatprep.subr.bf16.mxu0 0
        %1353 = vmatpush1.bf16.msra.mxu0 %v1040
        %1354 = vmatprep.subr.bf16.mxu0 0
        %1355 = vmatpush1.bf16.msra.mxu0 %v1041
        %1356 = vmatprep.subr.bf16.mxu0 0
        %1357 = vmatpush1.bf16.msra.mxu0 0
        %1358 = vmatprep.subr.bf16.mxu0 0
        %1359 = vmatpush1.bf16.msra.mxu0 0
        %1360 = vmatprep.subr.bf16.mxu0 0
        %1361 = vmatpush1.bf16.msra.mxu0 0
        %1362 = vmatprep.subr.bf16.mxu0 0
        %1363 = vmatpush1.bf16.msra.mxu0 0
        %1364 = vmatprep.subr.bf16.mxu0 0
        %1365 = vmatpush1.bf16.msra.mxu0 0
        %1366 = vmatprep.subr.bf16.mxu0 0
        %1367 = vmatpush1.bf16.msra.mxu0 0
        %1368 = vmatprep.subr.bf16.mxu0 0
        %1369 = vmatpush1.bf16.msra.mxu0 0
        %1370 = vmatprep.subr.bf16.mxu0 0
        %1371 = vmatpush1.bf16.msra.mxu0 0
        %1372 = vmatprep.mubr.bf16.mxu0 0
        %1373 = vmatmul.mubr.bf16.gmra.mrb[0].mxu0 %v1332
        %v1374 = vpop.f32.mrb[0].mxu0
        %v1375 = vadd.f32 0.0, %v1374
        %v1376 = vpop.f32.mrb[0].mxu0
        %v1377 = vpop.f32.mrb[0].mxu0
        %v1378 = vadd.f32 0.0, %v1377
        %v1379 = vpop.f32.mrb[0].mxu0
        %1380 = vmatprep.mubr.bf16.mxu0 0
        %1381 = vmatmul.mubr.bf16.gmra.mrb[0].mxu0 %v1333
        %v1382 = vpop.f32.mrb[0].mxu0
        %v1383 = vadd.f32 0.0, %v1382
        %v1384 = vpop.f32.mrb[0].mxu0
        %v1385 = vpop.f32.mrb[0].mxu0
        %v1386 = vadd.f32 0.0, %v1385
        %v1387 = vpop.f32.mrb[0].mxu0
        %1388 = vmatprep.mubr.bf16.mxu0 0
        %1389 = vmatmul.mubr.bf16.gmra.mrb[0].mxu0 %v1334
        %v1390 = vpop.f32.mrb[0].mxu0
        %v1391 = vadd.f32 0.0, %v1390
        %v1392 = vpop.f32.mrb[0].mxu0
        %v1393 = vpop.f32.mrb[0].mxu0
        %v1394 = vadd.f32 0.0, %v1393
        %v1395 = vpop.f32.mrb[0].mxu0
        %1396 = vmatprep.mubr.bf16.mxu0 0
        %1397 = vmatmul.mubr.bf16.gmra.mrb[0].mxu0 %v1335
        %v1398 = vpop.f32.mrb[0].mxu0
        %v1399 = vadd.f32 0.0, %v1398
        %v1400 = vpop.f32.mrb[0].mxu0
        %v1401 = vpop.f32.mrb[0].mxu0
        %v1402 = vadd.f32 0.0, %v1401
        %v1403 = vpop.f32.mrb[0].mxu0
        %1404 = vmatprep.mubr.bf16.mxu0 0
        %1405 = vmatmul.mubr.bf16.gmra.mrb[0].mxu0 %v1336
        %v1406 = vpop.f32.mrb[0].mxu0
        %v1407 = vadd.f32 0.0, %v1406
        %v1408 = vpop.f32.mrb[0].mxu0
        %v1409 = vpop.f32.mrb[0].mxu0
        %v1410 = vadd.f32 0.0, %v1409
        %v1411 = vpop.f32.mrb[0].mxu0
        %1412 = vmatprep.mubr.bf16.mxu0 0
        %1413 = vmatmul.mubr.bf16.gmra.mrb[0].mxu0 %v1337
        %v1414 = vpop.f32.mrb[0].mxu0
        %v1415 = vadd.f32 0.0, %v1414
        %v1416 = vpop.f32.mrb[0].mxu0
        %v1417 = vpop.f32.mrb[0].mxu0
        %v1418 = vadd.f32 0.0, %v1417
        %v1419 = vpop.f32.mrb[0].mxu0
        %1420 = vmatprep.mubr.bf16.mxu0 0
        %1421 = vmatmul.mubr.bf16.gmra.mrb[0].mxu0 %v1338
        %v1422 = vpop.f32.mrb[0].mxu0
        %v1423 = vadd.f32 0.0, %v1422
        %v1424 = vpop.f32.mrb[0].mxu0
        %v1425 = vpop.f32.mrb[0].mxu0
        %v1426 = vadd.f32 0.0, %v1425
        %v1427 = vpop.f32.mrb[0].mxu0
        %1428 = vmatprep.mubr.bf16.mxu0 0
        %1429 = vmatmul.mubr.bf16.gmra.mrb[0].mxu0 %v1339
        %v1430 = vpop.f32.mrb[0].mxu0
        %v1431 = vadd.f32 0.0, %v1430
        %v1432 = vpop.f32.mrb[0].mxu0
        %v1433 = vpop.f32.mrb[0].mxu0
        %v1434 = vadd.f32 0.0, %v1433
        %v1435 = vpop.f32.mrb[0].mxu0
        %1436 = vdwg.mxu0
        %1445 = vrot.lane.b32.xlu0 %v1018, 96
        %v1446 = vpop.permute.xlu0 %1445
        %1447 = vrot.lane.b32.xlu0 %v1019, 96
        %v1448 = vpop.permute.xlu0 %1447
        %1449 = vrot.lane.b32.xlu0 %v1020, 96
        %v1450 = vpop.permute.xlu0 %1449
        %1451 = vrot.lane.b32.xlu0 %v1021, 96
        %v1452 = vpop.permute.xlu0 %1451
        %1453 = vrot.lane.b32.xlu0 %v1022, 96
        %v1454 = vpop.permute.xlu0 %1453
        %1455 = vrot.lane.b32.xlu0 %v1023, 96
        %v1456 = vpop.permute.xlu0 %1455
        %1457 = vrot.lane.b32.xlu0 %v1024, 96
        %v1458 = vpop.permute.xlu0 %1457
        %1459 = vrot.lane.b32.xlu0 %v1025, 96
        %v1460 = vpop.permute.xlu0 %1459
        %1469 = vrot.lane.b32.xlu0 %v1026, 96
        %v1470 = vpop.permute.xlu0 %1469
        %1471 = vrot.lane.b32.xlu0 %v1027, 96
        %v1472 = vpop.permute.xlu0 %1471
        %1473 = vrot.lane.b32.xlu0 %v1028, 96
        %v1474 = vpop.permute.xlu0 %1473
        %1475 = vrot.lane.b32.xlu0 %v1029, 96
        %v1476 = vpop.permute.xlu0 %1475
        %1477 = vrot.lane.b32.xlu0 %v1030, 96
        %v1478 = vpop.permute.xlu0 %1477
        %1479 = vrot.lane.b32.xlu0 %v1031, 96
        %v1480 = vpop.permute.xlu0 %1479
        %1481 = vrot.lane.b32.xlu0 %v1032, 96
        %v1482 = vpop.permute.xlu0 %1481
        %1483 = vrot.lane.b32.xlu0 %v1033, 96
        %v1484 = vpop.permute.xlu0 %1483
        %v1486 = vsel %vm1042, %v1446, 0
        %v1489 = vsel %vm1042, %v1448, 0
        %v1492 = vsel %vm1042, %v1450, 0
        %v1495 = vsel %vm1042, %v1452, 0
        %v1498 = vsel %vm1042, %v1454, 0
        %v1501 = vsel %vm1042, %v1456, 0
        %v1504 = vsel %vm1042, %v1458, 0
        %v1507 = vsel %vm1042, %v1460, 0
        %v1510 = vsel %vm1042, %v1470, 0
        %v1513 = vsel %vm1042, %v1472, 0
        %v1516 = vsel %vm1042, %v1474, 0
        %v1519 = vsel %vm1042, %v1476, 0
        %v1522 = vsel %vm1042, %v1478, 0
        %v1525 = vsel %vm1042, %v1480, 0
        %v1528 = vsel %vm1042, %v1482, 0
        %v1531 = vsel %vm1042, %v1484, 0
        %1533 = vmatprep.subr.bf16.mxu0 0
        %1534 = vmatpush1.bf16.xpose.msra.mxu0 %v1510
        %1535 = vmatprep.subr.bf16.mxu0 0
        %1536 = vmatpush1.bf16.xpose.msra.mxu0 %v1513
        %1537 = vmatprep.subr.bf16.mxu0 0
        %1538 = vmatpush1.bf16.xpose.msra.mxu0 %v1516
        %1539 = vmatprep.subr.bf16.mxu0 0
        %1540 = vmatpush1.bf16.xpose.msra.mxu0 %v1519
        %1541 = vmatprep.subr.bf16.mxu0 0
        %1542 = vmatpush1.bf16.xpose.msra.mxu0 %v1522
        %1543 = vmatprep.subr.bf16.mxu0 0
        %1544 = vmatpush1.bf16.xpose.msra.mxu0 %v1525
        %1545 = vmatprep.subr.bf16.mxu0 0
        %1546 = vmatpush1.bf16.xpose.msra.mxu0 %v1528
        %1547 = vmatprep.subr.bf16.mxu0 0
        %1548 = vmatpush1.bf16.xpose.msra.mxu0 %v1531
        %1549 = vmatprep.subr.bf16.mxu0 0
        %1550 = vmatpush1.bf16.xpose.msra.mxu0 0
        %1551 = vmatprep.subr.bf16.mxu0 0
        %1552 = vmatpush1.bf16.xpose.msra.mxu0 0
        %1553 = vmatprep.subr.bf16.mxu0 0
        %1554 = vmatpush1.bf16.xpose.msra.mxu0 0
        %1555 = vmatprep.subr.bf16.mxu0 0
        %1556 = vmatpush1.bf16.xpose.msra.mxu0 0
        %1557 = vmatprep.subr.bf16.mxu0 0
        %1558 = vmatpush1.bf16.xpose.msra.mxu0 0
        %1559 = vmatprep.subr.bf16.mxu0 0
        %1560 = vmatpush1.bf16.xpose.msra.mxu0 0
        %1561 = vmatprep.subr.bf16.mxu0 0
        %1562 = vmatpush1.bf16.xpose.msra.mxu0 0
        %1563 = vmatprep.subr.bf16.mxu0 0
        %1564 = vmatpush1.bf16.xpose.msra.mxu0 0
        %1565 = vmatprep.mubr.bf16.mxu0 0
        %1566 = vmatmul.mubr.bf16.gmra.mrb[0].mxu0 %v1486
        %v1567 = vpop.f32.mrb[0].mxu0
        %v1568 = vadd.f32 0.0, %v1567
        %v1569 = vpop.f32.mrb[0].mxu0
        %v1570 = vpop.f32.mrb[0].mxu0
        %v1571 = vadd.f32 0.0, %v1570
        %v1572 = vpop.f32.mrb[0].mxu0
        %1573 = vmatprep.mubr.bf16.mxu0 0
        %1574 = vmatmul.mubr.bf16.gmra.mrb[0].mxu0 %v1489
        %v1575 = vpop.f32.mrb[0].mxu0
        %v1576 = vadd.f32 0.0, %v1575
        %v1577 = vpop.f32.mrb[0].mxu0
        %v1578 = vpop.f32.mrb[0].mxu0
        %v1579 = vadd.f32 0.0, %v1578
        %v1580 = vpop.f32.mrb[0].mxu0
        %1581 = vmatprep.mubr.bf16.mxu0 0
        %1582 = vmatmul.mubr.bf16.gmra.mrb[0].mxu0 %v1492
        %v1583 = vpop.f32.mrb[0].mxu0
        %v1584 = vadd.f32 0.0, %v1583
        %v1585 = vpop.f32.mrb[0].mxu0
        %v1586 = vpop.f32.mrb[0].mxu0
        %v1587 = vadd.f32 0.0, %v1586
        %v1588 = vpop.f32.mrb[0].mxu0
        %1589 = vmatprep.mubr.bf16.mxu0 0
        %1590 = vmatmul.mubr.bf16.gmra.mrb[0].mxu0 %v1495
        %v1591 = vpop.f32.mrb[0].mxu0
        %v1592 = vadd.f32 0.0, %v1591
        %v1593 = vpop.f32.mrb[0].mxu0
        %v1594 = vpop.f32.mrb[0].mxu0
        %v1595 = vadd.f32 0.0, %v1594
        %v1596 = vpop.f32.mrb[0].mxu0
        %1597 = vmatprep.mubr.bf16.mxu0 0
        %1598 = vmatmul.mubr.bf16.gmra.mrb[0].mxu0 %v1498
        %v1599 = vpop.f32.mrb[0].mxu0
        %v1600 = vadd.f32 0.0, %v1599
        %v1601 = vpop.f32.mrb[0].mxu0
        %v1602 = vpop.f32.mrb[0].mxu0
        %v1603 = vadd.f32 0.0, %v1602
        %v1604 = vpop.f32.mrb[0].mxu0
        %1605 = vmatprep.mubr.bf16.mxu0 0
        %1606 = vmatmul.mubr.bf16.gmra.mrb[0].mxu0 %v1501
        %v1607 = vpop.f32.mrb[0].mxu0
        %v1608 = vadd.f32 0.0, %v1607
        %v1609 = vpop.f32.mrb[0].mxu0
        %v1610 = vpop.f32.mrb[0].mxu0
        %v1611 = vadd.f32 0.0, %v1610
        %v1612 = vpop.f32.mrb[0].mxu0
        %1613 = vmatprep.mubr.bf16.mxu0 0
        %1614 = vmatmul.mubr.bf16.gmra.mrb[0].mxu0 %v1504
        %v1615 = vpop.f32.mrb[0].mxu0
        %v1616 = vadd.f32 0.0, %v1615
        %v1617 = vpop.f32.mrb[0].mxu0
        %v1618 = vpop.f32.mrb[0].mxu0
        %v1619 = vadd.f32 0.0, %v1618
        %v1620 = vpop.f32.mrb[0].mxu0
        %1621 = vmatprep.mubr.bf16.mxu0 0
        %1622 = vmatmul.mubr.bf16.gmra.mrb[0].mxu0 %v1507
        %v1623 = vpop.f32.mrb[0].mxu0
        %v1624 = vadd.f32 0.0, %v1623
        %v1625 = vpop.f32.mrb[0].mxu0
        %v1626 = vpop.f32.mrb[0].mxu0
        %v1627 = vadd.f32 0.0, %v1626
        %v1628 = vpop.f32.mrb[0].mxu0
        %1629 = vdwg.mxu0
        %1630 = vmax.xlane.f32.xlu0 %v1568
        %v1631 = vpop.xlane.xlu0 %1630
        %1632 = vmax.xlane.f32.xlu0 %v1571
        %v1633 = vpop.xlane.xlu0 %1632
        %1634 = vmax.xlane.f32.xlu0 %v1576
        %v1635 = vpop.xlane.xlu0 %1634
        %1636 = vmax.xlane.f32.xlu0 %v1579
        %v1637 = vpop.xlane.xlu0 %1636
        %1638 = vmax.xlane.f32.xlu0 %v1584
        %v1639 = vpop.xlane.xlu0 %1638
        %1640 = vmax.xlane.f32.xlu0 %v1587
        %v1641 = vpop.xlane.xlu0 %1640
        %1642 = vmax.xlane.f32.xlu0 %v1592
        %v1643 = vpop.xlane.xlu0 %1642
        %1644 = vmax.xlane.f32.xlu0 %v1595
        %v1645 = vpop.xlane.xlu0 %1644
        %1646 = vmax.xlane.f32.xlu0 %v1600
        %v1647 = vpop.xlane.xlu0 %1646
        %1648 = vmax.xlane.f32.xlu0 %v1603
        %v1649 = vpop.xlane.xlu0 %1648
        %1650 = vmax.xlane.f32.xlu0 %v1608
        %v1651 = vpop.xlane.xlu0 %1650
        %1652 = vmax.xlane.f32.xlu0 %v1611
        %v1653 = vpop.xlane.xlu0 %1652
        %1654 = vmax.xlane.f32.xlu0 %v1616
        %v1655 = vpop.xlane.xlu0 %1654
        %1656 = vmax.xlane.f32.xlu0 %v1619
        %v1657 = vpop.xlane.xlu0 %1656
        %1658 = vmax.xlane.f32.xlu0 %v1624
        %v1659 = vpop.xlane.xlu0 %1658
        %1660 = vmax.xlane.f32.xlu0 %v1627
        %v1661 = vpop.xlane.xlu0 %1660
        %v1662 = vsub.f32 %v1568, %v1631
        %v1663 = vsub.f32 %v1571, %v1633
        %v1664 = vsub.f32 %v1576, %v1635
        %v1665 = vsub.f32 %v1579, %v1637
        %v1666 = vsub.f32 %v1584, %v1639
        %v1667 = vsub.f32 %v1587, %v1641
        %v1668 = vsub.f32 %v1592, %v1643
        %v1669 = vsub.f32 %v1595, %v1645
        %v1670 = vsub.f32 %v1600, %v1647
        %v1671 = vsub.f32 %v1603, %v1649
        %v1672 = vsub.f32 %v1608, %v1651
        %v1673 = vsub.f32 %v1611, %v1653
        %v1674 = vsub.f32 %v1616, %v1655
        %v1675 = vsub.f32 %v1619, %v1657
        %v1676 = vsub.f32 %v1624, %v1659
        %v1677 = vsub.f32 %v1627, %v1661
        %v1678 = vmul.f32 %v1662, 1.442695
        %v1679 = vpow.pop %v1678
        %v1680 = vmul.f32 %v1663, 1.442695
        %v1681 = vpow.pop %v1680
        %v1682 = vmul.f32 %v1664, 1.442695
        %v1683 = vpow.pop %v1682
        %v1684 = vmul.f32 %v1665, 1.442695
        %v1685 = vpow.pop %v1684
        %v1686 = vmul.f32 %v1666, 1.442695
        %v1687 = vpow.pop %v1686
        %v1688 = vmul.f32 %v1667, 1.442695
        %v1689 = vpow.pop %v1688
        %v1690 = vmul.f32 %v1668, 1.442695
        %v1691 = vpow.pop %v1690
        %v1692 = vmul.f32 %v1669, 1.442695
        %v1693 = vpow.pop %v1692
        %v1694 = vmul.f32 %v1670, 1.442695
        %v1695 = vpow.pop %v1694
        %v1696 = vmul.f32 %v1671, 1.442695
        %v1697 = vpow.pop %v1696
        %v1698 = vmul.f32 %v1672, 1.442695
        %v1699 = vpow.pop %v1698
        %v1700 = vmul.f32 %v1673, 1.442695
        %v1701 = vpow.pop %v1700
        %v1702 = vmul.f32 %v1674, 1.442695
        %v1703 = vpow.pop %v1702
        %v1704 = vmul.f32 %v1675, 1.442695
        %v1705 = vpow.pop %v1704
        %v1706 = vmul.f32 %v1676, 1.442695
        %v1707 = vpow.pop %v1706
        %v1708 = vmul.f32 %v1677, 1.442695
        %v1709 = vpow.pop %v1708
        %1710 = vadd.xlane.f32.xlu0 %v1679
        %v1711 = vpop.xlane.xlu0 %1710
        %1712 = vadd.xlane.f32.xlu0 %v1681
        %v1713 = vpop.xlane.xlu0 %1712
        %1714 = vadd.xlane.f32.xlu0 %v1683
        %v1715 = vpop.xlane.xlu0 %1714
        %1716 = vadd.xlane.f32.xlu0 %v1685
        %v1717 = vpop.xlane.xlu0 %1716
        %1718 = vadd.xlane.f32.xlu0 %v1687
        %v1719 = vpop.xlane.xlu0 %1718
        %1720 = vadd.xlane.f32.xlu0 %v1689
        %v1721 = vpop.xlane.xlu0 %1720
        %1722 = vadd.xlane.f32.xlu0 %v1691
        %v1723 = vpop.xlane.xlu0 %1722
        %1724 = vadd.xlane.f32.xlu0 %v1693
        %v1725 = vpop.xlane.xlu0 %1724
        %1726 = vadd.xlane.f32.xlu0 %v1695
        %v1727 = vpop.xlane.xlu0 %1726
        %1728 = vadd.xlane.f32.xlu0 %v1697
        %v1729 = vpop.xlane.xlu0 %1728
        %1730 = vadd.xlane.f32.xlu0 %v1699
        %v1731 = vpop.xlane.xlu0 %1730
        %1732 = vadd.xlane.f32.xlu0 %v1701
        %v1733 = vpop.xlane.xlu0 %1732
        %1734 = vadd.xlane.f32.xlu0 %v1703
        %v1735 = vpop.xlane.xlu0 %1734
        %1736 = vadd.xlane.f32.xlu0 %v1705
        %v1737 = vpop.xlane.xlu0 %1736
        %1738 = vadd.xlane.f32.xlu0 %v1707
        %v1739 = vpop.xlane.xlu0 %1738
        %1740 = vadd.xlane.f32.xlu0 %v1709
        %v1741 = vpop.xlane.xlu0 %1740
        %v1742 = vrcp.pop %v1711
        %v1743 = vrcp.pop %v1713
        %v1744 = vrcp.pop %v1715
        %v1745 = vrcp.pop %v1717
        %v1746 = vrcp.pop %v1719
        %v1747 = vrcp.pop %v1721
        %v1748 = vrcp.pop %v1723
        %v1749 = vrcp.pop %v1725
        %v1750 = vrcp.pop %v1727
        %v1751 = vrcp.pop %v1729
        %v1752 = vrcp.pop %v1731
        %v1753 = vrcp.pop %v1733
        %v1754 = vrcp.pop %v1735
        %v1755 = vrcp.pop %v1737
        %v1756 = vrcp.pop %v1739
        %v1757 = vrcp.pop %v1741
        %v1758 = vmul.f32 %v1679, %v1742
        %v1759 = vmul.f32 %v1681, %v1743
        %v1760 = vmul.f32 %v1683, %v1744
        %v1761 = vmul.f32 %v1685, %v1745
        %v1762 = vmul.f32 %v1687, %v1746
        %v1763 = vmul.f32 %v1689, %v1747
        %v1764 = vmul.f32 %v1691, %v1748
        %v1765 = vmul.f32 %v1693, %v1749
        %v1766 = vmul.f32 %v1695, %v1750
        %v1767 = vmul.f32 %v1697, %v1751
        %v1768 = vmul.f32 %v1699, %v1752
        %v1769 = vmul.f32 %v1701, %v1753
        %v1770 = vmul.f32 %v1703, %v1754
        %v1771 = vmul.f32 %v1705, %v1755
        %v1772 = vmul.f32 %v1707, %v1756
        %v1773 = vmul.f32 %v1709, %v1757
        %v1774 = vpack.c.bf16 %v1759, %v1758
        %v1775 = vpack.c.bf16 %v1761, %v1760
        %v1776 = vpack.c.bf16 %v1763, %v1762
        %v1777 = vpack.c.bf16 %v1765, %v1764
        %v1778 = vpack.c.bf16 %v1767, %v1766
        %v1779 = vpack.c.bf16 %v1769, %v1768
        %v1780 = vpack.c.bf16 %v1771, %v1770
        %v1781 = vpack.c.bf16 %v1773, %v1772
        %1790 = vrot.lane.b32.xlu0 %v1034, 96
        %v1791 = vpop.permute.xlu0 %1790
        %1792 = vrot.lane.b32.xlu0 %v1035, 96
        %v1793 = vpop.permute.xlu0 %1792
        %1794 = vrot.lane.b32.xlu0 %v1036, 96
        %v1795 = vpop.permute.xlu0 %1794
        %1796 = vrot.lane.b32.xlu0 %v1037, 96
        %v1797 = vpop.permute.xlu0 %1796
        %1798 = vrot.lane.b32.xlu0 %v1038, 96
        %v1799 = vpop.permute.xlu0 %1798
        %1800 = vrot.lane.b32.xlu0 %v1039, 96
        %v1801 = vpop.permute.xlu0 %1800
        %1802 = vrot.lane.b32.xlu0 %v1040, 96
        %v1803 = vpop.permute.xlu0 %1802
        %1804 = vrot.lane.b32.xlu0 %v1041, 96
        %v1805 = vpop.permute.xlu0 %1804
        %1814 = vmatprep.subr.bf16.mxu0 0
        %1815 = vmatpush1.bf16.msra.mxu0 %v1791
        %1816 = vmatprep.subr.bf16.mxu0 0
        %1817 = vmatpush1.bf16.msra.mxu0 %v1793
        %1818 = vmatprep.subr.bf16.mxu0 0
        %1819 = vmatpush1.bf16.msra.mxu0 %v1795
        %1820 = vmatprep.subr.bf16.mxu0 0
        %1821 = vmatpush1.bf16.msra.mxu0 %v1797
        %1822 = vmatprep.subr.bf16.mxu0 0
        %1823 = vmatpush1.bf16.msra.mxu0 %v1799
        %1824 = vmatprep.subr.bf16.mxu0 0
        %1825 = vmatpush1.bf16.msra.mxu0 %v1801
        %1826 = vmatprep.subr.bf16.mxu0 0
        %1827 = vmatpush1.bf16.msra.mxu0 %v1803
        %1828 = vmatprep.subr.bf16.mxu0 0
        %1829 = vmatpush1.bf16.msra.mxu0 %v1805
        %1830 = vmatprep.subr.bf16.mxu0 0
        %1831 = vmatpush1.bf16.msra.mxu0 0
        %1832 = vmatprep.subr.bf16.mxu0 0
        %1833 = vmatpush1.bf16.msra.mxu0 0
        %1834 = vmatprep.subr.bf16.mxu0 0
        %1835 = vmatpush1.bf16.msra.mxu0 0
        %1836 = vmatprep.subr.bf16.mxu0 0
        %1837 = vmatpush1.bf16.msra.mxu0 0
        %1838 = vmatprep.subr.bf16.mxu0 0
        %1839 = vmatpush1.bf16.msra.mxu0 0
        %1840 = vmatprep.subr.bf16.mxu0 0
        %1841 = vmatpush1.bf16.msra.mxu0 0
        %1842 = vmatprep.subr.bf16.mxu0 0
        %1843 = vmatpush1.bf16.msra.mxu0 0
        %1844 = vmatprep.subr.bf16.mxu0 0
        %1845 = vmatpush1.bf16.msra.mxu0 0
        %1846 = vmatprep.mubr.bf16.mxu0 0
        %1847 = vmatmul.mubr.bf16.gmra.mrb[0].mxu0 %v1774
        %v1848 = vpop.f32.mrb[0].mxu0
        %v1849 = vadd.f32 0.0, %v1848
        %v1850 = vpop.f32.mrb[0].mxu0
        %v1851 = vpop.f32.mrb[0].mxu0
        %v1852 = vadd.f32 0.0, %v1851
        %v1853 = vpop.f32.mrb[0].mxu0
        %1854 = vmatprep.mubr.bf16.mxu0 0
        %1855 = vmatmul.mubr.bf16.gmra.mrb[0].mxu0 %v1775
        %v1856 = vpop.f32.mrb[0].mxu0
        %v1857 = vadd.f32 0.0, %v1856
        %v1858 = vpop.f32.mrb[0].mxu0
        %v1859 = vpop.f32.mrb[0].mxu0
        %v1860 = vadd.f32 0.0, %v1859
        %v1861 = vpop.f32.mrb[0].mxu0
        %1862 = vmatprep.mubr.bf16.mxu0 0
        %1863 = vmatmul.mubr.bf16.gmra.mrb[0].mxu0 %v1776
        %v1864 = vpop.f32.mrb[0].mxu0
        %v1865 = vadd.f32 0.0, %v1864
        %v1866 = vpop.f32.mrb[0].mxu0
        %v1867 = vpop.f32.mrb[0].mxu0
        %v1868 = vadd.f32 0.0, %v1867
        %v1869 = vpop.f32.mrb[0].mxu0
        %1870 = vmatprep.mubr.bf16.mxu0 0
        %1871 = vmatmul.mubr.bf16.gmra.mrb[0].mxu0 %v1777
        %v1872 = vpop.f32.mrb[0].mxu0
        %v1873 = vadd.f32 0.0, %v1872
        %v1874 = vpop.f32.mrb[0].mxu0
        %v1875 = vpop.f32.mrb[0].mxu0
        %v1876 = vadd.f32 0.0, %v1875
        %v1877 = vpop.f32.mrb[0].mxu0
        %1878 = vmatprep.mubr.bf16.mxu0 0
        %1879 = vmatmul.mubr.bf16.gmra.mrb[0].mxu0 %v1778
        %v1880 = vpop.f32.mrb[0].mxu0
        %v1881 = vadd.f32 0.0, %v1880
        %v1882 = vpop.f32.mrb[0].mxu0
        %v1883 = vpop.f32.mrb[0].mxu0
        %v1884 = vadd.f32 0.0, %v1883
        %v1885 = vpop.f32.mrb[0].mxu0
        %1886 = vmatprep.mubr.bf16.mxu0 0
        %1887 = vmatmul.mubr.bf16.gmra.mrb[0].mxu0 %v1779
        %v1888 = vpop.f32.mrb[0].mxu0
        %v1889 = vadd.f32 0.0, %v1888
        %v1890 = vpop.f32.mrb[0].mxu0
        %v1891 = vpop.f32.mrb[0].mxu0
        %v1892 = vadd.f32 0.0, %v1891
        %v1893 = vpop.f32.mrb[0].mxu0
        %1894 = vmatprep.mubr.bf16.mxu0 0
        %1895 = vmatmul.mubr.bf16.gmra.mrb[0].mxu0 %v1780
        %v1896 = vpop.f32.mrb[0].mxu0
        %v1897 = vadd.f32 0.0, %v1896
        %v1898 = vpop.f32.mrb[0].mxu0
        %v1899 = vpop.f32.mrb[0].mxu0
        %v1900 = vadd.f32 0.0, %v1899
        %v1901 = vpop.f32.mrb[0].mxu0
        %1902 = vmatprep.mubr.bf16.mxu0 0
        %1903 = vmatmul.mubr.bf16.gmra.mrb[0].mxu0 %v1781
        %v1904 = vpop.f32.mrb[0].mxu0
        %v1905 = vadd.f32 0.0, %v1904
        %v1906 = vpop.f32.mrb[0].mxu0
        %v1907 = vpop.f32.mrb[0].mxu0
        %v1908 = vadd.f32 0.0, %v1907
        %v1909 = vpop.f32.mrb[0].mxu0
        %1910 = vdwg.mxu0
        %1911 = vrot.lane.b32.xlu0 %v1018, 64
        %v1912 = vpop.permute.xlu0 %1911
        %1913 = vrot.lane.b32.xlu0 %v1019, 64
        %v1914 = vpop.permute.xlu0 %1913
        %1915 = vrot.lane.b32.xlu0 %v1020, 64
        %v1916 = vpop.permute.xlu0 %1915
        %1917 = vrot.lane.b32.xlu0 %v1021, 64
        %v1918 = vpop.permute.xlu0 %1917
        %1919 = vrot.lane.b32.xlu0 %v1022, 64
        %v1920 = vpop.permute.xlu0 %1919
        %1921 = vrot.lane.b32.xlu0 %v1023, 64
        %v1922 = vpop.permute.xlu0 %1921
        %1923 = vrot.lane.b32.xlu0 %v1024, 64
        %v1924 = vpop.permute.xlu0 %1923
        %1925 = vrot.lane.b32.xlu0 %v1025, 64
        %v1926 = vpop.permute.xlu0 %1925
        %1927 = vrot.lane.b32.xlu0 %v1026, 64
        %v1928 = vpop.permute.xlu0 %1927
        %1929 = vrot.lane.b32.xlu0 %v1027, 64
        %v1930 = vpop.permute.xlu0 %1929
        %1931 = vrot.lane.b32.xlu0 %v1028, 64
        %v1932 = vpop.permute.xlu0 %1931
        %1933 = vrot.lane.b32.xlu0 %v1029, 64
        %v1934 = vpop.permute.xlu0 %1933
        %1935 = vrot.lane.b32.xlu0 %v1030, 64
        %v1936 = vpop.permute.xlu0 %1935
        %1937 = vrot.lane.b32.xlu0 %v1031, 64
        %v1938 = vpop.permute.xlu0 %1937
        %1939 = vrot.lane.b32.xlu0 %v1032, 64
        %v1940 = vpop.permute.xlu0 %1939
        %1941 = vrot.lane.b32.xlu0 %v1033, 64
        %v1942 = vpop.permute.xlu0 %1941
        %v1944 = vsel %vm1042, %v1912, 0
        %v1947 = vsel %vm1042, %v1914, 0
        %v1950 = vsel %vm1042, %v1916, 0
        %v1953 = vsel %vm1042, %v1918, 0
        %v1956 = vsel %vm1042, %v1920, 0
        %v1959 = vsel %vm1042, %v1922, 0
        %v1962 = vsel %vm1042, %v1924, 0
        %v1965 = vsel %vm1042, %v1926, 0
        %v1968 = vsel %vm1042, %v1928, 0
        %v1971 = vsel %vm1042, %v1930, 0
        %v1974 = vsel %vm1042, %v1932, 0
        %v1977 = vsel %vm1042, %v1934, 0
        %v1980 = vsel %vm1042, %v1936, 0
        %v1983 = vsel %vm1042, %v1938, 0
        %v1986 = vsel %vm1042, %v1940, 0
        %v1989 = vsel %vm1042, %v1942, 0
        %1991 = vmatprep.subr.bf16.mxu0 0
        %1992 = vmatpush1.bf16.xpose.msra.mxu0 %v1968
        %1993 = vmatprep.subr.bf16.mxu0 0
        %1994 = vmatpush1.bf16.xpose.msra.mxu0 %v1971
        %1995 = vmatprep.subr.bf16.mxu0 0
        %1996 = vmatpush1.bf16.xpose.msra.mxu0 %v1974
        %1997 = vmatprep.subr.bf16.mxu0 0
        %1998 = vmatpush1.bf16.xpose.msra.mxu0 %v1977
        %1999 = vmatprep.subr.bf16.mxu0 0
        %2000 = vmatpush1.bf16.xpose.msra.mxu0 %v1980
        %2001 = vmatprep.subr.bf16.mxu0 0
        %2002 = vmatpush1.bf16.xpose.msra.mxu0 %v1983
        %2003 = vmatprep.subr.bf16.mxu0 0
        %2004 = vmatpush1.bf16.xpose.msra.mxu0 %v1986
        %2005 = vmatprep.subr.bf16.mxu0 0
        %2006 = vmatpush1.bf16.xpose.msra.mxu0 %v1989
        %2007 = vmatprep.subr.bf16.mxu0 0
        %2008 = vmatpush1.bf16.xpose.msra.mxu0 0
        %2009 = vmatprep.subr.bf16.mxu0 0
        %2010 = vmatpush1.bf16.xpose.msra.mxu0 0
        %2011 = vmatprep.subr.bf16.mxu0 0
        %2012 = vmatpush1.bf16.xpose.msra.mxu0 0
        %2013 = vmatprep.subr.bf16.mxu0 0
        %2014 = vmatpush1.bf16.xpose.msra.mxu0 0
        %2015 = vmatprep.subr.bf16.mxu0 0
        %2016 = vmatpush1.bf16.xpose.msra.mxu0 0
        %2017 = vmatprep.subr.bf16.mxu0 0
        %2018 = vmatpush1.bf16.xpose.msra.mxu0 0
        %2019 = vmatprep.subr.bf16.mxu0 0
        %2020 = vmatpush1.bf16.xpose.msra.mxu0 0
        %2021 = vmatprep.subr.bf16.mxu0 0
        %2022 = vmatpush1.bf16.xpose.msra.mxu0 0
        %2023 = vmatprep.mubr.bf16.mxu0 0
        %2024 = vmatmul.mubr.bf16.gmra.mrb[0].mxu0 %v1944
        %v2025 = vpop.f32.mrb[0].mxu0
        %v2026 = vadd.f32 0.0, %v2025
        %v2027 = vpop.f32.mrb[0].mxu0
        %v2028 = vpop.f32.mrb[0].mxu0
        %v2029 = vadd.f32 0.0, %v2028
        %v2030 = vpop.f32.mrb[0].mxu0
        %2031 = vmatprep.mubr.bf16.mxu0 0
        %2032 = vmatmul.mubr.bf16.gmra.mrb[0].mxu0 %v1947
        %v2033 = vpop.f32.mrb[0].mxu0
        %v2034 = vadd.f32 0.0, %v2033
        %v2035 = vpop.f32.mrb[0].mxu0
        %v2036 = vpop.f32.mrb[0].mxu0
        %v2037 = vadd.f32 0.0, %v2036
        %v2038 = vpop.f32.mrb[0].mxu0
        %2039 = vmatprep.mubr.bf16.mxu0 0
        %2040 = vmatmul.mubr.bf16.gmra.mrb[0].mxu0 %v1950
        %v2041 = vpop.f32.mrb[0].mxu0
        %v2042 = vadd.f32 0.0, %v2041
        %v2043 = vpop.f32.mrb[0].mxu0
        %v2044 = vpop.f32.mrb[0].mxu0
        %v2045 = vadd.f32 0.0, %v2044
        %v2046 = vpop.f32.mrb[0].mxu0
        %2047 = vmatprep.mubr.bf16.mxu0 0
        %2048 = vmatmul.mubr.bf16.gmra.mrb[0].mxu0 %v1953
        %v2049 = vpop.f32.mrb[0].mxu0
        %v2050 = vadd.f32 0.0, %v2049
        %v2051 = vpop.f32.mrb[0].mxu0
        %v2052 = vpop.f32.mrb[0].mxu0
        %v2053 = vadd.f32 0.0, %v2052
        %v2054 = vpop.f32.mrb[0].mxu0
        %2055 = vmatprep.mubr.bf16.mxu0 0
        %2056 = vmatmul.mubr.bf16.gmra.mrb[0].mxu0 %v1956
        %v2057 = vpop.f32.mrb[0].mxu0
        %v2058 = vadd.f32 0.0, %v2057
        %v2059 = vpop.f32.mrb[0].mxu0
        %v2060 = vpop.f32.mrb[0].mxu0
        %v2061 = vadd.f32 0.0, %v2060
        %v2062 = vpop.f32.mrb[0].mxu0
        %2063 = vmatprep.mubr.bf16.mxu0 0
        %2064 = vmatmul.mubr.bf16.gmra.mrb[0].mxu0 %v1959
        %v2065 = vpop.f32.mrb[0].mxu0
        %v2066 = vadd.f32 0.0, %v2065
        %v2067 = vpop.f32.mrb[0].mxu0
        %v2068 = vpop.f32.mrb[0].mxu0
        %v2069 = vadd.f32 0.0, %v2068
        %v2070 = vpop.f32.mrb[0].mxu0
        %2071 = vmatprep.mubr.bf16.mxu0 0
        %2072 = vmatmul.mubr.bf16.gmra.mrb[0].mxu0 %v1962
        %v2073 = vpop.f32.mrb[0].mxu0
        %v2074 = vadd.f32 0.0, %v2073
        %v2075 = vpop.f32.mrb[0].mxu0
        %v2076 = vpop.f32.mrb[0].mxu0
        %v2077 = vadd.f32 0.0, %v2076
        %v2078 = vpop.f32.mrb[0].mxu0
        %2079 = vmatprep.mubr.bf16.mxu0 0
        %2080 = vmatmul.mubr.bf16.gmra.mrb[0].mxu0 %v1965
        %v2081 = vpop.f32.mrb[0].mxu0
        %v2082 = vadd.f32 0.0, %v2081
        %v2083 = vpop.f32.mrb[0].mxu0
        %v2084 = vpop.f32.mrb[0].mxu0
        %v2085 = vadd.f32 0.0, %v2084
        %v2086 = vpop.f32.mrb[0].mxu0
        %2087 = vdwg.mxu0
        %2088 = vmax.xlane.f32.xlu0 %v2026
        %v2089 = vpop.xlane.xlu0 %2088
        %2090 = vmax.xlane.f32.xlu0 %v2029
        %v2091 = vpop.xlane.xlu0 %2090
        %2092 = vmax.xlane.f32.xlu0 %v2034
        %v2093 = vpop.xlane.xlu0 %2092
        %2094 = vmax.xlane.f32.xlu0 %v2037
        %v2095 = vpop.xlane.xlu0 %2094
        %2096 = vmax.xlane.f32.xlu0 %v2042
        %v2097 = vpop.xlane.xlu0 %2096
        %2098 = vmax.xlane.f32.xlu0 %v2045
        %v2099 = vpop.xlane.xlu0 %2098
        %2100 = vmax.xlane.f32.xlu0 %v2050
        %v2101 = vpop.xlane.xlu0 %2100
        %2102 = vmax.xlane.f32.xlu0 %v2053
        %v2103 = vpop.xlane.xlu0 %2102
        %2104 = vmax.xlane.f32.xlu0 %v2058
        %v2105 = vpop.xlane.xlu0 %2104
        %2106 = vmax.xlane.f32.xlu0 %v2061
        %v2107 = vpop.xlane.xlu0 %2106
        %2108 = vmax.xlane.f32.xlu0 %v2066
        %v2109 = vpop.xlane.xlu0 %2108
        %2110 = vmax.xlane.f32.xlu0 %v2069
        %v2111 = vpop.xlane.xlu0 %2110
        %2112 = vmax.xlane.f32.xlu0 %v2074
        %v2113 = vpop.xlane.xlu0 %2112
        %2114 = vmax.xlane.f32.xlu0 %v2077
        %v2115 = vpop.xlane.xlu0 %2114
        %2116 = vmax.xlane.f32.xlu0 %v2082
        %v2117 = vpop.xlane.xlu0 %2116
        %2118 = vmax.xlane.f32.xlu0 %v2085
        %v2119 = vpop.xlane.xlu0 %2118
        %v2120 = vsub.f32 %v2026, %v2089
        %v2121 = vsub.f32 %v2029, %v2091
        %v2122 = vsub.f32 %v2034, %v2093
        %v2123 = vsub.f32 %v2037, %v2095
        %v2124 = vsub.f32 %v2042, %v2097
        %v2125 = vsub.f32 %v2045, %v2099
        %v2126 = vsub.f32 %v2050, %v2101
        %v2127 = vsub.f32 %v2053, %v2103
        %v2128 = vsub.f32 %v2058, %v2105
        %v2129 = vsub.f32 %v2061, %v2107
        %v2130 = vsub.f32 %v2066, %v2109
        %v2131 = vsub.f32 %v2069, %v2111
        %v2132 = vsub.f32 %v2074, %v2113
        %v2133 = vsub.f32 %v2077, %v2115
        %v2134 = vsub.f32 %v2082, %v2117
        %v2135 = vsub.f32 %v2085, %v2119
        %v2136 = vmul.f32 %v2120, 1.442695
        %v2137 = vpow.pop %v2136
        %v2138 = vmul.f32 %v2121, 1.442695
        %v2139 = vpow.pop %v2138
        %v2140 = vmul.f32 %v2122, 1.442695
        %v2141 = vpow.pop %v2140
        %v2142 = vmul.f32 %v2123, 1.442695
        %v2143 = vpow.pop %v2142
        %v2144 = vmul.f32 %v2124, 1.442695
        %v2145 = vpow.pop %v2144
        %v2146 = vmul.f32 %v2125, 1.442695
        %v2147 = vpow.pop %v2146
        %v2148 = vmul.f32 %v2126, 1.442695
        %v2149 = vpow.pop %v2148
        %v2150 = vmul.f32 %v2127, 1.442695
        %v2151 = vpow.pop %v2150
        %v2152 = vmul.f32 %v2128, 1.442695
        %v2153 = vpow.pop %v2152
        %v2154 = vmul.f32 %v2129, 1.442695
        %v2155 = vpow.pop %v2154
        %v2156 = vmul.f32 %v2130, 1.442695
        %v2157 = vpow.pop %v2156
        %v2158 = vmul.f32 %v2131, 1.442695
        %v2159 = vpow.pop %v2158
        %v2160 = vmul.f32 %v2132, 1.442695
        %v2161 = vpow.pop %v2160
        %v2162 = vmul.f32 %v2133, 1.442695
        %v2163 = vpow.pop %v2162
        %v2164 = vmul.f32 %v2134, 1.442695
        %v2165 = vpow.pop %v2164
        %v2166 = vmul.f32 %v2135, 1.442695
        %v2167 = vpow.pop %v2166
        %2168 = vadd.xlane.f32.xlu0 %v2137
        %v2169 = vpop.xlane.xlu0 %2168
        %2170 = vadd.xlane.f32.xlu0 %v2139
        %v2171 = vpop.xlane.xlu0 %2170
        %2172 = vadd.xlane.f32.xlu0 %v2141
        %v2173 = vpop.xlane.xlu0 %2172
        %2174 = vadd.xlane.f32.xlu0 %v2143
        %v2175 = vpop.xlane.xlu0 %2174
        %2176 = vadd.xlane.f32.xlu0 %v2145
        %v2177 = vpop.xlane.xlu0 %2176
        %2178 = vadd.xlane.f32.xlu0 %v2147
        %v2179 = vpop.xlane.xlu0 %2178
        %2180 = vadd.xlane.f32.xlu0 %v2149
        %v2181 = vpop.xlane.xlu0 %2180
        %2182 = vadd.xlane.f32.xlu0 %v2151
        %v2183 = vpop.xlane.xlu0 %2182
        %2184 = vadd.xlane.f32.xlu0 %v2153
        %v2185 = vpop.xlane.xlu0 %2184
        %2186 = vadd.xlane.f32.xlu0 %v2155
        %v2187 = vpop.xlane.xlu0 %2186
        %2188 = vadd.xlane.f32.xlu0 %v2157
        %v2189 = vpop.xlane.xlu0 %2188
        %2190 = vadd.xlane.f32.xlu0 %v2159
        %v2191 = vpop.xlane.xlu0 %2190
        %2192 = vadd.xlane.f32.xlu0 %v2161
        %v2193 = vpop.xlane.xlu0 %2192
        %2194 = vadd.xlane.f32.xlu0 %v2163
        %v2195 = vpop.xlane.xlu0 %2194
        %2196 = vadd.xlane.f32.xlu0 %v2165
        %v2197 = vpop.xlane.xlu0 %2196
        %2198 = vadd.xlane.f32.xlu0 %v2167
        %v2199 = vpop.xlane.xlu0 %2198
        %v2200 = vrcp.pop %v2169
        %v2201 = vrcp.pop %v2171
        %v2202 = vrcp.pop %v2173
        %v2203 = vrcp.pop %v2175
        %v2204 = vrcp.pop %v2177
        %v2205 = vrcp.pop %v2179
        %v2206 = vrcp.pop %v2181
        %v2207 = vrcp.pop %v2183
        %v2208 = vrcp.pop %v2185
        %v2209 = vrcp.pop %v2187
        %v2210 = vrcp.pop %v2189
        %v2211 = vrcp.pop %v2191
        %v2212 = vrcp.pop %v2193
        %v2213 = vrcp.pop %v2195
        %v2214 = vrcp.pop %v2197
        %v2215 = vrcp.pop %v2199
        %v2216 = vmul.f32 %v2137, %v2200
        %v2217 = vmul.f32 %v2139, %v2201
        %v2218 = vmul.f32 %v2141, %v2202
        %v2219 = vmul.f32 %v2143, %v2203
        %v2220 = vmul.f32 %v2145, %v2204
        %v2221 = vmul.f32 %v2147, %v2205
        %v2222 = vmul.f32 %v2149, %v2206
        %v2223 = vmul.f32 %v2151, %v2207
        %v2224 = vmul.f32 %v2153, %v2208
        %v2225 = vmul.f32 %v2155, %v2209
        %v2226 = vmul.f32 %v2157, %v2210
        %v2227 = vmul.f32 %v2159, %v2211
        %v2228 = vmul.f32 %v2161, %v2212
        %v2229 = vmul.f32 %v2163, %v2213
        %v2230 = vmul.f32 %v2165, %v2214
        %v2231 = vmul.f32 %v2167, %v2215
        %v2232 = vpack.c.bf16 %v2217, %v2216
        %v2233 = vpack.c.bf16 %v2219, %v2218
        %v2234 = vpack.c.bf16 %v2221, %v2220
        %v2235 = vpack.c.bf16 %v2223, %v2222
        %v2236 = vpack.c.bf16 %v2225, %v2224
        %v2237 = vpack.c.bf16 %v2227, %v2226
        %v2238 = vpack.c.bf16 %v2229, %v2228
        %v2239 = vpack.c.bf16 %v2231, %v2230
        %2240 = vrot.lane.b32.xlu0 %v1034, 64
        %v2241 = vpop.permute.xlu0 %2240
        %2242 = vrot.lane.b32.xlu0 %v1035, 64
        %v2243 = vpop.permute.xlu0 %2242
        %2244 = vrot.lane.b32.xlu0 %v1036, 64
        %v2245 = vpop.permute.xlu0 %2244
        %2246 = vrot.lane.b32.xlu0 %v1037, 64
        %v2247 = vpop.permute.xlu0 %2246
        %2248 = vrot.lane.b32.xlu0 %v1038, 64
        %v2249 = vpop.permute.xlu0 %2248
        %2250 = vrot.lane.b32.xlu0 %v1039, 64
        %v2251 = vpop.permute.xlu0 %2250
        %2252 = vrot.lane.b32.xlu0 %v1040, 64
        %v2253 = vpop.permute.xlu0 %2252
        %2254 = vrot.lane.b32.xlu0 %v1041, 64
        %v2255 = vpop.permute.xlu0 %2254
        %2264 = vmatprep.subr.bf16.mxu0 0
        %2265 = vmatpush1.bf16.msra.mxu0 %v2241
        %2266 = vmatprep.subr.bf16.mxu0 0
        %2267 = vmatpush1.bf16.msra.mxu0 %v2243
        %2268 = vmatprep.subr.bf16.mxu0 0
        %2269 = vmatpush1.bf16.msra.mxu0 %v2245
        %2270 = vmatprep.subr.bf16.mxu0 0
        %2271 = vmatpush1.bf16.msra.mxu0 %v2247
        %2272 = vmatprep.subr.bf16.mxu0 0
        %2273 = vmatpush1.bf16.msra.mxu0 %v2249
        %2274 = vmatprep.subr.bf16.mxu0 0
        %2275 = vmatpush1.bf16.msra.mxu0 %v2251
        %2276 = vmatprep.subr.bf16.mxu0 0
        %2277 = vmatpush1.bf16.msra.mxu0 %v2253
        %2278 = vmatprep.subr.bf16.mxu0 0
        %2279 = vmatpush1.bf16.msra.mxu0 %v2255
        %2280 = vmatprep.subr.bf16.mxu0 0
        %2281 = vmatpush1.bf16.msra.mxu0 0
        %2282 = vmatprep.subr.bf16.mxu0 0
        %2283 = vmatpush1.bf16.msra.mxu0 0
        %2284 = vmatprep.subr.bf16.mxu0 0
        %2285 = vmatpush1.bf16.msra.mxu0 0
        %2286 = vmatprep.subr.bf16.mxu0 0
        %2287 = vmatpush1.bf16.msra.mxu0 0
        %2288 = vmatprep.subr.bf16.mxu0 0
        %2289 = vmatpush1.bf16.msra.mxu0 0
        %2290 = vmatprep.subr.bf16.mxu0 0
        %2291 = vmatpush1.bf16.msra.mxu0 0
        %2292 = vmatprep.subr.bf16.mxu0 0
        %2293 = vmatpush1.bf16.msra.mxu0 0
        %2294 = vmatprep.subr.bf16.mxu0 0
        %2295 = vmatpush1.bf16.msra.mxu0 0
        %2296 = vmatprep.mubr.bf16.mxu0 0
        %2297 = vmatmul.mubr.bf16.gmra.mrb[0].mxu0 %v2232
        %v2298 = vpop.f32.mrb[0].mxu0
        %v2299 = vadd.f32 0.0, %v2298
        %v2300 = vpop.f32.mrb[0].mxu0
        %v2301 = vpop.f32.mrb[0].mxu0
        %v2302 = vadd.f32 0.0, %v2301
        %v2303 = vpop.f32.mrb[0].mxu0
        %2304 = vmatprep.mubr.bf16.mxu0 0
        %2305 = vmatmul.mubr.bf16.gmra.mrb[0].mxu0 %v2233
        %v2306 = vpop.f32.mrb[0].mxu0
        %v2307 = vadd.f32 0.0, %v2306
        %v2308 = vpop.f32.mrb[0].mxu0
        %v2309 = vpop.f32.mrb[0].mxu0
        %v2310 = vadd.f32 0.0, %v2309
        %v2311 = vpop.f32.mrb[0].mxu0
        %2312 = vmatprep.mubr.bf16.mxu0 0
        %2313 = vmatmul.mubr.bf16.gmra.mrb[0].mxu0 %v2234
        %v2314 = vpop.f32.mrb[0].mxu0
        %v2315 = vadd.f32 0.0, %v2314
        %v2316 = vpop.f32.mrb[0].mxu0
        %v2317 = vpop.f32.mrb[0].mxu0
        %v2318 = vadd.f32 0.0, %v2317
        %v2319 = vpop.f32.mrb[0].mxu0
        %2320 = vmatprep.mubr.bf16.mxu0 0
        %2321 = vmatmul.mubr.bf16.gmra.mrb[0].mxu0 %v2235
        %v2322 = vpop.f32.mrb[0].mxu0
        %v2323 = vadd.f32 0.0, %v2322
        %v2324 = vpop.f32.mrb[0].mxu0
        %v2325 = vpop.f32.mrb[0].mxu0
        %v2326 = vadd.f32 0.0, %v2325
        %v2327 = vpop.f32.mrb[0].mxu0
        %2328 = vmatprep.mubr.bf16.mxu0 0
        %2329 = vmatmul.mubr.bf16.gmra.mrb[0].mxu0 %v2236
        %v2330 = vpop.f32.mrb[0].mxu0
        %v2331 = vadd.f32 0.0, %v2330
        %v2332 = vpop.f32.mrb[0].mxu0
        %v2333 = vpop.f32.mrb[0].mxu0
        %v2334 = vadd.f32 0.0, %v2333
        %v2335 = vpop.f32.mrb[0].mxu0
        %2336 = vmatprep.mubr.bf16.mxu0 0
        %2337 = vmatmul.mubr.bf16.gmra.mrb[0].mxu0 %v2237
        %v2338 = vpop.f32.mrb[0].mxu0
        %v2339 = vadd.f32 0.0, %v2338
        %v2340 = vpop.f32.mrb[0].mxu0
        %v2341 = vpop.f32.mrb[0].mxu0
        %v2342 = vadd.f32 0.0, %v2341
        %v2343 = vpop.f32.mrb[0].mxu0
        %2344 = vmatprep.mubr.bf16.mxu0 0
        %2345 = vmatmul.mubr.bf16.gmra.mrb[0].mxu0 %v2238
        %v2346 = vpop.f32.mrb[0].mxu0
        %v2347 = vadd.f32 0.0, %v2346
        %v2348 = vpop.f32.mrb[0].mxu0
        %v2349 = vpop.f32.mrb[0].mxu0
        %v2350 = vadd.f32 0.0, %v2349
        %v2351 = vpop.f32.mrb[0].mxu0
        %2352 = vmatprep.mubr.bf16.mxu0 0
        %2353 = vmatmul.mubr.bf16.gmra.mrb[0].mxu0 %v2239
        %v2354 = vpop.f32.mrb[0].mxu0
        %v2355 = vadd.f32 0.0, %v2354
        %v2356 = vpop.f32.mrb[0].mxu0
        %v2357 = vpop.f32.mrb[0].mxu0
        %v2358 = vadd.f32 0.0, %v2357
        %v2359 = vpop.f32.mrb[0].mxu0
        %2360 = vdwg.mxu0
        %2361 = vrot.lane.b32.xlu0 %v1018, 32
        %v2362 = vpop.permute.xlu0 %2361
        %2363 = vrot.lane.b32.xlu0 %v1019, 32
        %v2364 = vpop.permute.xlu0 %2363
        %2365 = vrot.lane.b32.xlu0 %v1020, 32
        %v2366 = vpop.permute.xlu0 %2365
        %2367 = vrot.lane.b32.xlu0 %v1021, 32
        %v2368 = vpop.permute.xlu0 %2367
        %2369 = vrot.lane.b32.xlu0 %v1022, 32
        %v2370 = vpop.permute.xlu0 %2369
        %2371 = vrot.lane.b32.xlu0 %v1023, 32
        %v2372 = vpop.permute.xlu0 %2371
        %2373 = vrot.lane.b32.xlu0 %v1024, 32
        %v2374 = vpop.permute.xlu0 %2373
        %2375 = vrot.lane.b32.xlu0 %v1025, 32
        %v2376 = vpop.permute.xlu0 %2375
        %2377 = vrot.lane.b32.xlu0 %v1026, 32
        %v2378 = vpop.permute.xlu0 %2377
        %2379 = vrot.lane.b32.xlu0 %v1027, 32
        %v2380 = vpop.permute.xlu0 %2379
        %2381 = vrot.lane.b32.xlu0 %v1028, 32
        %v2382 = vpop.permute.xlu0 %2381
        %2383 = vrot.lane.b32.xlu0 %v1029, 32
        %v2384 = vpop.permute.xlu0 %2383
        %2385 = vrot.lane.b32.xlu0 %v1030, 32
        %v2386 = vpop.permute.xlu0 %2385
        %2387 = vrot.lane.b32.xlu0 %v1031, 32
        %v2388 = vpop.permute.xlu0 %2387
        %2389 = vrot.lane.b32.xlu0 %v1032, 32
        %v2390 = vpop.permute.xlu0 %2389
        %2391 = vrot.lane.b32.xlu0 %v1033, 32
        %v2392 = vpop.permute.xlu0 %2391
        %v2394 = vsel %vm1042, %v2362, 0
        %v2397 = vsel %vm1042, %v2364, 0
        %v2400 = vsel %vm1042, %v2366, 0
        %v2403 = vsel %vm1042, %v2368, 0
        %v2406 = vsel %vm1042, %v2370, 0
        %v2409 = vsel %vm1042, %v2372, 0
        %v2412 = vsel %vm1042, %v2374, 0
        %v2415 = vsel %vm1042, %v2376, 0
        %v2418 = vsel %vm1042, %v2378, 0
        %v2421 = vsel %vm1042, %v2380, 0
        %v2424 = vsel %vm1042, %v2382, 0
        %v2427 = vsel %vm1042, %v2384, 0
        %v2430 = vsel %vm1042, %v2386, 0
        %v2433 = vsel %vm1042, %v2388, 0
        %v2436 = vsel %vm1042, %v2390, 0
        %v2439 = vsel %vm1042, %v2392, 0
        %2441 = vmatprep.subr.bf16.mxu0 0
        %2442 = vmatpush1.bf16.xpose.msra.mxu0 %v2418
        %2443 = vmatprep.subr.bf16.mxu0 0
        %2444 = vmatpush1.bf16.xpose.msra.mxu0 %v2421
        %2445 = vmatprep.subr.bf16.mxu0 0
        %2446 = vmatpush1.bf16.xpose.msra.mxu0 %v2424
        %2447 = vmatprep.subr.bf16.mxu0 0
        %2448 = vmatpush1.bf16.xpose.msra.mxu0 %v2427
        %2449 = vmatprep.subr.bf16.mxu0 0
        %2450 = vmatpush1.bf16.xpose.msra.mxu0 %v2430
        %2451 = vmatprep.subr.bf16.mxu0 0
        %2452 = vmatpush1.bf16.xpose.msra.mxu0 %v2433
        %2453 = vmatprep.subr.bf16.mxu0 0
        %2454 = vmatpush1.bf16.xpose.msra.mxu0 %v2436
        %2455 = vmatprep.subr.bf16.mxu0 0
        %2456 = vmatpush1.bf16.xpose.msra.mxu0 %v2439
        %2457 = vmatprep.subr.bf16.mxu0 0
        %2458 = vmatpush1.bf16.xpose.msra.mxu0 0
        %2459 = vmatprep.subr.bf16.mxu0 0
        %2460 = vmatpush1.bf16.xpose.msra.mxu0 0
        %2461 = vmatprep.subr.bf16.mxu0 0
        %2462 = vmatpush1.bf16.xpose.msra.mxu0 0
        %2463 = vmatprep.subr.bf16.mxu0 0
        %2464 = vmatpush1.bf16.xpose.msra.mxu0 0
        %2465 = vmatprep.subr.bf16.mxu0 0
        %2466 = vmatpush1.bf16.xpose.msra.mxu0 0
        %2467 = vmatprep.subr.bf16.mxu0 0
        %2468 = vmatpush1.bf16.xpose.msra.mxu0 0
        %2469 = vmatprep.subr.bf16.mxu0 0
        %2470 = vmatpush1.bf16.xpose.msra.mxu0 0
        %2471 = vmatprep.subr.bf16.mxu0 0
        %2472 = vmatpush1.bf16.xpose.msra.mxu0 0
        %2473 = vmatprep.mubr.bf16.mxu0 0
        %2474 = vmatmul.mubr.bf16.gmra.mrb[0].mxu0 %v2394
        %v2475 = vpop.f32.mrb[0].mxu0
        %v2476 = vadd.f32 0.0, %v2475
        %v2477 = vpop.f32.mrb[0].mxu0
        %v2478 = vpop.f32.mrb[0].mxu0
        %v2479 = vadd.f32 0.0, %v2478
        %v2480 = vpop.f32.mrb[0].mxu0
        %2481 = vmatprep.mubr.bf16.mxu0 0
        %2482 = vmatmul.mubr.bf16.gmra.mrb[0].mxu0 %v2397
        %v2483 = vpop.f32.mrb[0].mxu0
        %v2484 = vadd.f32 0.0, %v2483
        %v2485 = vpop.f32.mrb[0].mxu0
        %v2486 = vpop.f32.mrb[0].mxu0
        %v2487 = vadd.f32 0.0, %v2486
        %v2488 = vpop.f32.mrb[0].mxu0
        %2489 = vmatprep.mubr.bf16.mxu0 0
        %2490 = vmatmul.mubr.bf16.gmra.mrb[0].mxu0 %v2400
        %v2491 = vpop.f32.mrb[0].mxu0
        %v2492 = vadd.f32 0.0, %v2491
        %v2493 = vpop.f32.mrb[0].mxu0
        %v2494 = vpop.f32.mrb[0].mxu0
        %v2495 = vadd.f32 0.0, %v2494
        %v2496 = vpop.f32.mrb[0].mxu0
        %2497 = vmatprep.mubr.bf16.mxu0 0
        %2498 = vmatmul.mubr.bf16.gmra.mrb[0].mxu0 %v2403
        %v2499 = vpop.f32.mrb[0].mxu0
        %v2500 = vadd.f32 0.0, %v2499
        %v2501 = vpop.f32.mrb[0].mxu0
        %v2502 = vpop.f32.mrb[0].mxu0
        %v2503 = vadd.f32 0.0, %v2502
        %v2504 = vpop.f32.mrb[0].mxu0
        %2505 = vmatprep.mubr.bf16.mxu0 0
        %2506 = vmatmul.mubr.bf16.gmra.mrb[0].mxu0 %v2406
        %v2507 = vpop.f32.mrb[0].mxu0
        %v2508 = vadd.f32 0.0, %v2507
        %v2509 = vpop.f32.mrb[0].mxu0
        %v2510 = vpop.f32.mrb[0].mxu0
        %v2511 = vadd.f32 0.0, %v2510
        %v2512 = vpop.f32.mrb[0].mxu0
        %2513 = vmatprep.mubr.bf16.mxu0 0
        %2514 = vmatmul.mubr.bf16.gmra.mrb[0].mxu0 %v2409
        %v2515 = vpop.f32.mrb[0].mxu0
        %v2516 = vadd.f32 0.0, %v2515
        %v2517 = vpop.f32.mrb[0].mxu0
        %v2518 = vpop.f32.mrb[0].mxu0
        %v2519 = vadd.f32 0.0, %v2518
        %v2520 = vpop.f32.mrb[0].mxu0
        %2521 = vmatprep.mubr.bf16.mxu0 0
        %2522 = vmatmul.mubr.bf16.gmra.mrb[0].mxu0 %v2412
        %v2523 = vpop.f32.mrb[0].mxu0
        %v2524 = vadd.f32 0.0, %v2523
        %v2525 = vpop.f32.mrb[0].mxu0
        %v2526 = vpop.f32.mrb[0].mxu0
        %v2527 = vadd.f32 0.0, %v2526
        %v2528 = vpop.f32.mrb[0].mxu0
        %2529 = vmatprep.mubr.bf16.mxu0 0
        %2530 = vmatmul.mubr.bf16.gmra.mrb[0].mxu0 %v2415
        %v2531 = vpop.f32.mrb[0].mxu0
        %v2532 = vadd.f32 0.0, %v2531
        %v2533 = vpop.f32.mrb[0].mxu0
        %v2534 = vpop.f32.mrb[0].mxu0
        %v2535 = vadd.f32 0.0, %v2534
        %v2536 = vpop.f32.mrb[0].mxu0
        %2537 = vdwg.mxu0
        %2538 = vmax.xlane.f32.xlu0 %v2476
        %v2539 = vpop.xlane.xlu0 %2538
        %2540 = vmax.xlane.f32.xlu0 %v2479
        %v2541 = vpop.xlane.xlu0 %2540
        %2542 = vmax.xlane.f32.xlu0 %v2484
        %v2543 = vpop.xlane.xlu0 %2542
        %2544 = vmax.xlane.f32.xlu0 %v2487
        %v2545 = vpop.xlane.xlu0 %2544
        %2546 = vmax.xlane.f32.xlu0 %v2492
        %v2547 = vpop.xlane.xlu0 %2546
        %2548 = vmax.xlane.f32.xlu0 %v2495
        %v2549 = vpop.xlane.xlu0 %2548
        %2550 = vmax.xlane.f32.xlu0 %v2500
        %v2551 = vpop.xlane.xlu0 %2550
        %2552 = vmax.xlane.f32.xlu0 %v2503
        %v2553 = vpop.xlane.xlu0 %2552
        %2554 = vmax.xlane.f32.xlu0 %v2508
        %v2555 = vpop.xlane.xlu0 %2554
        %2556 = vmax.xlane.f32.xlu0 %v2511
        %v2557 = vpop.xlane.xlu0 %2556
        %2558 = vmax.xlane.f32.xlu0 %v2516
        %v2559 = vpop.xlane.xlu0 %2558
        %2560 = vmax.xlane.f32.xlu0 %v2519
        %v2561 = vpop.xlane.xlu0 %2560
        %2562 = vmax.xlane.f32.xlu0 %v2524
        %v2563 = vpop.xlane.xlu0 %2562
        %2564 = vmax.xlane.f32.xlu0 %v2527
        %v2565 = vpop.xlane.xlu0 %2564
        %2566 = vmax.xlane.f32.xlu0 %v2532
        %v2567 = vpop.xlane.xlu0 %2566
        %2568 = vmax.xlane.f32.xlu0 %v2535
        %v2569 = vpop.xlane.xlu0 %2568
        %v2570 = vsub.f32 %v2476, %v2539
        %v2571 = vsub.f32 %v2479, %v2541
        %v2572 = vsub.f32 %v2484, %v2543
        %v2573 = vsub.f32 %v2487, %v2545
        %v2574 = vsub.f32 %v2492, %v2547
        %v2575 = vsub.f32 %v2495, %v2549
        %v2576 = vsub.f32 %v2500, %v2551
        %v2577 = vsub.f32 %v2503, %v2553
        %v2578 = vsub.f32 %v2508, %v2555
        %v2579 = vsub.f32 %v2511, %v2557
        %v2580 = vsub.f32 %v2516, %v2559
        %v2581 = vsub.f32 %v2519, %v2561
        %v2582 = vsub.f32 %v2524, %v2563
        %v2583 = vsub.f32 %v2527, %v2565
        %v2584 = vsub.f32 %v2532, %v2567
        %v2585 = vsub.f32 %v2535, %v2569
        %v2586 = vmul.f32 %v2570, 1.442695
        %v2587 = vpow.pop %v2586
        %v2588 = vmul.f32 %v2571, 1.442695
        %v2589 = vpow.pop %v2588
        %v2590 = vmul.f32 %v2572, 1.442695
        %v2591 = vpow.pop %v2590
        %v2592 = vmul.f32 %v2573, 1.442695
        %v2593 = vpow.pop %v2592
        %v2594 = vmul.f32 %v2574, 1.442695
        %v2595 = vpow.pop %v2594
        %v2596 = vmul.f32 %v2575, 1.442695
        %v2597 = vpow.pop %v2596
        %v2598 = vmul.f32 %v2576, 1.442695
        %v2599 = vpow.pop %v2598
        %v2600 = vmul.f32 %v2577, 1.442695
        %v2601 = vpow.pop %v2600
        %v2602 = vmul.f32 %v2578, 1.442695
        %v2603 = vpow.pop %v2602
        %v2604 = vmul.f32 %v2579, 1.442695
        %v2605 = vpow.pop %v2604
        %v2606 = vmul.f32 %v2580, 1.442695
        %v2607 = vpow.pop %v2606
        %v2608 = vmul.f32 %v2581, 1.442695
        %v2609 = vpow.pop %v2608
        %v2610 = vmul.f32 %v2582, 1.442695
        %v2611 = vpow.pop %v2610
        %v2612 = vmul.f32 %v2583, 1.442695
        %v2613 = vpow.pop %v2612
        %v2614 = vmul.f32 %v2584, 1.442695
        %v2615 = vpow.pop %v2614
        %v2616 = vmul.f32 %v2585, 1.442695
        %v2617 = vpow.pop %v2616
        %2618 = vadd.xlane.f32.xlu0 %v2587
        %v2619 = vpop.xlane.xlu0 %2618
        %2620 = vadd.xlane.f32.xlu0 %v2589
        %v2621 = vpop.xlane.xlu0 %2620
        %2622 = vadd.xlane.f32.xlu0 %v2591
        %v2623 = vpop.xlane.xlu0 %2622
        %2624 = vadd.xlane.f32.xlu0 %v2593
        %v2625 = vpop.xlane.xlu0 %2624
        %2626 = vadd.xlane.f32.xlu0 %v2595
        %v2627 = vpop.xlane.xlu0 %2626
        %2628 = vadd.xlane.f32.xlu0 %v2597
        %v2629 = vpop.xlane.xlu0 %2628
        %2630 = vadd.xlane.f32.xlu0 %v2599
        %v2631 = vpop.xlane.xlu0 %2630
        %2632 = vadd.xlane.f32.xlu0 %v2601
        %v2633 = vpop.xlane.xlu0 %2632
        %2634 = vadd.xlane.f32.xlu0 %v2603
        %v2635 = vpop.xlane.xlu0 %2634
        %2636 = vadd.xlane.f32.xlu0 %v2605
        %v2637 = vpop.xlane.xlu0 %2636
        %2638 = vadd.xlane.f32.xlu0 %v2607
        %v2639 = vpop.xlane.xlu0 %2638
        %2640 = vadd.xlane.f32.xlu0 %v2609
        %v2641 = vpop.xlane.xlu0 %2640
        %2642 = vadd.xlane.f32.xlu0 %v2611
        %v2643 = vpop.xlane.xlu0 %2642
        %2644 = vadd.xlane.f32.xlu0 %v2613
        %v2645 = vpop.xlane.xlu0 %2644
        %2646 = vadd.xlane.f32.xlu0 %v2615
        %v2647 = vpop.xlane.xlu0 %2646
        %2648 = vadd.xlane.f32.xlu0 %v2617
        %v2649 = vpop.xlane.xlu0 %2648
        %v2650 = vrcp.pop %v2619
        %v2651 = vrcp.pop %v2621
        %v2652 = vrcp.pop %v2623
        %v2653 = vrcp.pop %v2625
        %v2654 = vrcp.pop %v2627
        %v2655 = vrcp.pop %v2629
        %v2656 = vrcp.pop %v2631
        %v2657 = vrcp.pop %v2633
        %v2658 = vrcp.pop %v2635
        %v2659 = vrcp.pop %v2637
        %v2660 = vrcp.pop %v2639
        %v2661 = vrcp.pop %v2641
        %v2662 = vrcp.pop %v2643
        %v2663 = vrcp.pop %v2645
        %v2664 = vrcp.pop %v2647
        %v2665 = vrcp.pop %v2649
        %v2666 = vmul.f32 %v2587, %v2650
        %v2667 = vmul.f32 %v2589, %v2651
        %v2668 = vmul.f32 %v2591, %v2652
        %v2669 = vmul.f32 %v2593, %v2653
        %v2670 = vmul.f32 %v2595, %v2654
        %v2671 = vmul.f32 %v2597, %v2655
        %v2672 = vmul.f32 %v2599, %v2656
        %v2673 = vmul.f32 %v2601, %v2657
        %v2674 = vmul.f32 %v2603, %v2658
        %v2675 = vmul.f32 %v2605, %v2659
        %v2676 = vmul.f32 %v2607, %v2660
        %v2677 = vmul.f32 %v2609, %v2661
        %v2678 = vmul.f32 %v2611, %v2662
        %v2679 = vmul.f32 %v2613, %v2663
        %v2680 = vmul.f32 %v2615, %v2664
        %v2681 = vmul.f32 %v2617, %v2665
        %v2682 = vpack.c.bf16 %v2667, %v2666
        %v2683 = vpack.c.bf16 %v2669, %v2668
        %v2684 = vpack.c.bf16 %v2671, %v2670
        %v2685 = vpack.c.bf16 %v2673, %v2672
        %v2686 = vpack.c.bf16 %v2675, %v2674
        %v2687 = vpack.c.bf16 %v2677, %v2676
        %v2688 = vpack.c.bf16 %v2679, %v2678
        %v2689 = vpack.c.bf16 %v2681, %v2680
        %2690 = vrot.lane.b32.xlu0 %v1034, 32
        %v2691 = vpop.permute.xlu0 %2690
        %2692 = vrot.lane.b32.xlu0 %v1035, 32
        %v2693 = vpop.permute.xlu0 %2692
        %2694 = vrot.lane.b32.xlu0 %v1036, 32
        %v2695 = vpop.permute.xlu0 %2694
        %2696 = vrot.lane.b32.xlu0 %v1037, 32
        %v2697 = vpop.permute.xlu0 %2696
        %2698 = vrot.lane.b32.xlu0 %v1038, 32
        %v2699 = vpop.permute.xlu0 %2698
        %2700 = vrot.lane.b32.xlu0 %v1039, 32
        %v2701 = vpop.permute.xlu0 %2700
        %2702 = vrot.lane.b32.xlu0 %v1040, 32
        %v2703 = vpop.permute.xlu0 %2702
        %2704 = vrot.lane.b32.xlu0 %v1041, 32
        %v2705 = vpop.permute.xlu0 %2704
        %2714 = vmatprep.subr.bf16.mxu0 0
        %2715 = vmatpush1.bf16.msra.mxu0 %v2691
        %2716 = vmatprep.subr.bf16.mxu0 0
        %2717 = vmatpush1.bf16.msra.mxu0 %v2693
        %2718 = vmatprep.subr.bf16.mxu0 0
        %2719 = vmatpush1.bf16.msra.mxu0 %v2695
        %2720 = vmatprep.subr.bf16.mxu0 0
        %2721 = vmatpush1.bf16.msra.mxu0 %v2697
        %2722 = vmatprep.subr.bf16.mxu0 0
        %2723 = vmatpush1.bf16.msra.mxu0 %v2699
        %2724 = vmatprep.subr.bf16.mxu0 0
        %2725 = vmatpush1.bf16.msra.mxu0 %v2701
        %2726 = vmatprep.subr.bf16.mxu0 0
        %2727 = vmatpush1.bf16.msra.mxu0 %v2703
        %2728 = vmatprep.subr.bf16.mxu0 0
        %2729 = vmatpush1.bf16.msra.mxu0 %v2705
        %2730 = vmatprep.subr.bf16.mxu0 0
        %2731 = vmatpush1.bf16.msra.mxu0 0
        %2732 = vmatprep.subr.bf16.mxu0 0
        %2733 = vmatpush1.bf16.msra.mxu0 0
        %2734 = vmatprep.subr.bf16.mxu0 0
        %2735 = vmatpush1.bf16.msra.mxu0 0
        %2736 = vmatprep.subr.bf16.mxu0 0
        %2737 = vmatpush1.bf16.msra.mxu0 0
        %2738 = vmatprep.subr.bf16.mxu0 0
        %2739 = vmatpush1.bf16.msra.mxu0 0
        %2740 = vmatprep.subr.bf16.mxu0 0
        %2741 = vmatpush1.bf16.msra.mxu0 0
        %2742 = vmatprep.subr.bf16.mxu0 0
        %2743 = vmatpush1.bf16.msra.mxu0 0
        %2744 = vmatprep.subr.bf16.mxu0 0
        %2745 = vmatpush1.bf16.msra.mxu0 0
        %2746 = vmatprep.mubr.bf16.mxu0 0
        %2747 = vmatmul.mubr.bf16.gmra.mrb[0].mxu0 %v2682
        %v2748 = vpop.f32.mrb[0].mxu0
        %v2749 = vadd.f32 0.0, %v2748
        %v2750 = vpop.f32.mrb[0].mxu0
        %v2751 = vpop.f32.mrb[0].mxu0
        %v2752 = vadd.f32 0.0, %v2751
        %v2753 = vpop.f32.mrb[0].mxu0
        %2754 = vmatprep.mubr.bf16.mxu0 0
        %2755 = vmatmul.mubr.bf16.gmra.mrb[0].mxu0 %v2683
        %v2756 = vpop.f32.mrb[0].mxu0
        %v2757 = vadd.f32 0.0, %v2756
        %v2758 = vpop.f32.mrb[0].mxu0
        %v2759 = vpop.f32.mrb[0].mxu0
        %v2760 = vadd.f32 0.0, %v2759
        %v2761 = vpop.f32.mrb[0].mxu0
        %2762 = vmatprep.mubr.bf16.mxu0 0
        %2763 = vmatmul.mubr.bf16.gmra.mrb[0].mxu0 %v2684
        %v2764 = vpop.f32.mrb[0].mxu0
        %v2765 = vadd.f32 0.0, %v2764
        %v2766 = vpop.f32.mrb[0].mxu0
        %v2767 = vpop.f32.mrb[0].mxu0
        %v2768 = vadd.f32 0.0, %v2767
        %v2769 = vpop.f32.mrb[0].mxu0
        %2770 = vmatprep.mubr.bf16.mxu0 0
        %2771 = vmatmul.mubr.bf16.gmra.mrb[0].mxu0 %v2685
        %v2772 = vpop.f32.mrb[0].mxu0
        %v2773 = vadd.f32 0.0, %v2772
        %v2774 = vpop.f32.mrb[0].mxu0
        %v2775 = vpop.f32.mrb[0].mxu0
        %v2776 = vadd.f32 0.0, %v2775
        %v2777 = vpop.f32.mrb[0].mxu0
        %2778 = vmatprep.mubr.bf16.mxu0 0
        %2779 = vmatmul.mubr.bf16.gmra.mrb[0].mxu0 %v2686
        %v2780 = vpop.f32.mrb[0].mxu0
        %v2781 = vadd.f32 0.0, %v2780
        %v2782 = vpop.f32.mrb[0].mxu0
        %v2783 = vpop.f32.mrb[0].mxu0
        %v2784 = vadd.f32 0.0, %v2783
        %v2785 = vpop.f32.mrb[0].mxu0
        %2786 = vmatprep.mubr.bf16.mxu0 0
        %2787 = vmatmul.mubr.bf16.gmra.mrb[0].mxu0 %v2687
        %v2788 = vpop.f32.mrb[0].mxu0
        %v2789 = vadd.f32 0.0, %v2788
        %v2790 = vpop.f32.mrb[0].mxu0
        %v2791 = vpop.f32.mrb[0].mxu0
        %v2792 = vadd.f32 0.0, %v2791
        %v2793 = vpop.f32.mrb[0].mxu0
        %2794 = vmatprep.mubr.bf16.mxu0 0
        %2795 = vmatmul.mubr.bf16.gmra.mrb[0].mxu0 %v2688
        %v2796 = vpop.f32.mrb[0].mxu0
        %v2797 = vadd.f32 0.0, %v2796
        %v2798 = vpop.f32.mrb[0].mxu0
        %v2799 = vpop.f32.mrb[0].mxu0
        %v2800 = vadd.f32 0.0, %v2799
        %v2801 = vpop.f32.mrb[0].mxu0
        %2802 = vmatprep.mubr.bf16.mxu0 0
        %2803 = vmatmul.mubr.bf16.gmra.mrb[0].mxu0 %v2689
        %v2804 = vpop.f32.mrb[0].mxu0
        %v2805 = vadd.f32 0.0, %v2804
        %v2806 = vpop.f32.mrb[0].mxu0
        %v2807 = vpop.f32.mrb[0].mxu0
        %v2808 = vadd.f32 0.0, %v2807
        %v2809 = vpop.f32.mrb[0].mxu0
        %2810 = vdwg.mxu0
        %2827 = vrot.lane.b32.xlu0 %v1849, 32
        %v2828 = vpop.permute.xlu0 %2827
        %2829 = vrot.lane.b32.xlu0 %v1852, 32
        %v2830 = vpop.permute.xlu0 %2829
        %2831 = vrot.lane.b32.xlu0 %v1857, 32
        %v2832 = vpop.permute.xlu0 %2831
        %2833 = vrot.lane.b32.xlu0 %v1860, 32
        %v2834 = vpop.permute.xlu0 %2833
        %2835 = vrot.lane.b32.xlu0 %v1865, 32
        %v2836 = vpop.permute.xlu0 %2835
        %2837 = vrot.lane.b32.xlu0 %v1868, 32
        %v2838 = vpop.permute.xlu0 %2837
        %2839 = vrot.lane.b32.xlu0 %v1873, 32
        %v2840 = vpop.permute.xlu0 %2839
        %2841 = vrot.lane.b32.xlu0 %v1876, 32
        %v2842 = vpop.permute.xlu0 %2841
        %2843 = vrot.lane.b32.xlu0 %v1881, 32
        %v2844 = vpop.permute.xlu0 %2843
        %2845 = vrot.lane.b32.xlu0 %v1884, 32
        %v2846 = vpop.permute.xlu0 %2845
        %2847 = vrot.lane.b32.xlu0 %v1889, 32
        %v2848 = vpop.permute.xlu0 %2847
        %2849 = vrot.lane.b32.xlu0 %v1892, 32
        %v2850 = vpop.permute.xlu0 %2849
        %2851 = vrot.lane.b32.xlu0 %v1897, 32
        %v2852 = vpop.permute.xlu0 %2851
        %2853 = vrot.lane.b32.xlu0 %v1900, 32
        %v2854 = vpop.permute.xlu0 %2853
        %2855 = vrot.lane.b32.xlu0 %v1905, 32
        %v2856 = vpop.permute.xlu0 %2855
        %2857 = vrot.lane.b32.xlu0 %v1908, 32
        %v2858 = vpop.permute.xlu0 %2857
        %2891 = vrot.lane.b32.xlu0 %v2299, 64
        %v2892 = vpop.permute.xlu0 %2891
        %2893 = vrot.lane.b32.xlu0 %v2302, 64
        %v2894 = vpop.permute.xlu0 %2893
        %2895 = vrot.lane.b32.xlu0 %v2307, 64
        %v2896 = vpop.permute.xlu0 %2895
        %2897 = vrot.lane.b32.xlu0 %v2310, 64
        %v2898 = vpop.permute.xlu0 %2897
        %2899 = vrot.lane.b32.xlu0 %v2315, 64
        %v2900 = vpop.permute.xlu0 %2899
        %2901 = vrot.lane.b32.xlu0 %v2318, 64
        %v2902 = vpop.permute.xlu0 %2901
        %2903 = vrot.lane.b32.xlu0 %v2323, 64
        %v2904 = vpop.permute.xlu0 %2903
        %2905 = vrot.lane.b32.xlu0 %v2326, 64
        %v2906 = vpop.permute.xlu0 %2905
        %2907 = vrot.lane.b32.xlu0 %v2331, 64
        %v2908 = vpop.permute.xlu0 %2907
        %2909 = vrot.lane.b32.xlu0 %v2334, 64
        %v2910 = vpop.permute.xlu0 %2909
        %2911 = vrot.lane.b32.xlu0 %v2339, 64
        %v2912 = vpop.permute.xlu0 %2911
        %2913 = vrot.lane.b32.xlu0 %v2342, 64
        %v2914 = vpop.permute.xlu0 %2913
        %2915 = vrot.lane.b32.xlu0 %v2347, 64
        %v2916 = vpop.permute.xlu0 %2915
        %2917 = vrot.lane.b32.xlu0 %v2350, 64
        %v2918 = vpop.permute.xlu0 %2917
        %2919 = vrot.lane.b32.xlu0 %v2355, 64
        %v2920 = vpop.permute.xlu0 %2919
        %2921 = vrot.lane.b32.xlu0 %v2358, 64
        %v2922 = vpop.permute.xlu0 %2921
        %2955 = vrot.lane.b32.xlu0 %v2749, 96
        %v2956 = vpop.permute.xlu0 %2955
        %2957 = vrot.lane.b32.xlu0 %v2752, 96
        %v2958 = vpop.permute.xlu0 %2957
        %2959 = vrot.lane.b32.xlu0 %v2757, 96
        %v2960 = vpop.permute.xlu0 %2959
        %2961 = vrot.lane.b32.xlu0 %v2760, 96
        %v2962 = vpop.permute.xlu0 %2961
        %2963 = vrot.lane.b32.xlu0 %v2765, 96
        %v2964 = vpop.permute.xlu0 %2963
        %2965 = vrot.lane.b32.xlu0 %v2768, 96
        %v2966 = vpop.permute.xlu0 %2965
        %2967 = vrot.lane.b32.xlu0 %v2773, 96
        %v2968 = vpop.permute.xlu0 %2967
        %2969 = vrot.lane.b32.xlu0 %v2776, 96
        %v2970 = vpop.permute.xlu0 %2969
        %2971 = vrot.lane.b32.xlu0 %v2781, 96
        %v2972 = vpop.permute.xlu0 %2971
        %2973 = vrot.lane.b32.xlu0 %v2784, 96
        %v2974 = vpop.permute.xlu0 %2973
        %2975 = vrot.lane.b32.xlu0 %v2789, 96
        %v2976 = vpop.permute.xlu0 %2975
        %2977 = vrot.lane.b32.xlu0 %v2792, 96
        %v2978 = vpop.permute.xlu0 %2977
        %2979 = vrot.lane.b32.xlu0 %v2797, 96
        %v2980 = vpop.permute.xlu0 %2979
        %2981 = vrot.lane.b32.xlu0 %v2800, 96
        %v2982 = vpop.permute.xlu0 %2981
        %2983 = vrot.lane.b32.xlu0 %v2805, 96
        %v2984 = vpop.permute.xlu0 %2983
        %2985 = vrot.lane.b32.xlu0 %v2808, 96
        %v2986 = vpop.permute.xlu0 %2985
        %v3003 = vsel %vm1042, %v1375, %v2828
        %v3004 = vsel %vm1042, %v1378, %v2830
        %v3005 = vsel %vm1042, %v1383, %v2832
        %v3006 = vsel %vm1042, %v1386, %v2834
        %v3007 = vsel %vm1042, %v1391, %v2836
        %v3008 = vsel %vm1042, %v1394, %v2838
        %v3009 = vsel %vm1042, %v1399, %v2840
        %v3010 = vsel %vm1042, %v1402, %v2842
        %v3011 = vsel %vm1042, %v1407, %v2844
        %v3012 = vsel %vm1042, %v1410, %v2846
        %v3013 = vsel %vm1042, %v1415, %v2848
        %v3014 = vsel %vm1042, %v1418, %v2850
        %v3015 = vsel %vm1042, %v1423, %v2852
        %v3016 = vsel %vm1042, %v1426, %v2854
        %v3017 = vsel %vm1042, %v1431, %v2856
        %v3018 = vsel %vm1042, %v1434, %v2858
        %vm3019 = vcmask 523264
        %v3020 = vsel %vm3019, %v3003, %v2892
        %v3021 = vsel %vm3019, %v3004, %v2894
        %v3022 = vsel %vm3019, %v3005, %v2896
        %v3023 = vsel %vm3019, %v3006, %v2898
        %v3024 = vsel %vm3019, %v3007, %v2900
        %v3025 = vsel %vm3019, %v3008, %v2902
        %v3026 = vsel %vm3019, %v3009, %v2904
        %v3027 = vsel %vm3019, %v3010, %v2906
        %v3028 = vsel %vm3019, %v3011, %v2908
        %v3029 = vsel %vm3019, %v3012, %v2910
        %v3030 = vsel %vm3019, %v3013, %v2912
        %v3031 = vsel %vm3019, %v3014, %v2914
        %v3032 = vsel %vm3019, %v3015, %v2916
        %v3033 = vsel %vm3019, %v3016, %v2918
        %v3034 = vsel %vm3019, %v3017, %v2920
        %v3035 = vsel %vm3019, %v3018, %v2922
        %vm3036 = vcmask 785408
        %v3037 = vsel %vm3036, %v3020, %v2956
        %v3038 = vsel %vm3036, %v3021, %v2958
        %v3039 = vsel %vm3036, %v3022, %v2960
        %v3040 = vsel %vm3036, %v3023, %v2962
        %v3041 = vsel %vm3036, %v3024, %v2964
        %v3042 = vsel %vm3036, %v3025, %v2966
        %v3043 = vsel %vm3036, %v3026, %v2968
        %v3044 = vsel %vm3036, %v3027, %v2970
        %v3045 = vsel %vm3036, %v3028, %v2972
        %v3046 = vsel %vm3036, %v3029, %v2974
        %v3047 = vsel %vm3036, %v3030, %v2976
        %v3048 = vsel %vm3036, %v3031, %v2978
        %v3049 = vsel %vm3036, %v3032, %v2980
        %v3050 = vsel %vm3036, %v3033, %v2982
        %v3051 = vsel %vm3036, %v3034, %v2984
        %v3052 = vsel %vm3036, %v3035, %v2986
        %v3053 = vpack.c.bf16 %v3038, %v3037
        %v3054 = vpack.c.bf16 %v3040, %v3039
        %v3055 = vpack.c.bf16 %v3042, %v3041
        %v3056 = vpack.c.bf16 %v3044, %v3043
        %v3057 = vpack.c.bf16 %v3046, %v3045
        %v3058 = vpack.c.bf16 %v3048, %v3047
        %v3059 = vpack.c.bf16 %v3050, %v3049
        %v3060 = vpack.c.bf16 %v3052, %v3051
        %v3061 = vld [vmem:[%s6] sm:$0xf]
        %v3062 = vld [vmem:[%s6 + $0x4] sm:$0xf]
        %v3063 = vld [vmem:[%s6 + $0x8] sm:$0xf]
        %v3064 = vld [vmem:[%s6 + $0xc] sm:$0xf]
        %v3065 = vld [vmem:[%s6 + $0x10] sm:$0xf]
        %v3066 = vld [vmem:[%s6 + $0x14] sm:$0xf]
        %v3067 = vld [vmem:[%s6 + $0x18] sm:$0xf]
        %v3068 = vld [vmem:[%s6 + $0x1c] sm:$0xf]
        %v3069 = vld [vmem:[%s6 + $0x20] sm:$0xf]
        %v3070 = vld [vmem:[%s6 + $0x24] sm:$0xf]
        %v3071 = vld [vmem:[%s6 + $0x28] sm:$0xf]
        %v3072 = vld [vmem:[%s6 + $0x2c] sm:$0xf]
        %v3073 = vld [vmem:[%s6 + $0x30] sm:$0xf]
        %v3074 = vld [vmem:[%s6 + $0x34] sm:$0xf]
        %v3075 = vld [vmem:[%s6 + $0x38] sm:$0xf]
        %v3076 = vld [vmem:[%s6 + $0x3c] sm:$0xf]
        %v3077 = vld [vmem:[%s10] sm:$0x1]
        %v3079 = vlaneseq
        %v3080 = vshrl.u32 %v3079, 7
        %v3081 = vsub.s32 0, %v3080
        %v3082 = vrot.slane %v3077, %v3081
        %v3100 = vunpack.c.l.b16 %v3061
        %v3101 = vunpack.c.l.b16 %v3062
        %v3102 = vunpack.c.l.b16 %v3063
        %v3103 = vunpack.c.l.b16 %v3064
        %v3104 = vunpack.c.l.b16 %v3065
        %v3105 = vunpack.c.l.b16 %v3066
        %v3106 = vunpack.c.l.b16 %v3067
        %v3107 = vunpack.c.l.b16 %v3068
        %v3108 = vunpack.c.l.b16 %v3069
        %v3109 = vunpack.c.l.b16 %v3070
        %v3110 = vunpack.c.l.b16 %v3071
        %v3111 = vunpack.c.l.b16 %v3072
        %v3112 = vunpack.c.l.b16 %v3073
        %v3113 = vunpack.c.l.b16 %v3074
        %v3114 = vunpack.c.l.b16 %v3075
        %v3115 = vunpack.c.l.b16 %v3076
        %v3116 = vpack.c.b16 %v3101, %v3100
        %v3117 = vpack.c.b16 %v3103, %v3102
        %v3118 = vpack.c.b16 %v3105, %v3104
        %v3119 = vpack.c.b16 %v3107, %v3106
        %v3120 = vpack.c.b16 %v3109, %v3108
        %v3121 = vpack.c.b16 %v3111, %v3110
        %v3122 = vpack.c.b16 %v3113, %v3112
        %v3123 = vpack.c.b16 %v3115, %v3114
        %3132 = vmatprep.subr.bf16.mxu0 0
        %3133 = vmatpush1.bf16.msra.mxu0 %v3116
        %3134 = vmatprep.subr.bf16.mxu0 0
        %3135 = vmatpush1.bf16.msra.mxu0 %v3117
        %3136 = vmatprep.subr.bf16.mxu0 0
        %3137 = vmatpush1.bf16.msra.mxu0 %v3118
        %3138 = vmatprep.subr.bf16.mxu0 0
        %3139 = vmatpush1.bf16.msra.mxu0 %v3119
        %3140 = vmatprep.subr.bf16.mxu0 0
        %3141 = vmatpush1.bf16.msra.mxu0 %v3120
        %3142 = vmatprep.subr.bf16.mxu0 0
        %3143 = vmatpush1.bf16.msra.mxu0 %v3121
        %3144 = vmatprep.subr.bf16.mxu0 0
        %3145 = vmatpush1.bf16.msra.mxu0 %v3122
        %3146 = vmatprep.subr.bf16.mxu0 0
        %3147 = vmatpush1.bf16.msra.mxu0 %v3123
        %3148 = vmatprep.subr.bf16.mxu0 0
        %3149 = vmatpush1.bf16.msra.mxu0 0
        %3150 = vmatprep.subr.bf16.mxu0 0
        %3151 = vmatpush1.bf16.msra.mxu0 0
        %3152 = vmatprep.subr.bf16.mxu0 0
        %3153 = vmatpush1.bf16.msra.mxu0 0
        %3154 = vmatprep.subr.bf16.mxu0 0
        %3155 = vmatpush1.bf16.msra.mxu0 0
        %3156 = vmatprep.subr.bf16.mxu0 0
        %3157 = vmatpush1.bf16.msra.mxu0 0
        %3158 = vmatprep.subr.bf16.mxu0 0
        %3159 = vmatpush1.bf16.msra.mxu0 0
        %3160 = vmatprep.subr.bf16.mxu0 0
        %3161 = vmatpush1.bf16.msra.mxu0 0
        %3162 = vmatprep.subr.bf16.mxu0 0
        %3163 = vmatpush1.bf16.msra.mxu0 0
        %3164 = vmatprep.mubr.bf16.mxu0 0
        %3165 = vmatmul.mubr.bf16.gmra.mrb[0].mxu0 %v3053
        %v3166 = vpop.f32.mrb[0].mxu0
        %v3167 = vadd.f32 %v3082, %v3166
        %v3168 = vpop.f32.mrb[0].mxu0
        %v3169 = vpop.f32.mrb[0].mxu0
        %v3170 = vadd.f32 %v3082, %v3169
        %v3171 = vpop.f32.mrb[0].mxu0
        %3172 = vmatprep.mubr.bf16.mxu0 0
        %3173 = vmatmul.mubr.bf16.gmra.mrb[0].mxu0 %v3054
        %v3174 = vpop.f32.mrb[0].mxu0
        %v3175 = vadd.f32 %v3082, %v3174
        %v3176 = vpop.f32.mrb[0].mxu0
        %v3177 = vpop.f32.mrb[0].mxu0
        %v3178 = vadd.f32 %v3082, %v3177
        %v3179 = vpop.f32.mrb[0].mxu0
        %3180 = vmatprep.mubr.bf16.mxu0 0
        %3181 = vmatmul.mubr.bf16.gmra.mrb[0].mxu0 %v3055
        %v3182 = vpop.f32.mrb[0].mxu0
        %v3183 = vadd.f32 %v3082, %v3182
        %v3184 = vpop.f32.mrb[0].mxu0
        %v3185 = vpop.f32.mrb[0].mxu0
        %v3186 = vadd.f32 %v3082, %v3185
        %v3187 = vpop.f32.mrb[0].mxu0
        %3188 = vmatprep.mubr.bf16.mxu0 0
        %3189 = vmatmul.mubr.bf16.gmra.mrb[0].mxu0 %v3056
        %v3190 = vpop.f32.mrb[0].mxu0
        %v3191 = vadd.f32 %v3082, %v3190
        %v3192 = vpop.f32.mrb[0].mxu0
        %v3193 = vpop.f32.mrb[0].mxu0
        %v3194 = vadd.f32 %v3082, %v3193
        %v3195 = vpop.f32.mrb[0].mxu0
        %3196 = vmatprep.mubr.bf16.mxu0 0
        %3197 = vmatmul.mubr.bf16.gmra.mrb[0].mxu0 %v3057
        %v3198 = vpop.f32.mrb[0].mxu0
        %v3199 = vadd.f32 %v3082, %v3198
        %v3200 = vpop.f32.mrb[0].mxu0
        %v3201 = vpop.f32.mrb[0].mxu0
        %v3202 = vadd.f32 %v3082, %v3201
        %v3203 = vpop.f32.mrb[0].mxu0
        %3204 = vmatprep.mubr.bf16.mxu0 0
        %3205 = vmatmul.mubr.bf16.gmra.mrb[0].mxu0 %v3058
        %v3206 = vpop.f32.mrb[0].mxu0
        %v3207 = vadd.f32 %v3082, %v3206
        %v3208 = vpop.f32.mrb[0].mxu0
        %v3209 = vpop.f32.mrb[0].mxu0
        %v3210 = vadd.f32 %v3082, %v3209
        %v3211 = vpop.f32.mrb[0].mxu0
        %3212 = vmatprep.mubr.bf16.mxu0 0
        %3213 = vmatmul.mubr.bf16.gmra.mrb[0].mxu0 %v3059
        %v3214 = vpop.f32.mrb[0].mxu0
        %v3215 = vadd.f32 %v3082, %v3214
        %v3216 = vpop.f32.mrb[0].mxu0
        %v3217 = vpop.f32.mrb[0].mxu0
        %v3218 = vadd.f32 %v3082, %v3217
        %v3219 = vpop.f32.mrb[0].mxu0
        %3220 = vmatprep.mubr.bf16.mxu0 0
        %3221 = vmatmul.mubr.bf16.gmra.mrb[0].mxu0 %v3060
        %v3222 = vpop.f32.mrb[0].mxu0
        %v3223 = vadd.f32 %v3082, %v3222
        %v3224 = vpop.f32.mrb[0].mxu0
        %v3225 = vpop.f32.mrb[0].mxu0
        %v3226 = vadd.f32 %v3082, %v3225
        %v3227 = vpop.f32.mrb[0].mxu0
        %3228 = vdwg.mxu0
        %3229 = vst [vmem:[%s409] sm:$0xff] %v3167
        %3230 = vst [vmem:[%s409 + $0x8] sm:$0xff] %v3170
        %3231 = vst [vmem:[%s409 + $0x10] sm:$0xff] %v3175
        %3232 = vst [vmem:[%s409 + $0x18] sm:$0xff] %v3178
        %3233 = vst [vmem:[%s409 + $0x20] sm:$0xff] %v3183
        %3234 = vst [vmem:[%s409 + $0x28] sm:$0xff] %v3186
        %3235 = vst [vmem:[%s409 + $0x30] sm:$0xff] %v3191
        %3236 = vst [vmem:[%s409 + $0x38] sm:$0xff] %v3194
        %3237 = vst [vmem:[%s409 + $0x40] sm:$0xff] %v3199
        %3238 = vst [vmem:[%s409 + $0x48] sm:$0xff] %v3202
        %3239 = vst [vmem:[%s409 + $0x50] sm:$0xff] %v3207
        %3240 = vst [vmem:[%s409 + $0x58] sm:$0xff] %v3210
        %3241 = vst [vmem:[%s409 + $0x60] sm:$0xff] %v3215
        %3242 = vst [vmem:[%s409 + $0x68] sm:$0xff] %v3218
        %3243 = vst [vmem:[%s409 + $0x70] sm:$0xff] %v3223
        %3244 = vst [vmem:[%s409 + $0x78] sm:$0xff] %v3226
        %s3245 = sand.u32 %s279, 1
        %s3246 = scalar_lea.sflag [#allocation3], %s3245
        %s3247 = sand.u32 %s279, 1
        %s3248 = smul.addr %s3247, 128
        %s3249 = scalar_lea.vmem [#allocation2], %s3248
        // Predicated region
        $region65: #{multi_head_attention_forward.1} parent=63 // pred_check
          %p3250 = pneg %p289
        $region66: #{multi_head_attention_forward.1} parent=63 // pred_check_branch
          %3252 = sbr.rel (%p3250) target = $region68
        $region67: #{multi_head_attention_forward.1} parent=63 // pred_region
          %s3254 = ssub.s32 2048, 2048
          %3255 = vsyncadd %s3246, %s3254
          %s3256 = smul.addr %s25, 16
          %s3257 = smul.addr %s3256, 128
          %s3258 = scalar_lea.hbm %s11, %s3257
          %s3259 = sshll.u32 %s3249, 4
          %s3260 = int_to_ptr.vmem [resolvable:$true] %s3259
          %3265 = dma.vmem_to_hbm [thread:$0]  %s3260, 2048, %s3258, %s3246, 128, 128, 8
        $region68: #{multi_head_attention_forward.1} parent=63 // pred_fallthru
          _
      $region64: #{multi_head_attention_forward.1} parent=5 // pred_fallthru
        _
      %p3266 = scmp.le.s32.totalorder 2, %s20
      // Predicated region
      $region69: #{multi_head_attention_forward.1} parent=5 // pred_check
        %p3267 = pneg %p3266
      $region70: #{multi_head_attention_forward.1} parent=5 // pred_check_branch
        %3269 = sbr.rel (%p3267) target = $region72
      $region71: #{multi_head_attention_forward.1} parent=5 // pred_region
        %s3270 = ssub.s32 %s20, 2
        // Predicated region
        $region73: #{multi_head_attention_forward.1} parent=71 // pred_check
          %p3271 = pneg %p295
        $region74: #{multi_head_attention_forward.1} parent=71 // pred_check_branch
          %3273 = sbr.rel (%p3271) target = $region76
        $region75: #{multi_head_attention_forward.1} parent=71 // pred_region
          %s3274 = sand.u32 %s280, 1
          %s3275 = scalar_lea.sflag [#allocation3], %s3274
          %s3276 = sand.u32 %s280, 1
          %s3277 = smul.addr %s3276, 128
          %s3278 = scalar_lea.vmem [#allocation2], %s3277
          %3279 = dma.done %s3275, 2048
        $region76: #{multi_head_attention_forward.1} parent=71 // pred_fallthru
          _
      $region72: #{multi_head_attention_forward.1} parent=5 // pred_fallthru
        _
    $region6: #{multi_head_attention_forward.1} parent=1 // loop_footer
      %s24 = sadd.s32 1, %s20
    $region7: #{multi_head_attention_forward.1} parent=1 // loop_footer_branch
      %19 = sbr.rel target = $region3
    $region8: #{multi_head_attention_forward.1} parent=1 // loop_exit
      _
    %3280 = vsyncpa [#allocation3], 1
    %s3281 = scalar_lea.sflag [#allocation3], 1
    %3282 = vsyncpa %s3281, 1

</llo_original>
